<compile_context>
chip_gen: v5e
topology: v5e:2x2
jax: 0.10.0
libtpu: 0.0.40
codegen_flags: <defaults>
</compile_context>

<pallas_src>
import functools
import math

import jax
import jax.numpy as jnp
from jax.experimental import pallas as pl
from jax.experimental.pallas import tpu as pltpu

_COMPUTE_DTYPE = jnp.bfloat16      # MXU inputs; accumulation stays f32


# ----------------------------- helpers --------------------------------------- #
def _layer_norm(v, gamma, beta, eps=1e-5):
    mu = jnp.mean(v, axis=-1, keepdims=True)
    var = jnp.mean(jnp.square(v - mu), axis=-1, keepdims=True)
    return (v - mu) * jax.lax.rsqrt(var + eps) * gamma + beta


def _pick_tq(seq_len, target=512):
    """Largest query tile that divides S, is a multiple of 16 and <= target."""
    if seq_len <= target:
        return seq_len
    t = (target // 16) * 16
    while t >= 16:
        if seq_len % t == 0:
            return t
        t -= 16
    return seq_len


# ----------------------------- Pallas kernel --------------------------------- #
def _encoder_layer_kernel(
    x_ref, bias_ref, q_ref, k_ref, v_ref,
    wo_ref, bo_ref, g1_ref, beta1_ref,
    w1_ref, b1_ref, w2_ref, b2_ref, g2_ref, beta2_ref,
    out_ref,
):
    # ---- head-batched attention (Q/K/V projected & head-split by the wrapper) --
    q = q_ref[0]                                    # (H, TQ, dk) bf16 (scale folded in)
    k = k_ref[0]                                    # (H, S,  dk) bf16
    v = v_ref[0]                                    # (H, S,  dk) bf16

    s = jnp.einsum('hqd,hkd->hqk', q, k,
                   preferred_element_type=jnp.float32)          # (H, TQ, S)
    s = s + bias_ref[0].astype(jnp.float32)[None, :, :]         # additive mask bias
    s = s - jnp.max(s, axis=-1, keepdims=True)
    p = jnp.exp(s)
    p = p * pl.reciprocal(jnp.sum(p, axis=-1, keepdims=True), approx=True)

    ctx = jnp.einsum('hqk,hkd->hqd', p.astype(_COMPUTE_DTYPE), v,
                     preferred_element_type=jnp.float32)        # (H, TQ, dk)

    # Output projection fused over heads: per-head MXU matmul + cheap head-sum,
    # no concat / lane-offset slice relayouts (wo pre-reshaped to (H, dk, D)).
    attn = jnp.einsum('hqd,hdz->hqz', ctx.astype(_COMPUTE_DTYPE), wo_ref[...],
                      preferred_element_type=jnp.float32)       # (H, TQ, D)
    attn = jnp.sum(attn, axis=0) + bo_ref[...]                  # (TQ, D)

    x_tile = x_ref[0].astype(jnp.float32)                       # residual (f32)
    # TODO(synk): dropout omitted (inference / eval-mode identity).
    y = _layer_norm(x_tile + attn, g1_ref[...], beta1_ref[...])

    # ---- position-wise feed-forward -------------------------------------------
    h1 = jnp.dot(y.astype(_COMPUTE_DTYPE), w1_ref[...],
                 preferred_element_type=jnp.float32) + b1_ref[...]
    h1 = jnp.maximum(h1, 0.0)
    h2 = jnp.dot(h1.astype(_COMPUTE_DTYPE), w2_ref[...],
                 preferred_element_type=jnp.float32) + b2_ref[...]

    out = _layer_norm(y + h2, g2_ref[...], beta2_ref[...])
    out_ref[0] = out.astype(out_ref.dtype)


# ----------------------------- weight prep (once) ----------------------------- #
def prepare_layer_params(params, num_heads):
    d_model = params["wq"].shape[0]
    dk = d_model // num_heads
    scale = 1.0 / math.sqrt(dk)
    f32 = lambda a: a.astype(jnp.float32)
    return {
        # fused QKV with 1/sqrt(dk) folded into the Q projection
        "w_qkv": jnp.concatenate(
            [params["wq"] * scale, params["wk"], params["wv"]], axis=1
        ).astype(_COMPUTE_DTYPE),                                    # (D, 3D)
        "b_qkv": jnp.concatenate(
            [params["bq"] * scale, params["bk"], params["bv"]], axis=1
        ).astype(jnp.float32),                                       # (1, 3D)
        # output projection pre-split by head for the fused (head,dk) contraction
        "wo3": params["wo"].reshape(num_heads, dk, d_model).astype(_COMPUTE_DTYPE),
        "bo": f32(params["bo"]),
        "g1": f32(params["g1"]), "beta1": f32(params["beta1"]),
        "w1": params["w1"].astype(_COMPUTE_DTYPE), "b1": f32(params["b1"]),
        "w2": params["w2"].astype(_COMPUTE_DTYPE), "b2": f32(params["b2"]),
        "g2": f32(params["g2"]), "beta2": f32(params["beta2"]),
    }


# ----------------------------- Python wrapper --------------------------------- #
def encoder_layer(x, bias, p, *, num_heads, tq=None, out_dtype=None,
                  vmem_limit_bytes=None):
    """One encoder layer on TPU via Pallas. x: (B,S,D); bias: (B,S,S) additive."""
    B, S, D = x.shape
    H = num_heads
    assert D % H == 0
    dk = D // H
    if tq is None:
        tq = _pick_tq(S)
    assert S % tq == 0 and (tq == S or tq % 16 == 0)
    nq = S // tq
    out_dtype = out_dtype if out_dtype is not None else x.dtype

    # Fused QKV projection hoisted out of the kernel (XLA GEMM): no qi==0 bubble,
    # no per-head lane-slice relayouts; both grid axes can be "parallel".
    xc = x.astype(_COMPUTE_DTYPE)
    qkv = jnp.einsum("bsd,df->bsf", xc, p["w_qkv"],
                     preferred_element_type=jnp.float32) + p["b_qkv"]
    qkv = qkv.reshape(B, S, 3, H, dk).transpose(2, 0, 3, 1, 4)       # (3, B, H, S, dk)
    qkv = qkv.astype(_COMPUTE_DTYPE)
    q, k, v = qkv[0], qkv[1], qkv[2]

    weights = [p["wo3"], p["bo"], p["g1"], p["beta1"],
               p["w1"], p["b1"], p["w2"], p["b2"], p["g2"], p["beta2"]]

    def const_spec(a):
        zeros = (0,) * a.ndim
        return pl.BlockSpec(a.shape, lambda b, qi: zeros)

    in_specs = [
        pl.BlockSpec((1, tq, D), lambda b, qi: (b, qi, 0)),          # x residual tile
        pl.BlockSpec((1, tq, S), lambda b, qi: (b, qi, 0)),          # mask bias tile
        pl.BlockSpec((1, H, tq, dk), lambda b, qi: (b, 0, qi, 0)),   # Q tile
        pl.BlockSpec((1, H, S, dk), lambda b, qi: (b, 0, 0, 0)),     # K (per batch)
        pl.BlockSpec((1, H, S, dk), lambda b, qi: (b, 0, 0, 0)),     # V (per batch)
    ] + [const_spec(w) for w in weights]

    return pl.pallas_call(
        _encoder_layer_kernel,
        out_shape=jax.ShapeDtypeStruct((B, S, D), out_dtype),
        grid_spec=pltpu.PrefetchScalarGridSpec(
            num_scalar_prefetch=0,
            grid=(B, nq),
            in_specs=in_specs,
            out_specs=pl.BlockSpec((1, tq, D), lambda b, qi: (b, qi, 0)),
        ),
        compiler_params=pltpu.CompilerParams(
            dimension_semantics=("parallel", "parallel"),
            vmem_limit_bytes=vmem_limit_bytes,
        ),
    )(x, bias, q, k, v, *weights)


@functools.partial(jax.jit, static_argnames=("num_heads", "tq"))
def encoder_forward(x, mask, layer_params, *, num_heads, tq=None):
    # Additive mask bias precomputed ONCE (hoisted out of the per-layer loop).
    bias = ((1.0 - mask.astype(jnp.float32)) * (-1e9)).astype(_COMPUTE_DTYPE)
    prepped = [prepare_layer_params(p, num_heads) for p in layer_params]
    final_dtype = x.dtype
    n = len(prepped)
    for i, p in enumerate(prepped):
        # bf16 inter-layer activations; final layer restores the input dtype.
        out_dtype = final_dtype if i == n - 1 else _COMPUTE_DTYPE
        x = encoder_layer(x, bias, p, num_heads=num_heads, tq=tq,
                          out_dtype=out_dtype)
    return x


# ----------------------------- parameter init --------------------------------- #
def init_layer_params(key, d_model, d_ff):
    ks = jax.random.split(key, 6)
    lin = lambda k, fan_in, shape: jax.random.uniform(
        k, shape, jnp.float32, -1.0 / math.sqrt(fan_in), 1.0 / math.sqrt(fan_in))
    return {
        "wq": lin(ks[0], d_model, (d_model, d_model)), "bq": jnp.zeros((1, d_model), jnp.float32),
        "wk": lin(ks[1], d_model, (d_model, d_model)), "bk": jnp.zeros((1, d_model), jnp.float32),
        "wv": lin(ks[2], d_model, (d_model, d_model)), "bv": jnp.zeros((1, d_model), jnp.float32),
        "wo": lin(ks[3], d_model, (d_model, d_model)), "bo": jnp.zeros((1, d_model), jnp.float32),
        "g1": jnp.ones((1, d_model), jnp.float32), "beta1": jnp.zeros((1, d_model), jnp.float32),
        "w1": lin(ks[4], d_model, (d_model, d_ff)), "b1": jnp.zeros((1, d_ff), jnp.float32),
        "w2": lin(ks[5], d_ff, (d_ff, d_model)),    "b2": jnp.zeros((1, d_model), jnp.float32),
        "g2": jnp.ones((1, d_model), jnp.float32), "beta2": jnp.zeros((1, d_model), jnp.float32),
    }


# ----------------------------- pure-JAX reference ------------------------------ #
def _encoder_layer_ref(x, mask, p, num_heads):
    B, S, D = x.shape
    dk = D // num_heads
    q = x @ p["wq"] + p["bq"]
    k = x @ p["wk"] + p["bk"]
    v = x @ p["wv"] + p["bv"]
    split = lambda t: t.reshape(B, S, num_heads, dk).transpose(0, 2, 1, 3)
    qh, kh, vh = split(q), split(k), split(v)
    s = jnp.einsum('bhqd,bhkd->bhqk', qh, kh) / math.sqrt(dk)
    s = jnp.where(mask[:, None, :, :] == 0, -1e9, s)
    pa = jax.nn.softmax(s, axis=-1)
    ctx = jnp.einsum('bhqk,bhkd->bhqd', pa, vh).transpose(0, 2, 1, 3).reshape(B, S, D)
    attn = ctx @ p["wo"] + p["bo"]
    y = _layer_norm(x + attn, p["g1"], p["beta1"])
    h = jnp.maximum(y @ p["w1"] + p["b1"], 0.0)
    return _layer_norm(y + h @ p["w2"] + p["b2"], p["g2"], p["beta2"])


# ----------------------------------- main -------------------------------------- #
if __name__ == "__main__":
    # Small, lane-dense config consistent with Encoder(d_model, num_heads, num_layers, d_ff)
    d_model, num_heads, num_layers, d_ff = 128, 4, 2, 256
    batch, seq = 2, 32

    root = jax.random.PRNGKey(0)
    k_x, k_layers = jax.random.split(root)
    x = jax.random.normal(k_x, (batch, seq, d_model), jnp.float32)
    mask = jnp.ones((batch, seq, seq), jnp.float32)   # 1 = attend, 0 = masked

    layer_keys = jax.random.split(k_layers, num_layers)
    layer_params = [init_layer_params(k, d_model, d_ff) for k in layer_keys]

    out = encoder_forward(x, mask, layer_params, num_heads=num_heads)
    out = jax.block_until_ready(out)
    assert out.shape == (batch, seq, d_model)
    assert out.dtype == x.dtype

    # Loose sanity check against the f32 reference (kernel matmuls run in bf16,
    # inter-layer activations are bf16).
    ref = x
    for p in layer_params:
        ref = _encoder_layer_ref(ref, mask, p, num_heads)
    max_err = float(jnp.max(jnp.abs(out - ref)))
    assert max_err < 0.2, f"kernel/reference mismatch: max abs err = {max_err}"

    print("KERNEL_OK")
</pallas_src>

<mosaic_0001>
module attributes {stable_mosaic.version = 11 : i64} {
  func.func @_encoder_layer_kernel(%arg0: i32, %arg1: i32, %arg2: memref<1x32x128xf32, #tpu.memory_space<vmem>>, %arg3: memref<1x32x32xbf16, #tpu.memory_space<vmem>>, %arg4: memref<1x4x32x32xbf16, #tpu.memory_space<vmem>>, %arg5: memref<1x4x32x32xbf16, #tpu.memory_space<vmem>>, %arg6: memref<1x4x32x32xbf16, #tpu.memory_space<vmem>>, %arg7: memref<4x32x128xbf16, #tpu.memory_space<vmem>>, %arg8: memref<1x128xf32, #tpu.memory_space<vmem>>, %arg9: memref<1x128xf32, #tpu.memory_space<vmem>>, %arg10: memref<1x128xf32, #tpu.memory_space<vmem>>, %arg11: memref<128x256xbf16, #tpu.memory_space<vmem>>, %arg12: memref<1x256xf32, #tpu.memory_space<vmem>>, %arg13: memref<256x128xbf16, #tpu.memory_space<vmem>>, %arg14: memref<1x128xf32, #tpu.memory_space<vmem>>, %arg15: memref<1x128xf32, #tpu.memory_space<vmem>>, %arg16: memref<1x128xf32, #tpu.memory_space<vmem>>, %arg17: memref<1x32x128xbf16, #tpu.memory_space<vmem>>) attributes {dimension_semantics = [#tpu.dimension_semantics<parallel>, #tpu.dimension_semantics<parallel>], iteration_bounds = array<i64: 2, 1>, scalar_prefetch = 0 : i64, scratch_operands = 0 : i64, tpu.core_type = #tpu.core_type<tc>, window_params = [{transform_indices = @transform_0, window_bounds = array<i64: 1, 32, 128>}, {transform_indices = @transform_1, window_bounds = array<i64: 1, 32, 32>}, {transform_indices = @transform_2, window_bounds = array<i64: 1, 4, 32, 32>}, {transform_indices = @transform_3, window_bounds = array<i64: 1, 4, 32, 32>}, {transform_indices = @transform_4, window_bounds = array<i64: 1, 4, 32, 32>}, {pipeline_mode = #tpu.pipeline_mode<synchronous>, transform_indices = @transform_5, window_bounds = array<i64: 4, 32, 128>}, {pipeline_mode = #tpu.pipeline_mode<synchronous>, transform_indices = @transform_6, window_bounds = array<i64: 1, 128>}, {pipeline_mode = #tpu.pipeline_mode<synchronous>, transform_indices = @transform_7, window_bounds = array<i64: 1, 128>}, {pipeline_mode = #tpu.pipeline_mode<synchronous>, transform_indices = @transform_8, window_bounds = array<i64: 1, 128>}, {pipeline_mode = #tpu.pipeline_mode<synchronous>, transform_indices = @transform_9, window_bounds = array<i64: 128, 256>}, {pipeline_mode = #tpu.pipeline_mode<synchronous>, transform_indices = @transform_10, window_bounds = array<i64: 1, 256>}, {pipeline_mode = #tpu.pipeline_mode<synchronous>, transform_indices = @transform_11, window_bounds = array<i64: 256, 128>}, {pipeline_mode = #tpu.pipeline_mode<synchronous>, transform_indices = @transform_12, window_bounds = array<i64: 1, 128>}, {pipeline_mode = #tpu.pipeline_mode<synchronous>, transform_indices = @transform_13, window_bounds = array<i64: 1, 128>}, {pipeline_mode = #tpu.pipeline_mode<synchronous>, transform_indices = @transform_14, window_bounds = array<i64: 1, 128>}, {transform_indices = @transform_15, window_bounds = array<i64: 1, 32, 128>}]} {
    %c0 = arith.constant 0 : index
    %c0_0 = arith.constant 0 : index
    %c0_1 = arith.constant 0 : index
    %c0_2 = arith.constant 0 : index
    %0 = vector.load %arg4[%c0, %c0_0, %c0_1, %c0_2] : memref<1x4x32x32xbf16, #tpu.memory_space<vmem>>, vector<1x4x32x32xbf16>
    %1 = vector.shape_cast %0 : vector<1x4x32x32xbf16> to vector<4x32x32xbf16>
    %c0_3 = arith.constant 0 : index
    %c0_4 = arith.constant 0 : index
    %c0_5 = arith.constant 0 : index
    %c0_6 = arith.constant 0 : index
    %2 = vector.load %arg5[%c0_3, %c0_4, %c0_5, %c0_6] : memref<1x4x32x32xbf16, #tpu.memory_space<vmem>>, vector<1x4x32x32xbf16>
    %3 = vector.shape_cast %2 : vector<1x4x32x32xbf16> to vector<4x32x32xbf16>
    %c0_7 = arith.constant 0 : index
    %c0_8 = arith.constant 0 : index
    %c0_9 = arith.constant 0 : index
    %c0_10 = arith.constant 0 : index
    %4 = vector.load %arg6[%c0_7, %c0_8, %c0_9, %c0_10] : memref<1x4x32x32xbf16, #tpu.memory_space<vmem>>, vector<1x4x32x32xbf16>
    %5 = vector.shape_cast %4 : vector<1x4x32x32xbf16> to vector<4x32x32xbf16>
    "tpu.trace_start"() <{level = 10 : i32, message = "hqd,hkd->hqk"}> : () -> ()
    %cst = arith.constant dense<0.000000e+00> : vector<4x32x32xf32>
    %6 = tpu.matmul %1, %3, %cst {dimension_numbers = #tpu.dot_dimension_numbers<[2], [2], [1], [1], [0, 0, 0, 1, 1, 1], [0], [0]>} : vector<4x32x32xbf16>, vector<4x32x32xbf16>, vector<4x32x32xf32> -> vector<4x32x32xf32>
    "tpu.trace_stop"() : () -> ()
    %c0_11 = arith.constant 0 : index
    %c0_12 = arith.constant 0 : index
    %c0_13 = arith.constant 0 : index
    %7 = vector.load %arg3[%c0_11, %c0_12, %c0_13] : memref<1x32x32xbf16, #tpu.memory_space<vmem>>, vector<1x32x32xbf16>
    %8 = vector.shape_cast %7 : vector<1x32x32xbf16> to vector<32x32xbf16>
    %9 = arith.extf %8 : vector<32x32xbf16> to vector<32x32xf32>
    %10 = vector.shape_cast %9 : vector<32x32xf32> to vector<1x32x32xf32>
    %11 = vector.broadcast %10 : vector<1x32x32xf32> to vector<4x32x32xf32>
    %12 = arith.addf %6, %11 : vector<4x32x32xf32>
    %cst_14 = arith.constant dense<0xFF800000> : vector<4x32xf32>
    %13 = vector.multi_reduction <maximumf>, %12, %cst_14 [2] : vector<4x32x32xf32> to vector<4x32xf32>
    %14 = vector.shape_cast %13 : vector<4x32xf32> to vector<4x32x1xf32>
    %15 = vector.broadcast %14 : vector<4x32x1xf32> to vector<4x32x32xf32>
    %16 = arith.subf %12, %15 : vector<4x32x32xf32>
    %17 = math.exp %16 : vector<4x32x32xf32>
    %cst_15 = arith.constant dense<0.000000e+00> : vector<4x32xf32>
    %18 = vector.multi_reduction <add>, %17, %cst_15 [2] : vector<4x32x32xf32> to vector<4x32xf32>
    %19 = vector.shape_cast %18 : vector<4x32xf32> to vector<4x32x1xf32>
    %20 = tpu.reciprocal %19 {approx = true} : vector<4x32x1xf32> -> vector<4x32x1xf32>
    %21 = vector.broadcast %20 : vector<4x32x1xf32> to vector<4x32x32xf32>
    %22 = arith.mulf %17, %21 : vector<4x32x32xf32>
    %23 = arith.truncf %22 : vector<4x32x32xf32> to vector<4x32x32xbf16>
    "tpu.trace_start"() <{level = 10 : i32, message = "hqk,hkd->hqd"}> : () -> ()
    %cst_16 = arith.constant dense<0.000000e+00> : vector<4x32x32xf32>
    %24 = tpu.matmul %23, %5, %cst_16 {dimension_numbers = #tpu.dot_dimension_numbers<[2], [1], [1], [2], [0, 0, 0, 1, 1, 2], [0], [0]>} : vector<4x32x32xbf16>, vector<4x32x32xbf16>, vector<4x32x32xf32> -> vector<4x32x32xf32>
    "tpu.trace_stop"() : () -> ()
    %25 = arith.truncf %24 : vector<4x32x32xf32> to vector<4x32x32xbf16>
    %c0_17 = arith.constant 0 : index
    %c0_18 = arith.constant 0 : index
    %c0_19 = arith.constant 0 : index
    %26 = vector.load %arg7[%c0_17, %c0_18, %c0_19] : memref<4x32x128xbf16, #tpu.memory_space<vmem>>, vector<4x32x128xbf16>
    "tpu.trace_start"() <{level = 10 : i32, message = "hqd,hdz->hqz"}> : () -> ()
    %cst_20 = arith.constant dense<0.000000e+00> : vector<4x32x128xf32>
    %27 = tpu.matmul %25, %26, %cst_20 {dimension_numbers = #tpu.dot_dimension_numbers<[2], [1], [1], [2], [0, 0, 0, 1, 1, 2], [0], [0]>} : vector<4x32x32xbf16>, vector<4x32x128xbf16>, vector<4x32x128xf32> -> vector<4x32x128xf32>
    "tpu.trace_stop"() : () -> ()
    %cst_21 = arith.constant dense<0.000000e+00> : vector<32x128xf32>
    %28 = vector.multi_reduction <add>, %27, %cst_21 [0] : vector<4x32x128xf32> to vector<32x128xf32>
    %c0_22 = arith.constant 0 : index
    %c0_23 = arith.constant 0 : index
    %29 = vector.load %arg8[%c0_22, %c0_23] : memref<1x128xf32, #tpu.memory_space<vmem>>, vector<1x128xf32>
    %30 = vector.broadcast %29 : vector<1x128xf32> to vector<32x128xf32>
    %31 = arith.addf %28, %30 : vector<32x128xf32>
    %c0_24 = arith.constant 0 : index
    %c0_25 = arith.constant 0 : index
    %c0_26 = arith.constant 0 : index
    %32 = vector.load %arg2[%c0_24, %c0_25, %c0_26] : memref<1x32x128xf32, #tpu.memory_space<vmem>>, vector<1x32x128xf32>
    %33 = vector.shape_cast %32 : vector<1x32x128xf32> to vector<32x128xf32>
    %34 = arith.addf %33, %31 : vector<32x128xf32>
    %c0_27 = arith.constant 0 : index
    %c0_28 = arith.constant 0 : index
    %35 = vector.load %arg9[%c0_27, %c0_28] : memref<1x128xf32, #tpu.memory_space<vmem>>, vector<1x128xf32>
    %c0_29 = arith.constant 0 : index
    %c0_30 = arith.constant 0 : index
    %36 = vector.load %arg10[%c0_29, %c0_30] : memref<1x128xf32, #tpu.memory_space<vmem>>, vector<1x128xf32>
    %cst_31 = arith.constant dense<0.000000e+00> : vector<32xf32>
    %37 = vector.multi_reduction <add>, %34, %cst_31 [1] : vector<32x128xf32> to vector<32xf32>
    %38 = vector.shape_cast %37 : vector<32xf32> to vector<32x1xf32>
    %cst_32 = arith.constant 1.280000e+02 : f32
    %39 = vector.broadcast %cst_32 : f32 to vector<32x1xf32>
    %40 = arith.divf %38, %39 : vector<32x1xf32>
    %41 = vector.broadcast %40 : vector<32x1xf32> to vector<32x128xf32>
    %42 = arith.subf %34, %41 : vector<32x128xf32>
    %43 = arith.mulf %42, %42 : vector<32x128xf32>
    %cst_33 = arith.constant dense<0.000000e+00> : vector<32xf32>
    %44 = vector.multi_reduction <add>, %43, %cst_33 [1] : vector<32x128xf32> to vector<32xf32>
    %45 = vector.shape_cast %44 : vector<32xf32> to vector<32x1xf32>
    %cst_34 = arith.constant 1.280000e+02 : f32
    %46 = vector.broadcast %cst_34 : f32 to vector<32x1xf32>
    %47 = arith.divf %45, %46 : vector<32x1xf32>
    %48 = vector.broadcast %40 : vector<32x1xf32> to vector<32x128xf32>
    %49 = arith.subf %34, %48 : vector<32x128xf32>
    %cst_35 = arith.constant 9.99999974E-6 : f32
    %50 = vector.broadcast %cst_35 : f32 to vector<32x1xf32>
    %51 = arith.addf %47, %50 : vector<32x1xf32>
    %52 = math.rsqrt %51 : vector<32x1xf32>
    %53 = vector.broadcast %52 : vector<32x1xf32> to vector<32x128xf32>
    %54 = arith.mulf %49, %53 : vector<32x128xf32>
    %55 = vector.broadcast %35 : vector<1x128xf32> to vector<32x128xf32>
    %56 = arith.mulf %54, %55 : vector<32x128xf32>
    %57 = vector.broadcast %36 : vector<1x128xf32> to vector<32x128xf32>
    %58 = arith.addf %56, %57 : vector<32x128xf32>
    %59 = arith.truncf %58 : vector<32x128xf32> to vector<32x128xbf16>
    %c0_36 = arith.constant 0 : index
    %c0_37 = arith.constant 0 : index
    %60 = vector.load %arg11[%c0_36, %c0_37] : memref<128x256xbf16, #tpu.memory_space<vmem>>, vector<128x256xbf16>
    %cst_38 = arith.constant dense<0.000000e+00> : vector<32x256xf32>
    %61 = tpu.matmul %59, %60, %cst_38 {dimension_numbers = #tpu.dot_dimension_numbers<[1], [0], [0], [1], [0, 0, 1, 1], [], []>} : vector<32x128xbf16>, vector<128x256xbf16>, vector<32x256xf32> -> vector<32x256xf32>
    %c0_39 = arith.constant 0 : index
    %c0_40 = arith.constant 0 : index
    %62 = vector.load %arg12[%c0_39, %c0_40] : memref<1x256xf32, #tpu.memory_space<vmem>>, vector<1x256xf32>
    %63 = vector.broadcast %62 : vector<1x256xf32> to vector<32x256xf32>
    %64 = arith.addf %61, %63 : vector<32x256xf32>
    %cst_41 = arith.constant 0.000000e+00 : f32
    %65 = vector.broadcast %cst_41 : f32 to vector<32x256xf32>
    %66 = arith.maximumf %64, %65 : vector<32x256xf32>
    %67 = arith.truncf %66 : vector<32x256xf32> to vector<32x256xbf16>
    %c0_42 = arith.constant 0 : index
    %c0_43 = arith.constant 0 : index
    %68 = vector.load %arg13[%c0_42, %c0_43] : memref<256x128xbf16, #tpu.memory_space<vmem>>, vector<256x128xbf16>
    %cst_44 = arith.constant dense<0.000000e+00> : vector<32x128xf32>
    %69 = tpu.matmul %67, %68, %cst_44 {dimension_numbers = #tpu.dot_dimension_numbers<[1], [0], [0], [1], [0, 0, 1, 1], [], []>} : vector<32x256xbf16>, vector<256x128xbf16>, vector<32x128xf32> -> vector<32x128xf32>
    %c0_45 = arith.constant 0 : index
    %c0_46 = arith.constant 0 : index
    %70 = vector.load %arg14[%c0_45, %c0_46] : memref<1x128xf32, #tpu.memory_space<vmem>>, vector<1x128xf32>
    %71 = vector.broadcast %70 : vector<1x128xf32> to vector<32x128xf32>
    %72 = arith.addf %69, %71 : vector<32x128xf32>
    %73 = arith.addf %58, %72 : vector<32x128xf32>
    %c0_47 = arith.constant 0 : index
    %c0_48 = arith.constant 0 : index
    %74 = vector.load %arg15[%c0_47, %c0_48] : memref<1x128xf32, #tpu.memory_space<vmem>>, vector<1x128xf32>
    %c0_49 = arith.constant 0 : index
    %c0_50 = arith.constant 0 : index
    %75 = vector.load %arg16[%c0_49, %c0_50] : memref<1x128xf32, #tpu.memory_space<vmem>>, vector<1x128xf32>
    %cst_51 = arith.constant dense<0.000000e+00> : vector<32xf32>
    %76 = vector.multi_reduction <add>, %73, %cst_51 [1] : vector<32x128xf32> to vector<32xf32>
    %77 = vector.shape_cast %76 : vector<32xf32> to vector<32x1xf32>
    %cst_52 = arith.constant 1.280000e+02 : f32
    %78 = vector.broadcast %cst_52 : f32 to vector<32x1xf32>
    %79 = arith.divf %77, %78 : vector<32x1xf32>
    %80 = vector.broadcast %79 : vector<32x1xf32> to vector<32x128xf32>
    %81 = arith.subf %73, %80 : vector<32x128xf32>
    %82 = arith.mulf %81, %81 : vector<32x128xf32>
    %cst_53 = arith.constant dense<0.000000e+00> : vector<32xf32>
    %83 = vector.multi_reduction <add>, %82, %cst_53 [1] : vector<32x128xf32> to vector<32xf32>
    %84 = vector.shape_cast %83 : vector<32xf32> to vector<32x1xf32>
    %cst_54 = arith.constant 1.280000e+02 : f32
    %85 = vector.broadcast %cst_54 : f32 to vector<32x1xf32>
    %86 = arith.divf %84, %85 : vector<32x1xf32>
    %87 = vector.broadcast %79 : vector<32x1xf32> to vector<32x128xf32>
    %88 = arith.subf %73, %87 : vector<32x128xf32>
    %cst_55 = arith.constant 9.99999974E-6 : f32
    %89 = vector.broadcast %cst_55 : f32 to vector<32x1xf32>
    %90 = arith.addf %86, %89 : vector<32x1xf32>
    %91 = math.rsqrt %90 : vector<32x1xf32>
    %92 = vector.broadcast %91 : vector<32x1xf32> to vector<32x128xf32>
    %93 = arith.mulf %88, %92 : vector<32x128xf32>
    %94 = vector.broadcast %74 : vector<1x128xf32> to vector<32x128xf32>
    %95 = arith.mulf %93, %94 : vector<32x128xf32>
    %96 = vector.broadcast %75 : vector<1x128xf32> to vector<32x128xf32>
    %97 = arith.addf %95, %96 : vector<32x128xf32>
    %98 = arith.truncf %97 : vector<32x128xf32> to vector<32x128xbf16>
    %c0_56 = arith.constant 0 : index
    %c0_57 = arith.constant 0 : index
    %c0_58 = arith.constant 0 : index
    %99 = vector.load %arg17[%c0_56, %c0_57, %c0_58] : memref<1x32x128xbf16, #tpu.memory_space<vmem>>, vector<1x32x128xbf16>
    %100 = vector.shape_cast %99 : vector<1x32x128xbf16> to vector<32x128xbf16>
    %101 = vector.shape_cast %98 : vector<32x128xbf16> to vector<1x32x128xbf16>
    tpu.vector_store %arg17[%c0_56, %c0_57, %c0_58], %101 {strides = array<i32>} : memref<1x32x128xbf16, #tpu.memory_space<vmem>>, vector<1x32x128xbf16>,
    return
  }
  func.func @transform_0(%arg0: i32, %arg1: i32) -> (i32, i32, i32) {
    %c0_i32 = arith.constant 0 : i32
    %c0_i32_0 = arith.constant 0 : i32
    return %arg0, %arg1, %c0_i32 : i32, i32, i32
  }
  func.func @transform_1(%arg0: i32, %arg1: i32) -> (i32, i32, i32) {
    %c0_i32 = arith.constant 0 : i32
    %c0_i32_0 = arith.constant 0 : i32
    return %arg0, %arg1, %c0_i32 : i32, i32, i32
  }
  func.func @transform_2(%arg0: i32, %arg1: i32) -> (i32, i32, i32, i32) {
    %c0_i32 = arith.constant 0 : i32
    %c0_i32_0 = arith.constant 0 : i32
    %c0_i32_1 = arith.constant 0 : i32
    return %arg0, %c0_i32, %arg1, %c0_i32_0 : i32, i32, i32, i32
  }
  func.func @transform_3(%arg0: i32, %arg1: i32) -> (i32, i32, i32, i32) {
    %c0_i32 = arith.constant 0 : i32
    %c0_i32_0 = arith.constant 0 : i32
    %c0_i32_1 = arith.constant 0 : i32
    %c0_i32_2 = arith.constant 0 : i32
    return %arg0, %c0_i32, %c0_i32_0, %c0_i32_1 : i32, i32, i32, i32
  }
  func.func @transform_4(%arg0: i32, %arg1: i32) -> (i32, i32, i32, i32) {
    %c0_i32 = arith.constant 0 : i32
    %c0_i32_0 = arith.constant 0 : i32
    %c0_i32_1 = arith.constant 0 : i32
    %c0_i32_2 = arith.constant 0 : i32
    return %arg0, %c0_i32, %c0_i32_0, %c0_i32_1 : i32, i32, i32, i32
  }
  func.func @transform_5(%arg0: i32, %arg1: i32) -> (i32, i32, i32) {
    %c0_i32 = arith.constant 0 : i32
    %c0_i32_0 = arith.constant 0 : i32
    %c0_i32_1 = arith.constant 0 : i32
    %c0_i32_2 = arith.constant 0 : i32
    return %c0_i32, %c0_i32_0, %c0_i32_1 : i32, i32, i32
  }
  func.func @transform_6(%arg0: i32, %arg1: i32) -> (i32, i32) {
    %c0_i32 = arith.constant 0 : i32
    %c0_i32_0 = arith.constant 0 : i32
    %c0_i32_1 = arith.constant 0 : i32
    return %c0_i32, %c0_i32_0 : i32, i32
  }
  func.func @transform_7(%arg0: i32, %arg1: i32) -> (i32, i32) {
    %c0_i32 = arith.constant 0 : i32
    %c0_i32_0 = arith.constant 0 : i32
    %c0_i32_1 = arith.constant 0 : i32
    return %c0_i32, %c0_i32_0 : i32, i32
  }
  func.func @transform_8(%arg0: i32, %arg1: i32) -> (i32, i32) {
    %c0_i32 = arith.constant 0 : i32
    %c0_i32_0 = arith.constant 0 : i32
    %c0_i32_1 = arith.constant 0 : i32
    return %c0_i32, %c0_i32_0 : i32, i32
  }
  func.func @transform_9(%arg0: i32, %arg1: i32) -> (i32, i32) {
    %c0_i32 = arith.constant 0 : i32
    %c0_i32_0 = arith.constant 0 : i32
    %c0_i32_1 = arith.constant 0 : i32
    return %c0_i32, %c0_i32_0 : i32, i32
  }
  func.func @transform_10(%arg0: i32, %arg1: i32) -> (i32, i32) {
    %c0_i32 = arith.constant 0 : i32
    %c0_i32_0 = arith.constant 0 : i32
    %c0_i32_1 = arith.constant 0 : i32
    return %c0_i32, %c0_i32_0 : i32, i32
  }
  func.func @transform_11(%arg0: i32, %arg1: i32) -> (i32, i32) {
    %c0_i32 = arith.constant 0 : i32
    %c0_i32_0 = arith.constant 0 : i32
    %c0_i32_1 = arith.constant 0 : i32
    return %c0_i32, %c0_i32_0 : i32, i32
  }
  func.func @transform_12(%arg0: i32, %arg1: i32) -> (i32, i32) {
    %c0_i32 = arith.constant 0 : i32
    %c0_i32_0 = arith.constant 0 : i32
    %c0_i32_1 = arith.constant 0 : i32
    return %c0_i32, %c0_i32_0 : i32, i32
  }
  func.func @transform_13(%arg0: i32, %arg1: i32) -> (i32, i32) {
    %c0_i32 = arith.constant 0 : i32
    %c0_i32_0 = arith.constant 0 : i32
    %c0_i32_1 = arith.constant 0 : i32
    return %c0_i32, %c0_i32_0 : i32, i32
  }
  func.func @transform_14(%arg0: i32, %arg1: i32) -> (i32, i32) {
    %c0_i32 = arith.constant 0 : i32
    %c0_i32_0 = arith.constant 0 : i32
    %c0_i32_1 = arith.constant 0 : i32
    return %c0_i32, %c0_i32_0 : i32, i32
  }
  func.func @transform_15(%arg0: i32, %arg1: i32) -> (i32, i32, i32) {
    %c0_i32 = arith.constant 0 : i32
    %c0_i32_0 = arith.constant 0 : i32
    return %arg0, %arg1, %c0_i32 : i32, i32, i32
  }
}

module attributes {stable_mosaic.version = 11 : i64} {
  func.func @_encoder_layer_kernel(%arg0: i32, %arg1: i32, %arg2: memref<1x32x128xbf16, #tpu.memory_space<vmem>>, %arg3: memref<1x32x32xbf16, #tpu.memory_space<vmem>>, %arg4: memref<1x4x32x32xbf16, #tpu.memory_space<vmem>>, %arg5: memref<1x4x32x32xbf16, #tpu.memory_space<vmem>>, %arg6: memref<1x4x32x32xbf16, #tpu.memory_space<vmem>>, %arg7: memref<4x32x128xbf16, #tpu.memory_space<vmem>>, %arg8: memref<1x128xf32, #tpu.memory_space<vmem>>, %arg9: memref<1x128xf32, #tpu.memory_space<vmem>>, %arg10: memref<1x128xf32, #tpu.memory_space<vmem>>, %arg11: memref<128x256xbf16, #tpu.memory_space<vmem>>, %arg12: memref<1x256xf32, #tpu.memory_space<vmem>>, %arg13: memref<256x128xbf16, #tpu.memory_space<vmem>>, %arg14: memref<1x128xf32, #tpu.memory_space<vmem>>, %arg15: memref<1x128xf32, #tpu.memory_space<vmem>>, %arg16: memref<1x128xf32, #tpu.memory_space<vmem>>, %arg17: memref<1x32x128xf32, #tpu.memory_space<vmem>>) attributes {dimension_semantics = [#tpu.dimension_semantics<parallel>, #tpu.dimension_semantics<parallel>], iteration_bounds = array<i64: 2, 1>, scalar_prefetch = 0 : i64, scratch_operands = 0 : i64, tpu.core_type = #tpu.core_type<tc>, window_params = [{transform_indices = @transform_0, window_bounds = array<i64: 1, 32, 128>}, {transform_indices = @transform_1, window_bounds = array<i64: 1, 32, 32>}, {transform_indices = @transform_2, window_bounds = array<i64: 1, 4, 32, 32>}, {transform_indices = @transform_3, window_bounds = array<i64: 1, 4, 32, 32>}, {transform_indices = @transform_4, window_bounds = array<i64: 1, 4, 32, 32>}, {pipeline_mode = #tpu.pipeline_mode<synchronous>, transform_indices = @transform_5, window_bounds = array<i64: 4, 32, 128>}, {pipeline_mode = #tpu.pipeline_mode<synchronous>, transform_indices = @transform_6, window_bounds = array<i64: 1, 128>}, {pipeline_mode = #tpu.pipeline_mode<synchronous>, transform_indices = @transform_7, window_bounds = array<i64: 1, 128>}, {pipeline_mode = #tpu.pipeline_mode<synchronous>, transform_indices = @transform_8, window_bounds = array<i64: 1, 128>}, {pipeline_mode = #tpu.pipeline_mode<synchronous>, transform_indices = @transform_9, window_bounds = array<i64: 128, 256>}, {pipeline_mode = #tpu.pipeline_mode<synchronous>, transform_indices = @transform_10, window_bounds = array<i64: 1, 256>}, {pipeline_mode = #tpu.pipeline_mode<synchronous>, transform_indices = @transform_11, window_bounds = array<i64: 256, 128>}, {pipeline_mode = #tpu.pipeline_mode<synchronous>, transform_indices = @transform_12, window_bounds = array<i64: 1, 128>}, {pipeline_mode = #tpu.pipeline_mode<synchronous>, transform_indices = @transform_13, window_bounds = array<i64: 1, 128>}, {pipeline_mode = #tpu.pipeline_mode<synchronous>, transform_indices = @transform_14, window_bounds = array<i64: 1, 128>}, {transform_indices = @transform_15, window_bounds = array<i64: 1, 32, 128>}]} {
    %c0 = arith.constant 0 : index
    %c0_0 = arith.constant 0 : index
    %c0_1 = arith.constant 0 : index
    %c0_2 = arith.constant 0 : index
    %0 = vector.load %arg4[%c0, %c0_0, %c0_1, %c0_2] : memref<1x4x32x32xbf16, #tpu.memory_space<vmem>>, vector<1x4x32x32xbf16>
    %1 = vector.shape_cast %0 : vector<1x4x32x32xbf16> to vector<4x32x32xbf16>
    %c0_3 = arith.constant 0 : index
    %c0_4 = arith.constant 0 : index
    %c0_5 = arith.constant 0 : index
    %c0_6 = arith.constant 0 : index
    %2 = vector.load %arg5[%c0_3, %c0_4, %c0_5, %c0_6] : memref<1x4x32x32xbf16, #tpu.memory_space<vmem>>, vector<1x4x32x32xbf16>
    %3 = vector.shape_cast %2 : vector<1x4x32x32xbf16> to vector<4x32x32xbf16>
    %c0_7 = arith.constant 0 : index
    %c0_8 = arith.constant 0 : index
    %c0_9 = arith.constant 0 : index
    %c0_10 = arith.constant 0 : index
    %4 = vector.load %arg6[%c0_7, %c0_8, %c0_9, %c0_10] : memref<1x4x32x32xbf16, #tpu.memory_space<vmem>>, vector<1x4x32x32xbf16>
    %5 = vector.shape_cast %4 : vector<1x4x32x32xbf16> to vector<4x32x32xbf16>
    "tpu.trace_start"() <{level = 10 : i32, message = "hqd,hkd->hqk"}> : () -> ()
    %cst = arith.constant dense<0.000000e+00> : vector<4x32x32xf32>
    %6 = tpu.matmul %1, %3, %cst {dimension_numbers = #tpu.dot_dimension_numbers<[2], [2], [1], [1], [0, 0, 0, 1, 1, 1], [0], [0]>} : vector<4x32x32xbf16>, vector<4x32x32xbf16>, vector<4x32x32xf32> -> vector<4x32x32xf32>
    "tpu.trace_stop"() : () -> ()
    %c0_11 = arith.constant 0 : index
    %c0_12 = arith.constant 0 : index
    %c0_13 = arith.constant 0 : index
    %7 = vector.load %arg3[%c0_11, %c0_12, %c0_13] : memref<1x32x32xbf16, #tpu.memory_space<vmem>>, vector<1x32x32xbf16>
    %8 = vector.shape_cast %7 : vector<1x32x32xbf16> to vector<32x32xbf16>
    %9 = arith.extf %8 : vector<32x32xbf16> to vector<32x32xf32>
    %10 = vector.shape_cast %9 : vector<32x32xf32> to vector<1x32x32xf32>
    %11 = vector.broadcast %10 : vector<1x32x32xf32> to vector<4x32x32xf32>
    %12 = arith.addf %6, %11 : vector<4x32x32xf32>
    %cst_14 = arith.constant dense<0xFF800000> : vector<4x32xf32>
    %13 = vector.multi_reduction <maximumf>, %12, %cst_14 [2] : vector<4x32x32xf32> to vector<4x32xf32>
    %14 = vector.shape_cast %13 : vector<4x32xf32> to vector<4x32x1xf32>
    %15 = vector.broadcast %14 : vector<4x32x1xf32> to vector<4x32x32xf32>
    %16 = arith.subf %12, %15 : vector<4x32x32xf32>
    %17 = math.exp %16 : vector<4x32x32xf32>
    %cst_15 = arith.constant dense<0.000000e+00> : vector<4x32xf32>
    %18 = vector.multi_reduction <add>, %17, %cst_15 [2] : vector<4x32x32xf32> to vector<4x32xf32>
    %19 = vector.shape_cast %18 : vector<4x32xf32> to vector<4x32x1xf32>
    %20 = tpu.reciprocal %19 {approx = true} : vector<4x32x1xf32> -> vector<4x32x1xf32>
    %21 = vector.broadcast %20 : vector<4x32x1xf32> to vector<4x32x32xf32>
    %22 = arith.mulf %17, %21 : vector<4x32x32xf32>
    %23 = arith.truncf %22 : vector<4x32x32xf32> to vector<4x32x32xbf16>
    "tpu.trace_start"() <{level = 10 : i32, message = "hqk,hkd->hqd"}> : () -> ()
    %cst_16 = arith.constant dense<0.000000e+00> : vector<4x32x32xf32>
    %24 = tpu.matmul %23, %5, %cst_16 {dimension_numbers = #tpu.dot_dimension_numbers<[2], [1], [1], [2], [0, 0, 0, 1, 1, 2], [0], [0]>} : vector<4x32x32xbf16>, vector<4x32x32xbf16>, vector<4x32x32xf32> -> vector<4x32x32xf32>
    "tpu.trace_stop"() : () -> ()
    %25 = arith.truncf %24 : vector<4x32x32xf32> to vector<4x32x32xbf16>
    %c0_17 = arith.constant 0 : index
    %c0_18 = arith.constant 0 : index
    %c0_19 = arith.constant 0 : index
    %26 = vector.load %arg7[%c0_17, %c0_18, %c0_19] : memref<4x32x128xbf16, #tpu.memory_space<vmem>>, vector<4x32x128xbf16>
    "tpu.trace_start"() <{level = 10 : i32, message = "hqd,hdz->hqz"}> : () -> ()
    %cst_20 = arith.constant dense<0.000000e+00> : vector<4x32x128xf32>
    %27 = tpu.matmul %25, %26, %cst_20 {dimension_numbers = #tpu.dot_dimension_numbers<[2], [1], [1], [2], [0, 0, 0, 1, 1, 2], [0], [0]>} : vector<4x32x32xbf16>, vector<4x32x128xbf16>, vector<4x32x128xf32> -> vector<4x32x128xf32>
    "tpu.trace_stop"() : () -> ()
    %cst_21 = arith.constant dense<0.000000e+00> : vector<32x128xf32>
    %28 = vector.multi_reduction <add>, %27, %cst_21 [0] : vector<4x32x128xf32> to vector<32x128xf32>
    %c0_22 = arith.constant 0 : index
    %c0_23 = arith.constant 0 : index
    %29 = vector.load %arg8[%c0_22, %c0_23] : memref<1x128xf32, #tpu.memory_space<vmem>>, vector<1x128xf32>
    %30 = vector.broadcast %29 : vector<1x128xf32> to vector<32x128xf32>
    %31 = arith.addf %28, %30 : vector<32x128xf32>
    %c0_24 = arith.constant 0 : index
    %c0_25 = arith.constant 0 : index
    %c0_26 = arith.constant 0 : index
    %32 = vector.load %arg2[%c0_24, %c0_25, %c0_26] : memref<1x32x128xbf16, #tpu.memory_space<vmem>>, vector<1x32x128xbf16>
    %33 = vector.shape_cast %32 : vector<1x32x128xbf16> to vector<32x128xbf16>
    %34 = arith.extf %33 : vector<32x128xbf16> to vector<32x128xf32>
    %35 = arith.addf %34, %31 : vector<32x128xf32>
    %c0_27 = arith.constant 0 : index
    %c0_28 = arith.constant 0 : index
    %36 = vector.load %arg9[%c0_27, %c0_28] : memref<1x128xf32, #tpu.memory_space<vmem>>, vector<1x128xf32>
    %c0_29 = arith.constant 0 : index
    %c0_30 = arith.constant 0 : index
    %37 = vector.load %arg10[%c0_29, %c0_30] : memref<1x128xf32, #tpu.memory_space<vmem>>, vector<1x128xf32>
    %cst_31 = arith.constant dense<0.000000e+00> : vector<32xf32>
    %38 = vector.multi_reduction <add>, %35, %cst_31 [1] : vector<32x128xf32> to vector<32xf32>
    %39 = vector.shape_cast %38 : vector<32xf32> to vector<32x1xf32>
    %cst_32 = arith.constant 1.280000e+02 : f32
    %40 = vector.broadcast %cst_32 : f32 to vector<32x1xf32>
    %41 = arith.divf %39, %40 : vector<32x1xf32>
    %42 = vector.broadcast %41 : vector<32x1xf32> to vector<32x128xf32>
    %43 = arith.subf %35, %42 : vector<32x128xf32>
    %44 = arith.mulf %43, %43 : vector<32x128xf32>
    %cst_33 = arith.constant dense<0.000000e+00> : vector<32xf32>
    %45 = vector.multi_reduction <add>, %44, %cst_33 [1] : vector<32x128xf32> to vector<32xf32>
    %46 = vector.shape_cast %45 : vector<32xf32> to vector<32x1xf32>
    %cst_34 = arith.constant 1.280000e+02 : f32
    %47 = vector.broadcast %cst_34 : f32 to vector<32x1xf32>
    %48 = arith.divf %46, %47 : vector<32x1xf32>
    %49 = vector.broadcast %41 : vector<32x1xf32> to vector<32x128xf32>
    %50 = arith.subf %35, %49 : vector<32x128xf32>
    %cst_35 = arith.constant 9.99999974E-6 : f32
    %51 = vector.broadcast %cst_35 : f32 to vector<32x1xf32>
    %52 = arith.addf %48, %51 : vector<32x1xf32>
    %53 = math.rsqrt %52 : vector<32x1xf32>
    %54 = vector.broadcast %53 : vector<32x1xf32> to vector<32x128xf32>
    %55 = arith.mulf %50, %54 : vector<32x128xf32>
    %56 = vector.broadcast %36 : vector<1x128xf32> to vector<32x128xf32>
    %57 = arith.mulf %55, %56 : vector<32x128xf32>
    %58 = vector.broadcast %37 : vector<1x128xf32> to vector<32x128xf32>
    %59 = arith.addf %57, %58 : vector<32x128xf32>
    %60 = arith.truncf %59 : vector<32x128xf32> to vector<32x128xbf16>
    %c0_36 = arith.constant 0 : index
    %c0_37 = arith.constant 0 : index
    %61 = vector.load %arg11[%c0_36, %c0_37] : memref<128x256xbf16, #tpu.memory_space<vmem>>, vector<128x256xbf16>
    %cst_38 = arith.constant dense<0.000000e+00> : vector<32x256xf32>
    %62 = tpu.matmul %60, %61, %cst_38 {dimension_numbers = #tpu.dot_dimension_numbers<[1], [0], [0], [1], [0, 0, 1, 1], [], []>} : vector<32x128xbf16>, vector<128x256xbf16>, vector<32x256xf32> -> vector<32x256xf32>
    %c0_39 = arith.constant 0 : index
    %c0_40 = arith.constant 0 : index
    %63 = vector.load %arg12[%c0_39, %c0_40] : memref<1x256xf32, #tpu.memory_space<vmem>>, vector<1x256xf32>
    %64 = vector.broadcast %63 : vector<1x256xf32> to vector<32x256xf32>
    %65 = arith.addf %62, %64 : vector<32x256xf32>
    %cst_41 = arith.constant 0.000000e+00 : f32
    %66 = vector.broadcast %cst_41 : f32 to vector<32x256xf32>
    %67 = arith.maximumf %65, %66 : vector<32x256xf32>
    %68 = arith.truncf %67 : vector<32x256xf32> to vector<32x256xbf16>
    %c0_42 = arith.constant 0 : index
    %c0_43 = arith.constant 0 : index
    %69 = vector.load %arg13[%c0_42, %c0_43] : memref<256x128xbf16, #tpu.memory_space<vmem>>, vector<256x128xbf16>
    %cst_44 = arith.constant dense<0.000000e+00> : vector<32x128xf32>
    %70 = tpu.matmul %68, %69, %cst_44 {dimension_numbers = #tpu.dot_dimension_numbers<[1], [0], [0], [1], [0, 0, 1, 1], [], []>} : vector<32x256xbf16>, vector<256x128xbf16>, vector<32x128xf32> -> vector<32x128xf32>
    %c0_45 = arith.constant 0 : index
    %c0_46 = arith.constant 0 : index
    %71 = vector.load %arg14[%c0_45, %c0_46] : memref<1x128xf32, #tpu.memory_space<vmem>>, vector<1x128xf32>
    %72 = vector.broadcast %71 : vector<1x128xf32> to vector<32x128xf32>
    %73 = arith.addf %70, %72 : vector<32x128xf32>
    %74 = arith.addf %59, %73 : vector<32x128xf32>
    %c0_47 = arith.constant 0 : index
    %c0_48 = arith.constant 0 : index
    %75 = vector.load %arg15[%c0_47, %c0_48] : memref<1x128xf32, #tpu.memory_space<vmem>>, vector<1x128xf32>
    %c0_49 = arith.constant 0 : index
    %c0_50 = arith.constant 0 : index
    %76 = vector.load %arg16[%c0_49, %c0_50] : memref<1x128xf32, #tpu.memory_space<vmem>>, vector<1x128xf32>
    %cst_51 = arith.constant dense<0.000000e+00> : vector<32xf32>
    %77 = vector.multi_reduction <add>, %74, %cst_51 [1] : vector<32x128xf32> to vector<32xf32>
    %78 = vector.shape_cast %77 : vector<32xf32> to vector<32x1xf32>
    %cst_52 = arith.constant 1.280000e+02 : f32
    %79 = vector.broadcast %cst_52 : f32 to vector<32x1xf32>
    %80 = arith.divf %78, %79 : vector<32x1xf32>
    %81 = vector.broadcast %80 : vector<32x1xf32> to vector<32x128xf32>
    %82 = arith.subf %74, %81 : vector<32x128xf32>
    %83 = arith.mulf %82, %82 : vector<32x128xf32>
    %cst_53 = arith.constant dense<0.000000e+00> : vector<32xf32>
    %84 = vector.multi_reduction <add>, %83, %cst_53 [1] : vector<32x128xf32> to vector<32xf32>
    %85 = vector.shape_cast %84 : vector<32xf32> to vector<32x1xf32>
    %cst_54 = arith.constant 1.280000e+02 : f32
    %86 = vector.broadcast %cst_54 : f32 to vector<32x1xf32>
    %87 = arith.divf %85, %86 : vector<32x1xf32>
    %88 = vector.broadcast %80 : vector<32x1xf32> to vector<32x128xf32>
    %89 = arith.subf %74, %88 : vector<32x128xf32>
    %cst_55 = arith.constant 9.99999974E-6 : f32
    %90 = vector.broadcast %cst_55 : f32 to vector<32x1xf32>
    %91 = arith.addf %87, %90 : vector<32x1xf32>
    %92 = math.rsqrt %91 : vector<32x1xf32>
    %93 = vector.broadcast %92 : vector<32x1xf32> to vector<32x128xf32>
    %94 = arith.mulf %89, %93 : vector<32x128xf32>
    %95 = vector.broadcast %75 : vector<1x128xf32> to vector<32x128xf32>
    %96 = arith.mulf %94, %95 : vector<32x128xf32>
    %97 = vector.broadcast %76 : vector<1x128xf32> to vector<32x128xf32>
    %98 = arith.addf %96, %97 : vector<32x128xf32>
    %c0_56 = arith.constant 0 : index
    %c0_57 = arith.constant 0 : index
    %c0_58 = arith.constant 0 : index
    %99 = vector.load %arg17[%c0_56, %c0_57, %c0_58] : memref<1x32x128xf32, #tpu.memory_space<vmem>>, vector<1x32x128xf32>
    %100 = vector.shape_cast %99 : vector<1x32x128xf32> to vector<32x128xf32>
    %101 = vector.shape_cast %98 : vector<32x128xf32> to vector<1x32x128xf32>
    tpu.vector_store %arg17[%c0_56, %c0_57, %c0_58], %101 {strides = array<i32>} : memref<1x32x128xf32, #tpu.memory_space<vmem>>, vector<1x32x128xf32>,
    return
  }
  func.func @transform_0(%arg0: i32, %arg1: i32) -> (i32, i32, i32) {
    %c0_i32 = arith.constant 0 : i32
    %c0_i32_0 = arith.constant 0 : i32
    return %arg0, %arg1, %c0_i32 : i32, i32, i32
  }
  func.func @transform_1(%arg0: i32, %arg1: i32) -> (i32, i32, i32) {
    %c0_i32 = arith.constant 0 : i32
    %c0_i32_0 = arith.constant 0 : i32
    return %arg0, %arg1, %c0_i32 : i32, i32, i32
  }
  func.func @transform_2(%arg0: i32, %arg1: i32) -> (i32, i32, i32, i32) {
    %c0_i32 = arith.constant 0 : i32
    %c0_i32_0 = arith.constant 0 : i32
    %c0_i32_1 = arith.constant 0 : i32
    return %arg0, %c0_i32, %arg1, %c0_i32_0 : i32, i32, i32, i32
  }
  func.func @transform_3(%arg0: i32, %arg1: i32) -> (i32, i32, i32, i32) {
    %c0_i32 = arith.constant 0 : i32
    %c0_i32_0 = arith.constant 0 : i32
    %c0_i32_1 = arith.constant 0 : i32
    %c0_i32_2 = arith.constant 0 : i32
    return %arg0, %c0_i32, %c0_i32_0, %c0_i32_1 : i32, i32, i32, i32
  }
  func.func @transform_4(%arg0: i32, %arg1: i32) -> (i32, i32, i32, i32) {
    %c0_i32 = arith.constant 0 : i32
    %c0_i32_0 = arith.constant 0 : i32
    %c0_i32_1 = arith.constant 0 : i32
    %c0_i32_2 = arith.constant 0 : i32
    return %arg0, %c0_i32, %c0_i32_0, %c0_i32_1 : i32, i32, i32, i32
  }
  func.func @transform_5(%arg0: i32, %arg1: i32) -> (i32, i32, i32) {
    %c0_i32 = arith.constant 0 : i32
    %c0_i32_0 = arith.constant 0 : i32
    %c0_i32_1 = arith.constant 0 : i32
    %c0_i32_2 = arith.constant 0 : i32
    return %c0_i32, %c0_i32_0, %c0_i32_1 : i32, i32, i32
  }
  func.func @transform_6(%arg0: i32, %arg1: i32) -> (i32, i32) {
    %c0_i32 = arith.constant 0 : i32
    %c0_i32_0 = arith.constant 0 : i32
    %c0_i32_1 = arith.constant 0 : i32
    return %c0_i32, %c0_i32_0 : i32, i32
  }
  func.func @transform_7(%arg0: i32, %arg1: i32) -> (i32, i32) {
    %c0_i32 = arith.constant 0 : i32
    %c0_i32_0 = arith.constant 0 : i32
    %c0_i32_1 = arith.constant 0 : i32
    return %c0_i32, %c0_i32_0 : i32, i32
  }
  func.func @transform_8(%arg0: i32, %arg1: i32) -> (i32, i32) {
    %c0_i32 = arith.constant 0 : i32
    %c0_i32_0 = arith.constant 0 : i32
    %c0_i32_1 = arith.constant 0 : i32
    return %c0_i32, %c0_i32_0 : i32, i32
  }
  func.func @transform_9(%arg0: i32, %arg1: i32) -> (i32, i32) {
    %c0_i32 = arith.constant 0 : i32
    %c0_i32_0 = arith.constant 0 : i32
    %c0_i32_1 = arith.constant 0 : i32
    return %c0_i32, %c0_i32_0 : i32, i32
  }
  func.func @transform_10(%arg0: i32, %arg1: i32) -> (i32, i32) {
    %c0_i32 = arith.constant 0 : i32
    %c0_i32_0 = arith.constant 0 : i32
    %c0_i32_1 = arith.constant 0 : i32
    return %c0_i32, %c0_i32_0 : i32, i32
  }
  func.func @transform_11(%arg0: i32, %arg1: i32) -> (i32, i32) {
    %c0_i32 = arith.constant 0 : i32
    %c0_i32_0 = arith.constant 0 : i32
    %c0_i32_1 = arith.constant 0 : i32
    return %c0_i32, %c0_i32_0 : i32, i32
  }
  func.func @transform_12(%arg0: i32, %arg1: i32) -> (i32, i32) {
    %c0_i32 = arith.constant 0 : i32
    %c0_i32_0 = arith.constant 0 : i32
    %c0_i32_1 = arith.constant 0 : i32
    return %c0_i32, %c0_i32_0 : i32, i32
  }
  func.func @transform_13(%arg0: i32, %arg1: i32) -> (i32, i32) {
    %c0_i32 = arith.constant 0 : i32
    %c0_i32_0 = arith.constant 0 : i32
    %c0_i32_1 = arith.constant 0 : i32
    return %c0_i32, %c0_i32_0 : i32, i32
  }
  func.func @transform_14(%arg0: i32, %arg1: i32) -> (i32, i32) {
    %c0_i32 = arith.constant 0 : i32
    %c0_i32_0 = arith.constant 0 : i32
    %c0_i32_1 = arith.constant 0 : i32
    return %c0_i32, %c0_i32_0 : i32, i32
  }
  func.func @transform_15(%arg0: i32, %arg1: i32) -> (i32, i32, i32) {
    %c0_i32 = arith.constant 0 : i32
    %c0_i32_0 = arith.constant 0 : i32
    return %arg0, %arg1, %c0_i32 : i32, i32, i32
  }
}

</mosaic_0001>

<llo_original>
// kernel: encoder_forward.2
$region0: #{encoder_forward.2}
  #allocation0 [shape = 'u32[]', space=smem, size = 0x4, offset = 0x4, fixed_abs, tag = 'smem constant byte address 0x4 - core index']
  #allocation1 [shape = 'u32[72,128]{1,0:T(1,128)}', space=vmem, size = 0x9000, scoped, tag = 'internal scratch']
  %s0 = inlined_call_operand.vmem [shape: f32[2,32,128], index: 0, kind: input, shape index: {}]
  %s1 = inlined_call_operand.vmem [shape: bf16[2,32,32], index: 1, kind: input, shape index: {}]
  %s2 = inlined_call_operand.vmem [shape: bf16[2,4,32,32], index: 2, kind: input, shape index: {}]
  %s3 = inlined_call_operand.vmem [shape: bf16[2,4,32,32], index: 3, kind: input, shape index: {}]
  %s4 = inlined_call_operand.vmem [shape: bf16[2,4,32,32], index: 4, kind: input, shape index: {}]
  %s5 = inlined_call_operand.vmem [shape: bf16[4,32,128], index: 5, kind: input, shape index: {}]
  %s6 = inlined_call_operand.vmem [shape: f32[1,128], index: 6, kind: input, shape index: {}]
  %s7 = inlined_call_operand.vmem [shape: f32[1,128], index: 7, kind: input, shape index: {}]
  %s8 = inlined_call_operand.vmem [shape: f32[1,128], index: 8, kind: input, shape index: {}]
  %s9 = inlined_call_operand.vmem [shape: bf16[128,256], index: 9, kind: input, shape index: {}]
  %s10 = inlined_call_operand.vmem [shape: f32[1,256], index: 10, kind: input, shape index: {}]
  %s11 = inlined_call_operand.vmem [shape: bf16[256,128], index: 11, kind: input, shape index: {}]
  %s12 = inlined_call_operand.vmem [shape: f32[1,128], index: 12, kind: input, shape index: {}]
  %s13 = inlined_call_operand.vmem [shape: f32[1,128], index: 13, kind: input, shape index: {}]
  %s14 = inlined_call_operand.vmem [shape: f32[1,128], index: 14, kind: input, shape index: {}]
  %s15 = inlined_call_operand.vmem [shape: bf16[2,32,128], index: 15, kind: output, shape index: {}]
  %s16 = sld [smem:[#allocation0]]
  $region93: #{encoder_forward.2} parent=0
    _
  %s18 = ssub.s32 1, %s16
  %s19 = scalar_select 0, %s18, %s16
  loop: start=0, step=1, limit=4
  $region2: #{encoder_forward.2} parent=0 // loop_pre_header
    _
  $region3: #{encoder_forward.2} parent=0 // loop_header
    %s21 = sphi 0, %s25
    %p22 = scmp.ge.s32.totalorder %s21, 4
    %s28 = sphi 0, %s40
    %s29 = sphi 0, %s36
    %s30 = sphi 0, %s28
    %s31 = sphi 0, %s29
    %s32 = sphi 0, %s30
    %s33 = sphi 0, %s31
    %s45 = sphi 0, %s47
    %s48 = sphi 0, %s45
    %s49 = sphi 0, %s48
    %s65 = sphi 0, %s49
    %s73 = sphi 0, %s75
    %s76 = sphi 0, %s73
    %s77 = sphi 0, %s76
    %s93 = sphi 0, %s77
    %s101 = sphi 0, %s103
    %s104 = sphi 0, %s101
    %s105 = sphi 0, %s104
    %s121 = sphi 0, %s105
    %s127 = sphi 0, %s129
    %s130 = sphi 0, %s127
    %s131 = sphi 0, %s130
    %s147 = sphi 0, %s131
    %s153 = sphi 0, %s155
    %s156 = sphi 0, %s153
    %s157 = sphi 0, %s156
    %s173 = sphi 0, %s157
    %s177 = sphi 0, %s177
    %s179 = sphi 0, %s177
    %s180 = sphi 0, %s179
    %s194 = sphi 0, %s180
    %s198 = sphi 0, %s198
    %s200 = sphi 0, %s198
    %s201 = sphi 0, %s200
    %s215 = sphi 0, %s201
    %s219 = sphi 0, %s219
    %s221 = sphi 0, %s219
    %s222 = sphi 0, %s221
    %s236 = sphi 0, %s222
    %s240 = sphi 0, %s240
    %s242 = sphi 0, %s240
    %s243 = sphi 0, %s242
    %s257 = sphi 0, %s243
    %s261 = sphi 0, %s261
    %s263 = sphi 0, %s261
    %s264 = sphi 0, %s263
    %s278 = sphi 0, %s264
    %s282 = sphi 0, %s282
    %s284 = sphi 0, %s282
    %s285 = sphi 0, %s284
    %s299 = sphi 0, %s285
    %s303 = sphi 0, %s303
    %s305 = sphi 0, %s303
    %s306 = sphi 0, %s305
    %s320 = sphi 0, %s306
    %s324 = sphi 0, %s324
    %s326 = sphi 0, %s324
    %s327 = sphi 0, %s326
    %s341 = sphi 0, %s327
    %s345 = sphi 0, %s345
    %s347 = sphi 0, %s345
    %s348 = sphi 0, %s347
    %s362 = sphi 0, %s348
    %s366 = sphi 0, %s366
    %s368 = sphi 0, %s366
    %s369 = sphi 0, %s368
    %s383 = sphi 0, %s369
    %s391 = sphi 0, %s393
    %s394 = sphi 0, %s391
    %s395 = sphi 0, %s394
    %s411 = sphi 0, %s395
  $region4: #{encoder_forward.2} parent=0 // loop_header_branch
    %24 = sbr.rel (%p22) target = $region8
  $region5: #{encoder_forward.2} parent=0 // loop_body
    %s26 = ssub.s32 %s21, 1
    %s27 = ssub.s32 %s21, 2
    %s34 = sadd.s32 1, %s29
    %p35 = scmp.ge.s32.totalorder %s34, 1
    %s36 = scalar_select %p35, 0, %s34
    %s37 = sadd.s32 1, %s28
    %s38 = scalar_select %p35, %s37, %s28
    %p39 = scmp.ge.s32.totalorder %s38, 2
    %s40 = scalar_select %p39, 0, %s38
    %s41 = ssub.s32 %s28, %s40
    %s42 = ssub.s32 %s29, %s36
    %s43 = sor.u32 %s41, %s42
    %p44 = scmp.eq.s32.totalorder %s43, 0
    %s46 = sadd.s32 %s45, 1
    %s47 = scalar_select %p44, %s45, %s46
    %p50 = pneg %p44
    %p51 = scmp.eq.s32.totalorder %s21, 1
    %p52 = por %p50, %p51
    %p53 = scmp.ne.s32.totalorder %s45, %s48
    %p54 = scmp.eq.s32.totalorder %s21, 0
    %p55 = por %p53, %p54
    %p56 = scmp.ne.s32.totalorder %s45, %s48
    %p57 = scmp.eq.s32.totalorder %s26, 1
    %p58 = por %p56, %p57
    %p59 = scmp.ne.s32.totalorder %s48, %s49
    %p60 = scmp.eq.s32.totalorder %s26, 0
    %p61 = por %p59, %p60
    %p62 = scmp.ne.s32.totalorder %s48, %s49
    %p63 = scmp.eq.s32.totalorder %s27, 1
    %p64 = por %p62, %p63
    %p66 = scmp.ne.s32.totalorder %s49, %s65
    %p67 = scmp.eq.s32.totalorder %s27, 0
    %p68 = por %p66, %p67
    %s69 = ssub.s32 %s28, %s40
    %s70 = ssub.s32 %s29, %s36
    %s71 = sor.u32 %s69, %s70
    %p72 = scmp.eq.s32.totalorder %s71, 0
    %s74 = sadd.s32 %s73, 1
    %s75 = scalar_select %p72, %s73, %s74
    %p78 = pneg %p72
    %p79 = scmp.eq.s32.totalorder %s21, 1
    %p80 = por %p78, %p79
    %p81 = scmp.ne.s32.totalorder %s73, %s76
    %p82 = scmp.eq.s32.totalorder %s21, 0
    %p83 = por %p81, %p82
    %p84 = scmp.ne.s32.totalorder %s73, %s76
    %p85 = scmp.eq.s32.totalorder %s26, 1
    %p86 = por %p84, %p85
    %p87 = scmp.ne.s32.totalorder %s76, %s77
    %p88 = scmp.eq.s32.totalorder %s26, 0
    %p89 = por %p87, %p88
    %p90 = scmp.ne.s32.totalorder %s76, %s77
    %p91 = scmp.eq.s32.totalorder %s27, 1
    %p92 = por %p90, %p91
    %p94 = scmp.ne.s32.totalorder %s77, %s93
    %p95 = scmp.eq.s32.totalorder %s27, 0
    %p96 = por %p94, %p95
    %s97 = ssub.s32 %s28, %s40
    %s98 = ssub.s32 %s29, %s36
    %s99 = sor.u32 %s97, %s98
    %p100 = scmp.eq.s32.totalorder %s99, 0
    %s102 = sadd.s32 %s101, 1
    %s103 = scalar_select %p100, %s101, %s102
    %p106 = pneg %p100
    %p107 = scmp.eq.s32.totalorder %s21, 1
    %p108 = por %p106, %p107
    %p109 = scmp.ne.s32.totalorder %s101, %s104
    %p110 = scmp.eq.s32.totalorder %s21, 0
    %p111 = por %p109, %p110
    %p112 = scmp.ne.s32.totalorder %s101, %s104
    %p113 = scmp.eq.s32.totalorder %s26, 1
    %p114 = por %p112, %p113
    %p115 = scmp.ne.s32.totalorder %s104, %s105
    %p116 = scmp.eq.s32.totalorder %s26, 0
    %p117 = por %p115, %p116
    %p118 = scmp.ne.s32.totalorder %s104, %s105
    %p119 = scmp.eq.s32.totalorder %s27, 1
    %p120 = por %p118, %p119
    %p122 = scmp.ne.s32.totalorder %s105, %s121
    %p123 = scmp.eq.s32.totalorder %s27, 0
    %p124 = por %p122, %p123
    %s125 = ssub.s32 %s28, %s40
    %p126 = scmp.eq.s32.totalorder %s125, 0
    %s128 = sadd.s32 %s127, 1
    %s129 = scalar_select %p126, %s127, %s128
    %p132 = pneg %p126
    %p133 = scmp.eq.s32.totalorder %s21, 1
    %p134 = por %p132, %p133
    %p135 = scmp.ne.s32.totalorder %s127, %s130
    %p136 = scmp.eq.s32.totalorder %s21, 0
    %p137 = por %p135, %p136
    %p138 = scmp.ne.s32.totalorder %s127, %s130
    %p139 = scmp.eq.s32.totalorder %s26, 1
    %p140 = por %p138, %p139
    %p141 = scmp.ne.s32.totalorder %s130, %s131
    %p142 = scmp.eq.s32.totalorder %s26, 0
    %p143 = por %p141, %p142
    %p144 = scmp.ne.s32.totalorder %s130, %s131
    %p145 = scmp.eq.s32.totalorder %s27, 1
    %p146 = por %p144, %p145
    %p148 = scmp.ne.s32.totalorder %s131, %s147
    %p149 = scmp.eq.s32.totalorder %s27, 0
    %p150 = por %p148, %p149
    %s151 = ssub.s32 %s28, %s40
    %p152 = scmp.eq.s32.totalorder %s151, 0
    %s154 = sadd.s32 %s153, 1
    %s155 = scalar_select %p152, %s153, %s154
    %p158 = pneg %p152
    %p159 = scmp.eq.s32.totalorder %s21, 1
    %p160 = por %p158, %p159
    %p161 = scmp.ne.s32.totalorder %s153, %s156
    %p162 = scmp.eq.s32.totalorder %s21, 0
    %p163 = por %p161, %p162
    %p164 = scmp.ne.s32.totalorder %s153, %s156
    %p165 = scmp.eq.s32.totalorder %s26, 1
    %p166 = por %p164, %p165
    %p167 = scmp.ne.s32.totalorder %s156, %s157
    %p168 = scmp.eq.s32.totalorder %s26, 0
    %p169 = por %p167, %p168
    %p170 = scmp.ne.s32.totalorder %s156, %s157
    %p171 = scmp.eq.s32.totalorder %s27, 1
    %p172 = por %p170, %p171
    %p174 = scmp.ne.s32.totalorder %s157, %s173
    %p175 = scmp.eq.s32.totalorder %s27, 0
    %p176 = por %p174, %p175
    %s178 = sadd.s32 %s177, 1
    %p181 = scmp.eq.s32.totalorder %s21, 1
    %p182 = scmp.ne.s32.totalorder %s177, %s179
    %p183 = scmp.eq.s32.totalorder %s21, 0
    %p184 = por %p182, %p183
    %p185 = scmp.ne.s32.totalorder %s177, %s179
    %p186 = scmp.eq.s32.totalorder %s26, 1
    %p187 = por %p185, %p186
    %p188 = scmp.ne.s32.totalorder %s179, %s180
    %p189 = scmp.eq.s32.totalorder %s26, 0
    %p190 = por %p188, %p189
    %p191 = scmp.ne.s32.totalorder %s179, %s180
    %p192 = scmp.eq.s32.totalorder %s27, 1
    %p193 = por %p191, %p192
    %p195 = scmp.ne.s32.totalorder %s180, %s194
    %p196 = scmp.eq.s32.totalorder %s27, 0
    %p197 = por %p195, %p196
    %s199 = sadd.s32 %s198, 1
    %p202 = scmp.eq.s32.totalorder %s21, 1
    %p203 = scmp.ne.s32.totalorder %s198, %s200
    %p204 = scmp.eq.s32.totalorder %s21, 0
    %p205 = por %p203, %p204
    %p206 = scmp.ne.s32.totalorder %s198, %s200
    %p207 = scmp.eq.s32.totalorder %s26, 1
    %p208 = por %p206, %p207
    %p209 = scmp.ne.s32.totalorder %s200, %s201
    %p210 = scmp.eq.s32.totalorder %s26, 0
    %p211 = por %p209, %p210
    %p212 = scmp.ne.s32.totalorder %s200, %s201
    %p213 = scmp.eq.s32.totalorder %s27, 1
    %p214 = por %p212, %p213
    %p216 = scmp.ne.s32.totalorder %s201, %s215
    %p217 = scmp.eq.s32.totalorder %s27, 0
    %p218 = por %p216, %p217
    %s220 = sadd.s32 %s219, 1
    %p223 = scmp.eq.s32.totalorder %s21, 1
    %p224 = scmp.ne.s32.totalorder %s219, %s221
    %p225 = scmp.eq.s32.totalorder %s21, 0
    %p226 = por %p224, %p225
    %p227 = scmp.ne.s32.totalorder %s219, %s221
    %p228 = scmp.eq.s32.totalorder %s26, 1
    %p229 = por %p227, %p228
    %p230 = scmp.ne.s32.totalorder %s221, %s222
    %p231 = scmp.eq.s32.totalorder %s26, 0
    %p232 = por %p230, %p231
    %p233 = scmp.ne.s32.totalorder %s221, %s222
    %p234 = scmp.eq.s32.totalorder %s27, 1
    %p235 = por %p233, %p234
    %p237 = scmp.ne.s32.totalorder %s222, %s236
    %p238 = scmp.eq.s32.totalorder %s27, 0
    %p239 = por %p237, %p238
    %s241 = sadd.s32 %s240, 1
    %p244 = scmp.eq.s32.totalorder %s21, 1
    %p245 = scmp.ne.s32.totalorder %s240, %s242
    %p246 = scmp.eq.s32.totalorder %s21, 0
    %p247 = por %p245, %p246
    %p248 = scmp.ne.s32.totalorder %s240, %s242
    %p249 = scmp.eq.s32.totalorder %s26, 1
    %p250 = por %p248, %p249
    %p251 = scmp.ne.s32.totalorder %s242, %s243
    %p252 = scmp.eq.s32.totalorder %s26, 0
    %p253 = por %p251, %p252
    %p254 = scmp.ne.s32.totalorder %s242, %s243
    %p255 = scmp.eq.s32.totalorder %s27, 1
    %p256 = por %p254, %p255
    %p258 = scmp.ne.s32.totalorder %s243, %s257
    %p259 = scmp.eq.s32.totalorder %s27, 0
    %p260 = por %p258, %p259
    %s262 = sadd.s32 %s261, 1
    %p265 = scmp.eq.s32.totalorder %s21, 1
    %p266 = scmp.ne.s32.totalorder %s261, %s263
    %p267 = scmp.eq.s32.totalorder %s21, 0
    %p268 = por %p266, %p267
    %p269 = scmp.ne.s32.totalorder %s261, %s263
    %p270 = scmp.eq.s32.totalorder %s26, 1
    %p271 = por %p269, %p270
    %p272 = scmp.ne.s32.totalorder %s263, %s264
    %p273 = scmp.eq.s32.totalorder %s26, 0
    %p274 = por %p272, %p273
    %p275 = scmp.ne.s32.totalorder %s263, %s264
    %p276 = scmp.eq.s32.totalorder %s27, 1
    %p277 = por %p275, %p276
    %p279 = scmp.ne.s32.totalorder %s264, %s278
    %p280 = scmp.eq.s32.totalorder %s27, 0
    %p281 = por %p279, %p280
    %s283 = sadd.s32 %s282, 1
    %p286 = scmp.eq.s32.totalorder %s21, 1
    %p287 = scmp.ne.s32.totalorder %s282, %s284
    %p288 = scmp.eq.s32.totalorder %s21, 0
    %p289 = por %p287, %p288
    %p290 = scmp.ne.s32.totalorder %s282, %s284
    %p291 = scmp.eq.s32.totalorder %s26, 1
    %p292 = por %p290, %p291
    %p293 = scmp.ne.s32.totalorder %s284, %s285
    %p294 = scmp.eq.s32.totalorder %s26, 0
    %p295 = por %p293, %p294
    %p296 = scmp.ne.s32.totalorder %s284, %s285
    %p297 = scmp.eq.s32.totalorder %s27, 1
    %p298 = por %p296, %p297
    %p300 = scmp.ne.s32.totalorder %s285, %s299
    %p301 = scmp.eq.s32.totalorder %s27, 0
    %p302 = por %p300, %p301
    %s304 = sadd.s32 %s303, 1
    %p307 = scmp.eq.s32.totalorder %s21, 1
    %p308 = scmp.ne.s32.totalorder %s303, %s305
    %p309 = scmp.eq.s32.totalorder %s21, 0
    %p310 = por %p308, %p309
    %p311 = scmp.ne.s32.totalorder %s303, %s305
    %p312 = scmp.eq.s32.totalorder %s26, 1
    %p313 = por %p311, %p312
    %p314 = scmp.ne.s32.totalorder %s305, %s306
    %p315 = scmp.eq.s32.totalorder %s26, 0
    %p316 = por %p314, %p315
    %p317 = scmp.ne.s32.totalorder %s305, %s306
    %p318 = scmp.eq.s32.totalorder %s27, 1
    %p319 = por %p317, %p318
    %p321 = scmp.ne.s32.totalorder %s306, %s320
    %p322 = scmp.eq.s32.totalorder %s27, 0
    %p323 = por %p321, %p322
    %s325 = sadd.s32 %s324, 1
    %p328 = scmp.eq.s32.totalorder %s21, 1
    %p329 = scmp.ne.s32.totalorder %s324, %s326
    %p330 = scmp.eq.s32.totalorder %s21, 0
    %p331 = por %p329, %p330
    %p332 = scmp.ne.s32.totalorder %s324, %s326
    %p333 = scmp.eq.s32.totalorder %s26, 1
    %p334 = por %p332, %p333
    %p335 = scmp.ne.s32.totalorder %s326, %s327
    %p336 = scmp.eq.s32.totalorder %s26, 0
    %p337 = por %p335, %p336
    %p338 = scmp.ne.s32.totalorder %s326, %s327
    %p339 = scmp.eq.s32.totalorder %s27, 1
    %p340 = por %p338, %p339
    %p342 = scmp.ne.s32.totalorder %s327, %s341
    %p343 = scmp.eq.s32.totalorder %s27, 0
    %p344 = por %p342, %p343
    %s346 = sadd.s32 %s345, 1
    %p349 = scmp.eq.s32.totalorder %s21, 1
    %p350 = scmp.ne.s32.totalorder %s345, %s347
    %p351 = scmp.eq.s32.totalorder %s21, 0
    %p352 = por %p350, %p351
    %p353 = scmp.ne.s32.totalorder %s345, %s347
    %p354 = scmp.eq.s32.totalorder %s26, 1
    %p355 = por %p353, %p354
    %p356 = scmp.ne.s32.totalorder %s347, %s348
    %p357 = scmp.eq.s32.totalorder %s26, 0
    %p358 = por %p356, %p357
    %p359 = scmp.ne.s32.totalorder %s347, %s348
    %p360 = scmp.eq.s32.totalorder %s27, 1
    %p361 = por %p359, %p360
    %p363 = scmp.ne.s32.totalorder %s348, %s362
    %p364 = scmp.eq.s32.totalorder %s27, 0
    %p365 = por %p363, %p364
    %s367 = sadd.s32 %s366, 1
    %p370 = scmp.eq.s32.totalorder %s21, 1
    %p371 = scmp.ne.s32.totalorder %s366, %s368
    %p372 = scmp.eq.s32.totalorder %s21, 0
    %p373 = por %p371, %p372
    %p374 = scmp.ne.s32.totalorder %s366, %s368
    %p375 = scmp.eq.s32.totalorder %s26, 1
    %p376 = por %p374, %p375
    %p377 = scmp.ne.s32.totalorder %s368, %s369
    %p378 = scmp.eq.s32.totalorder %s26, 0
    %p379 = por %p377, %p378
    %p380 = scmp.ne.s32.totalorder %s368, %s369
    %p381 = scmp.eq.s32.totalorder %s27, 1
    %p382 = por %p380, %p381
    %p384 = scmp.ne.s32.totalorder %s369, %s383
    %p385 = scmp.eq.s32.totalorder %s27, 0
    %p386 = por %p384, %p385
    %s387 = ssub.s32 %s28, %s40
    %s388 = ssub.s32 %s29, %s36
    %s389 = sor.u32 %s387, %s388
    %p390 = scmp.eq.s32.totalorder %s389, 0
    %s392 = sadd.s32 %s391, 1
    %s393 = scalar_select %p390, %s391, %s392
    %p396 = pneg %p390
    %p397 = scmp.eq.s32.totalorder %s21, 1
    %p398 = por %p396, %p397
    %p399 = scmp.ne.s32.totalorder %s391, %s394
    %p400 = scmp.eq.s32.totalorder %s21, 0
    %p401 = por %p399, %p400
    %p402 = scmp.ne.s32.totalorder %s391, %s394
    %p403 = scmp.eq.s32.totalorder %s26, 1
    %p404 = por %p402, %p403
    %p405 = scmp.ne.s32.totalorder %s394, %s395
    %p406 = scmp.eq.s32.totalorder %s26, 0
    %p407 = por %p405, %p406
    %p408 = scmp.ne.s32.totalorder %s394, %s395
    %p409 = scmp.eq.s32.totalorder %s27, 1
    %p410 = por %p408, %p409
    %p412 = scmp.ne.s32.totalorder %s395, %s411
    %p413 = scmp.eq.s32.totalorder %s27, 0
    %p414 = por %p412, %p413
    %p415 = scmp.le.s32.totalorder 1, %s21
    %p416 = scmp.lt.s32.totalorder %s21, 3
    %p417 = pnand %p415, %p416
    %p418 = pneg %p417
    // Predicated region
    $region9: #{encoder_forward.2} parent=5 // pred_check
      _
    $region10: #{encoder_forward.2} parent=5 // pred_check_branch
      %420 = sbr.rel (%p417) target = $region12
    $region11: #{encoder_forward.2} parent=5 // pred_region
      %s421 = ssub.s32 %s21, 1
      // Predicated region
      $region13: #{encoder_forward.2} parent=11 // pred_check
        %p422 = pneg %p190
      $region14: #{encoder_forward.2} parent=11 // pred_check_branch
        %424 = sbr.rel (%p422) target = $region16
      $region15: #{encoder_forward.2} parent=11 // pred_region
        _
      $region16: #{encoder_forward.2} parent=11 // pred_fallthru
        _
      // Predicated region
      $region17: #{encoder_forward.2} parent=11 // pred_check
        %p425 = pneg %p211
      $region18: #{encoder_forward.2} parent=11 // pred_check_branch
        %427 = sbr.rel (%p425) target = $region20
      $region19: #{encoder_forward.2} parent=11 // pred_region
        _
      $region20: #{encoder_forward.2} parent=11 // pred_fallthru
        _
      // Predicated region
      $region21: #{encoder_forward.2} parent=11 // pred_check
        %p428 = pneg %p232
      $region22: #{encoder_forward.2} parent=11 // pred_check_branch
        %430 = sbr.rel (%p428) target = $region24
      $region23: #{encoder_forward.2} parent=11 // pred_region
        _
      $region24: #{encoder_forward.2} parent=11 // pred_fallthru
        _
      // Predicated region
      $region25: #{encoder_forward.2} parent=11 // pred_check
        %p431 = pneg %p253
      $region26: #{encoder_forward.2} parent=11 // pred_check_branch
        %433 = sbr.rel (%p431) target = $region28
      $region27: #{encoder_forward.2} parent=11 // pred_region
        _
      $region28: #{encoder_forward.2} parent=11 // pred_fallthru
        _
      // Predicated region
      $region29: #{encoder_forward.2} parent=11 // pred_check
        %p434 = pneg %p274
      $region30: #{encoder_forward.2} parent=11 // pred_check_branch
        %436 = sbr.rel (%p434) target = $region32
      $region31: #{encoder_forward.2} parent=11 // pred_region
        _
      $region32: #{encoder_forward.2} parent=11 // pred_fallthru
        _
      // Predicated region
      $region33: #{encoder_forward.2} parent=11 // pred_check
        %p437 = pneg %p295
      $region34: #{encoder_forward.2} parent=11 // pred_check_branch
        %439 = sbr.rel (%p437) target = $region36
      $region35: #{encoder_forward.2} parent=11 // pred_region
        _
      $region36: #{encoder_forward.2} parent=11 // pred_fallthru
        _
      // Predicated region
      $region37: #{encoder_forward.2} parent=11 // pred_check
        %p440 = pneg %p316
      $region38: #{encoder_forward.2} parent=11 // pred_check_branch
        %442 = sbr.rel (%p440) target = $region40
      $region39: #{encoder_forward.2} parent=11 // pred_region
        _
      $region40: #{encoder_forward.2} parent=11 // pred_fallthru
        _
      // Predicated region
      $region41: #{encoder_forward.2} parent=11 // pred_check
        %p443 = pneg %p337
      $region42: #{encoder_forward.2} parent=11 // pred_check_branch
        %445 = sbr.rel (%p443) target = $region44
      $region43: #{encoder_forward.2} parent=11 // pred_region
        _
      $region44: #{encoder_forward.2} parent=11 // pred_fallthru
        _
      // Predicated region
      $region45: #{encoder_forward.2} parent=11 // pred_check
        %p446 = pneg %p358
      $region46: #{encoder_forward.2} parent=11 // pred_check_branch
        %448 = sbr.rel (%p446) target = $region48
      $region47: #{encoder_forward.2} parent=11 // pred_region
        _
      $region48: #{encoder_forward.2} parent=11 // pred_fallthru
        _
      // Predicated region
      $region49: #{encoder_forward.2} parent=11 // pred_check
        %p449 = pneg %p379
      $region50: #{encoder_forward.2} parent=11 // pred_check_branch
        %451 = sbr.rel (%p449) target = $region52
      $region51: #{encoder_forward.2} parent=11 // pred_region
        _
      $region52: #{encoder_forward.2} parent=11 // pred_fallthru
        _
    $region12: #{encoder_forward.2} parent=5 // pred_fallthru
      _
    %p452 = scmp.lt.s32.totalorder %s21, 2
    // Predicated region
    $region53: #{encoder_forward.2} parent=5 // pred_check
      %p453 = pneg %p452
    $region54: #{encoder_forward.2} parent=5 // pred_check_branch
      %455 = sbr.rel (%p453) target = $region56
    $region55: #{encoder_forward.2} parent=5 // pred_region
      // Predicated region
      $region57: #{encoder_forward.2} parent=55 // pred_check
        %p456 = pneg %p55
      $region58: #{encoder_forward.2} parent=55 // pred_check_branch
        %458 = sbr.rel (%p456) target = $region60
      $region59: #{encoder_forward.2} parent=55 // pred_region
        %s459 = smul.u32 4, %s29
        %p460 = scmp.lt.s32.totalorder %s28, 1
        %s461 = scalar_select %p460, %s28, 1
        %p462 = scmp.lt.s32.totalorder %s459, 3
        %s463 = scalar_select %p462, %s459, 3
        %s464 = smul.addr %s461, 4
        %s465 = sadd.s32 %s463, %s464
        %s466 = smul.addr %s465, 8
        %s467 = scalar_lea.vmem %s0, %s466
        %s468 = smul.u32 4, %s29
      $region60: #{encoder_forward.2} parent=55 // pred_fallthru
        _
      // Predicated region
      $region61: #{encoder_forward.2} parent=55 // pred_check
        %p469 = pneg %p83
      $region62: #{encoder_forward.2} parent=55 // pred_check_branch
        %471 = sbr.rel (%p469) target = $region64
      $region63: #{encoder_forward.2} parent=55 // pred_region
        %s472 = smul.u32 4, %s29
        %p473 = scmp.lt.s32.totalorder %s28, 1
        %s474 = scalar_select %p473, %s28, 1
        %p475 = scmp.lt.s32.totalorder %s472, 3
        %s476 = scalar_select %p475, %s472, 3
        %s477 = smul.addr %s474, 4
        %s478 = sadd.s32 %s476, %s477
        %s479 = smul.addr %s478, 4
        %s480 = scalar_lea.vmem %s1, %s479
        %s481 = smul.u32 4, %s29
      $region64: #{encoder_forward.2} parent=55 // pred_fallthru
        _
      // Predicated region
      $region65: #{encoder_forward.2} parent=55 // pred_check
        %p482 = pneg %p111
      $region66: #{encoder_forward.2} parent=55 // pred_check_branch
        %484 = sbr.rel (%p482) target = $region68
      $region67: #{encoder_forward.2} parent=55 // pred_region
        %s485 = smul.u32 4, %s29
        %p486 = scmp.lt.s32.totalorder %s28, 1
        %s487 = scalar_select %p486, %s28, 1
        %p488 = scmp.lt.s32.totalorder %s485, 3
        %s489 = scalar_select %p488, %s485, 3
        %s490 = smul.addr %s487, 16
        %s491 = sadd.s32 %s489, %s490
        %s492 = smul.addr %s491, 4
        %s493 = scalar_lea.vmem %s2, %s492
        %s494 = smul.u32 4, %s29
      $region68: #{encoder_forward.2} parent=55 // pred_fallthru
        _
      // Predicated region
      $region69: #{encoder_forward.2} parent=55 // pred_check
        %p495 = pneg %p137
      $region70: #{encoder_forward.2} parent=55 // pred_check_branch
        %497 = sbr.rel (%p495) target = $region72
      $region71: #{encoder_forward.2} parent=55 // pred_region
        %p498 = scmp.lt.s32.totalorder %s28, 1
        %s499 = scalar_select %p498, %s28, 1
        %s500 = smul.addr %s499, 16
        %s501 = smul.addr %s500, 4
        %s502 = scalar_lea.vmem %s3, %s501
      $region72: #{encoder_forward.2} parent=55 // pred_fallthru
        _
      // Predicated region
      $region73: #{encoder_forward.2} parent=55 // pred_check
        %p503 = pneg %p163
      $region74: #{encoder_forward.2} parent=55 // pred_check_branch
        %505 = sbr.rel (%p503) target = $region76
      $region75: #{encoder_forward.2} parent=55 // pred_region
        %p506 = scmp.lt.s32.totalorder %s28, 1
        %s507 = scalar_select %p506, %s28, 1
        %s508 = smul.addr %s507, 16
        %s509 = smul.addr %s508, 4
        %s510 = scalar_lea.vmem %s4, %s509
      $region76: #{encoder_forward.2} parent=55 // pred_fallthru
        _
    $region56: #{encoder_forward.2} parent=5 // pred_fallthru
      _
    %p511 = scmp.le.s32.totalorder 1, %s21
    %p512 = scmp.lt.s32.totalorder %s21, 3
    %p513 = pnand %p511, %p512
    %p514 = pneg %p513
    // Predicated region
    $region77: #{encoder_forward.2} parent=5 // pred_check
      _
    $region78: #{encoder_forward.2} parent=5 // pred_check_branch
      %516 = sbr.rel (%p513) target = $region80
    $region79: #{encoder_forward.2} parent=5 // pred_region
      %s517 = ssub.s32 %s21, 1
      %s518 = smul.u32 4, %s31
      %p519 = scmp.lt.s32.totalorder %s30, 1
      %s520 = scalar_select %p519, %s30, 1
      %p521 = scmp.lt.s32.totalorder %s518, 3
      %s522 = scalar_select %p521, %s518, 3
      %s523 = smul.addr %s520, 4
      %s524 = sadd.s32 %s522, %s523
      %s525 = smul.addr %s524, 8
      %s526 = scalar_lea.vmem %s0, %s525
      %p527 = pneg %p61
      %p528 = pneg %p58
      %s529 = smul.u32 4, %s31
      %p530 = scmp.lt.s32.totalorder %s30, 1
      %s531 = scalar_select %p530, %s30, 1
      %p532 = scmp.lt.s32.totalorder %s529, 3
      %s533 = scalar_select %p532, %s529, 3
      %s534 = smul.addr %s531, 4
      %s535 = sadd.s32 %s533, %s534
      %s536 = smul.addr %s535, 4
      %s537 = scalar_lea.vmem %s1, %s536
      %p538 = pneg %p89
      %p539 = pneg %p86
      %s540 = smul.u32 4, %s31
      %p541 = scmp.lt.s32.totalorder %s30, 1
      %s542 = scalar_select %p541, %s30, 1
      %p543 = scmp.lt.s32.totalorder %s540, 3
      %s544 = scalar_select %p543, %s540, 3
      %s545 = smul.addr %s542, 16
      %s546 = sadd.s32 %s544, %s545
      %s547 = smul.addr %s546, 4
      %s548 = scalar_lea.vmem %s2, %s547
      %p549 = pneg %p117
      %p550 = pneg %p114
      %p551 = scmp.lt.s32.totalorder %s30, 1
      %s552 = scalar_select %p551, %s30, 1
      %s553 = smul.addr %s552, 16
      %s554 = smul.addr %s553, 4
      %s555 = scalar_lea.vmem %s3, %s554
      %p556 = pneg %p143
      %p557 = pneg %p140
      %p558 = scmp.lt.s32.totalorder %s30, 1
      %s559 = scalar_select %p558, %s30, 1
      %s560 = smul.addr %s559, 16
      %s561 = smul.addr %s560, 4
      %s562 = scalar_lea.vmem %s4, %s561
      %p563 = pneg %p169
      %p564 = pneg %p166
      %p565 = pneg %p190
      %p566 = pneg %p187
      %p567 = pneg %p211
      %p568 = pneg %p208
      %p569 = pneg %p232
      %p570 = pneg %p229
      %p571 = pneg %p253
      %p572 = pneg %p250
      %p573 = pneg %p274
      %p574 = pneg %p271
      %p575 = pneg %p295
      %p576 = pneg %p292
      %p577 = pneg %p316
      %p578 = pneg %p313
      %p579 = pneg %p337
      %p580 = pneg %p334
      %p581 = pneg %p358
      %p582 = pneg %p355
      %p583 = pneg %p379
      %p584 = pneg %p376
      %p585 = pneg %p407
      %p586 = pneg %p404
      %s587 = smul.u32 4, %s31
      %p588 = scmp.lt.s32.totalorder %s30, 1
      %s589 = scalar_select %p588, %s30, 1
      %p590 = scmp.lt.s32.totalorder %s587, 3
      %s591 = scalar_select %p590, %s587, 3
      %s592 = smul.addr %s589, 4
      %s593 = sadd.s32 %s591, %s592
      %s594 = smul.addr %s593, 4
      %s595 = scalar_lea.vmem %s15, %s594
      %s596 = smul.u32 4, %s31
      %p597 = scmp.lt.s32.totalorder %s30, 1
      %s598 = scalar_select %p597, %s30, 1
      %p599 = scmp.lt.s32.totalorder %s596, 3
      %s600 = scalar_select %p599, %s596, 3
      %s601 = smul.addr %s598, 4
      %s602 = sadd.s32 %s600, %s601
      %s603 = smul.addr %s602, 8
      %s604 = scalar_lea.vmem %s0, %s603
      %s605 = smul.u32 4, %s31
      %s606 = smul.u32 4, %s31
      %p607 = scmp.lt.s32.totalorder %s30, 1
      %s608 = scalar_select %p607, %s30, 1
      %p609 = scmp.lt.s32.totalorder %s606, 3
      %s610 = scalar_select %p609, %s606, 3
      %s611 = smul.addr %s608, 4
      %s612 = sadd.s32 %s610, %s611
      %s613 = smul.addr %s612, 4
      %s614 = scalar_lea.vmem %s1, %s613
      %s615 = smul.u32 4, %s31
      %s616 = smul.u32 4, %s31
      %p617 = scmp.lt.s32.totalorder %s30, 1
      %s618 = scalar_select %p617, %s30, 1
      %p619 = scmp.lt.s32.totalorder %s616, 3
      %s620 = scalar_select %p619, %s616, 3
      %s621 = smul.addr %s618, 16
      %s622 = sadd.s32 %s620, %s621
      %s623 = smul.addr %s622, 4
      %s624 = scalar_lea.vmem %s2, %s623
      %s625 = smul.u32 4, %s31
      %p626 = scmp.lt.s32.totalorder %s30, 1
      %s627 = scalar_select %p626, %s30, 1
      %s628 = smul.addr %s627, 16
      %s629 = smul.addr %s628, 4
      %s630 = scalar_lea.vmem %s3, %s629
      %p631 = scmp.lt.s32.totalorder %s30, 1
      %s632 = scalar_select %p631, %s30, 1
      %s633 = smul.addr %s632, 16
      %s634 = smul.addr %s633, 4
      %s635 = scalar_lea.vmem %s4, %s634
      %s636 = smul.u32 4, %s31
      %p637 = scmp.lt.s32.totalorder %s30, 1
      %s638 = scalar_select %p637, %s30, 1
      %p639 = scmp.lt.s32.totalorder %s636, 3
      %s640 = scalar_select %p639, %s636, 3
      %s641 = smul.addr %s638, 4
      %s642 = sadd.s32 %s640, %s641
      %s643 = smul.addr %s642, 4
      %s644 = scalar_lea.vmem %s15, %s643
      %s645 = smul.u32 4, %s31
      %v647 = vld [vmem:[%s624] sm:$0xf]
      %v648 = vld [vmem:[%s624 + $0x4] sm:$0xf]
      %v649 = vld [vmem:[%s624 + $0x8] sm:$0xf]
      %v650 = vld [vmem:[%s624 + $0xc] sm:$0xf]
      %v651 = vld [vmem:[%s624 + $0x10] sm:$0xf]
      %v652 = vld [vmem:[%s624 + $0x14] sm:$0xf]
      %v653 = vld [vmem:[%s624 + $0x18] sm:$0xf]
      %v654 = vld [vmem:[%s624 + $0x1c] sm:$0xf]
      %v655 = vld [vmem:[%s624 + $0x20] sm:$0xf]
      %v656 = vld [vmem:[%s624 + $0x24] sm:$0xf]
      %v657 = vld [vmem:[%s624 + $0x28] sm:$0xf]
      %v658 = vld [vmem:[%s624 + $0x2c] sm:$0xf]
      %v659 = vld [vmem:[%s624 + $0x30] sm:$0xf]
      %v660 = vld [vmem:[%s624 + $0x34] sm:$0xf]
      %v661 = vld [vmem:[%s624 + $0x38] sm:$0xf]
      %v662 = vld [vmem:[%s624 + $0x3c] sm:$0xf]
      %v663 = vld [vmem:[%s630] sm:$0xf]
      %v664 = vld [vmem:[%s630 + $0x4] sm:$0xf]
      %v665 = vld [vmem:[%s630 + $0x8] sm:$0xf]
      %v666 = vld [vmem:[%s630 + $0xc] sm:$0xf]
      %v667 = vld [vmem:[%s630 + $0x10] sm:$0xf]
      %v668 = vld [vmem:[%s630 + $0x14] sm:$0xf]
      %v669 = vld [vmem:[%s630 + $0x18] sm:$0xf]
      %v670 = vld [vmem:[%s630 + $0x1c] sm:$0xf]
      %v671 = vld [vmem:[%s630 + $0x20] sm:$0xf]
      %v672 = vld [vmem:[%s630 + $0x24] sm:$0xf]
      %v673 = vld [vmem:[%s630 + $0x28] sm:$0xf]
      %v674 = vld [vmem:[%s630 + $0x2c] sm:$0xf]
      %v675 = vld [vmem:[%s630 + $0x30] sm:$0xf]
      %v676 = vld [vmem:[%s630 + $0x34] sm:$0xf]
      %v677 = vld [vmem:[%s630 + $0x38] sm:$0xf]
      %v678 = vld [vmem:[%s630 + $0x3c] sm:$0xf]
      %v679 = vld [vmem:[%s635] sm:$0xf]
      %v680 = vld [vmem:[%s635 + $0x4] sm:$0xf]
      %v681 = vld [vmem:[%s635 + $0x8] sm:$0xf]
      %v682 = vld [vmem:[%s635 + $0xc] sm:$0xf]
      %v683 = vld [vmem:[%s635 + $0x10] sm:$0xf]
      %v684 = vld [vmem:[%s635 + $0x14] sm:$0xf]
      %v685 = vld [vmem:[%s635 + $0x18] sm:$0xf]
      %v686 = vld [vmem:[%s635 + $0x1c] sm:$0xf]
      %v687 = vld [vmem:[%s635 + $0x20] sm:$0xf]
      %v688 = vld [vmem:[%s635 + $0x24] sm:$0xf]
      %v689 = vld [vmem:[%s635 + $0x28] sm:$0xf]
      %v690 = vld [vmem:[%s635 + $0x2c] sm:$0xf]
      %v691 = vld [vmem:[%s635 + $0x30] sm:$0xf]
      %v692 = vld [vmem:[%s635 + $0x34] sm:$0xf]
      %v693 = vld [vmem:[%s635 + $0x38] sm:$0xf]
      %v694 = vld [vmem:[%s635 + $0x3c] sm:$0xf]
      %v695 = vld [vmem:[%s614] sm:$0xf]
      %v696 = vld [vmem:[%s614 + $0x4] sm:$0xf]
      %v697 = vld [vmem:[%s614 + $0x8] sm:$0xf]
      %v698 = vld [vmem:[%s614 + $0xc] sm:$0xf]
      %v699 = vunpack.c.l.bf16 %v695
      %v700 = vunpack.c.l.bf16 %v696
      %v701 = vunpack.c.l.bf16 %v697
      %v702 = vunpack.c.l.bf16 %v698
      %v707 = vunpack.c.l.b16 %v647
      %v708 = vunpack.c.l.b16 %v648
      %v709 = vunpack.c.l.b16 %v649
      %v710 = vunpack.c.l.b16 %v650
      %v711 = vpack.c.b16 %v708, %v707
      %v712 = vpack.c.b16 %v710, %v709
      %v717 = vunpack.c.l.b16 %v663
      %v718 = vunpack.c.l.b16 %v664
      %v719 = vunpack.c.l.b16 %v665
      %v720 = vunpack.c.l.b16 %v666
      %v721 = vpack.c.b16 %v718, %v717
      %v722 = vpack.c.b16 %v720, %v719
      %vm723 = vcmask 261120
      %v725 = vsel %vm723, %v711, 0
      %v728 = vsel %vm723, %v712, 0
      %v731 = vsel %vm723, %v721, 0
      %v734 = vsel %vm723, %v722, 0
      %736 = vmatpush.bf16.xpose.msra.mxu0 0
      %737 = vmatpush.bf16.xpose.msra.mxu0 0
      %738 = vmatpush.bf16.xpose.msra.mxu0 0
      %739 = vmatpush.bf16.xpose.msra.mxu0 0
      %740 = vmatpush.bf16.xpose.msra.mxu0 0
      %741 = vmatpush.bf16.xpose.msra.mxu0 0
      %742 = vmatpush.bf16.xpose.msra.mxu0 %v734
      %743 = vmatpush.bf16.xpose.msra.mxu0 %v731
      %744 = vmatmul.bf16.gmra.mxu0 %v725
      %v745 = vpop.f32.mrf.mxu0
      %v746 = vadd.f32 %v699, %v745
      %v747 = vpop.f32.mrf.mxu0
      %v748 = vadd.f32 %v700, %v747
      %749 = vmatmul.bf16.gmra.mxu0 %v728
      %v750 = vpop.f32.mrf.mxu0
      %v751 = vadd.f32 %v701, %v750
      %v752 = vpop.f32.mrf.mxu0
      %v753 = vadd.f32 %v702, %v752
      %754 = vdwg.mxu0
      %v759 = vunpack.c.l.b16 %v651
      %v760 = vunpack.c.l.b16 %v652
      %v761 = vunpack.c.l.b16 %v653
      %v762 = vunpack.c.l.b16 %v654
      %v763 = vpack.c.b16 %v760, %v759
      %v764 = vpack.c.b16 %v762, %v761
      %v769 = vunpack.c.l.b16 %v667
      %v770 = vunpack.c.l.b16 %v668
      %v771 = vunpack.c.l.b16 %v669
      %v772 = vunpack.c.l.b16 %v670
      %v773 = vpack.c.b16 %v770, %v769
      %v774 = vpack.c.b16 %v772, %v771
      %v776 = vsel %vm723, %v763, 0
      %v779 = vsel %vm723, %v764, 0
      %v782 = vsel %vm723, %v773, 0
      %v785 = vsel %vm723, %v774, 0
      %787 = vmatpush.bf16.xpose.msra.mxu0 0
      %788 = vmatpush.bf16.xpose.msra.mxu0 0
      %789 = vmatpush.bf16.xpose.msra.mxu0 0
      %790 = vmatpush.bf16.xpose.msra.mxu0 0
      %791 = vmatpush.bf16.xpose.msra.mxu0 0
      %792 = vmatpush.bf16.xpose.msra.mxu0 0
      %793 = vmatpush.bf16.xpose.msra.mxu0 %v785
      %794 = vmatpush.bf16.xpose.msra.mxu0 %v782
      %795 = vmatmul.bf16.gmra.mxu0 %v776
      %v796 = vpop.f32.mrf.mxu0
      %v797 = vadd.f32 %v699, %v796
      %v798 = vpop.f32.mrf.mxu0
      %v799 = vadd.f32 %v700, %v798
      %800 = vmatmul.bf16.gmra.mxu0 %v779
      %v801 = vpop.f32.mrf.mxu0
      %v802 = vadd.f32 %v701, %v801
      %v803 = vpop.f32.mrf.mxu0
      %v804 = vadd.f32 %v702, %v803
      %805 = vdwg.mxu0
      %v810 = vunpack.c.l.b16 %v655
      %v811 = vunpack.c.l.b16 %v656
      %v812 = vunpack.c.l.b16 %v657
      %v813 = vunpack.c.l.b16 %v658
      %v814 = vpack.c.b16 %v811, %v810
      %v815 = vpack.c.b16 %v813, %v812
      %v820 = vunpack.c.l.b16 %v671
      %v821 = vunpack.c.l.b16 %v672
      %v822 = vunpack.c.l.b16 %v673
      %v823 = vunpack.c.l.b16 %v674
      %v824 = vpack.c.b16 %v821, %v820
      %v825 = vpack.c.b16 %v823, %v822
      %v827 = vsel %vm723, %v814, 0
      %v830 = vsel %vm723, %v815, 0
      %v833 = vsel %vm723, %v824, 0
      %v836 = vsel %vm723, %v825, 0
      %838 = vmatpush.bf16.xpose.msra.mxu0 0
      %839 = vmatpush.bf16.xpose.msra.mxu0 0
      %840 = vmatpush.bf16.xpose.msra.mxu0 0
      %841 = vmatpush.bf16.xpose.msra.mxu0 0
      %842 = vmatpush.bf16.xpose.msra.mxu0 0
      %843 = vmatpush.bf16.xpose.msra.mxu0 0
      %844 = vmatpush.bf16.xpose.msra.mxu0 %v836
      %845 = vmatpush.bf16.xpose.msra.mxu0 %v833
      %846 = vmatmul.bf16.gmra.mxu0 %v827
      %v847 = vpop.f32.mrf.mxu0
      %v848 = vadd.f32 %v699, %v847
      %v849 = vpop.f32.mrf.mxu0
      %v850 = vadd.f32 %v700, %v849
      %851 = vmatmul.bf16.gmra.mxu0 %v830
      %v852 = vpop.f32.mrf.mxu0
      %v853 = vadd.f32 %v701, %v852
      %v854 = vpop.f32.mrf.mxu0
      %v855 = vadd.f32 %v702, %v854
      %856 = vdwg.mxu0
      %v861 = vunpack.c.l.b16 %v659
      %v862 = vunpack.c.l.b16 %v660
      %v863 = vunpack.c.l.b16 %v661
      %v864 = vunpack.c.l.b16 %v662
      %v865 = vpack.c.b16 %v862, %v861
      %v866 = vpack.c.b16 %v864, %v863
      %v871 = vunpack.c.l.b16 %v675
      %v872 = vunpack.c.l.b16 %v676
      %v873 = vunpack.c.l.b16 %v677
      %v874 = vunpack.c.l.b16 %v678
      %v875 = vpack.c.b16 %v872, %v871
      %v876 = vpack.c.b16 %v874, %v873
      %v878 = vsel %vm723, %v865, 0
      %v881 = vsel %vm723, %v866, 0
      %v884 = vsel %vm723, %v875, 0
      %v887 = vsel %vm723, %v876, 0
      %889 = vmatpush.bf16.xpose.msra.mxu0 0
      %890 = vmatpush.bf16.xpose.msra.mxu0 0
      %891 = vmatpush.bf16.xpose.msra.mxu0 0
      %892 = vmatpush.bf16.xpose.msra.mxu0 0
      %893 = vmatpush.bf16.xpose.msra.mxu0 0
      %894 = vmatpush.bf16.xpose.msra.mxu0 0
      %895 = vmatpush.bf16.xpose.msra.mxu0 %v887
      %896 = vmatpush.bf16.xpose.msra.mxu0 %v884
      %897 = vmatmul.bf16.gmra.mxu0 %v878
      %v898 = vpop.f32.mrf.mxu0
      %v899 = vadd.f32 %v699, %v898
      %v900 = vpop.f32.mrf.mxu0
      %v901 = vadd.f32 %v700, %v900
      %902 = vmatmul.bf16.gmra.mxu0 %v881
      %v903 = vpop.f32.mrf.mxu0
      %v904 = vadd.f32 %v701, %v903
      %v905 = vpop.f32.mrf.mxu0
      %v906 = vadd.f32 %v702, %v905
      %907 = vdwg.mxu0
      %v908 = vsel %vm723, %v746, -inf
      %909 = vmax.xlane.f32.xlu0 %v908
      %v910 = vpop.xlane.xlu0 %909
      %v911 = vsel %vm723, %v748, -inf
      %912 = vmax.xlane.f32.xlu0 %v911
      %v913 = vpop.xlane.xlu0 %912
      %v914 = vsel %vm723, %v751, -inf
      %915 = vmax.xlane.f32.xlu0 %v914
      %v916 = vpop.xlane.xlu0 %915
      %v917 = vsel %vm723, %v753, -inf
      %918 = vmax.xlane.f32.xlu0 %v917
      %v919 = vpop.xlane.xlu0 %918
      %v920 = vsel %vm723, %v797, -inf
      %921 = vmax.xlane.f32.xlu0 %v920
      %v922 = vpop.xlane.xlu0 %921
      %v923 = vsel %vm723, %v799, -inf
      %924 = vmax.xlane.f32.xlu0 %v923
      %v925 = vpop.xlane.xlu0 %924
      %v926 = vsel %vm723, %v802, -inf
      %927 = vmax.xlane.f32.xlu0 %v926
      %v928 = vpop.xlane.xlu0 %927
      %v929 = vsel %vm723, %v804, -inf
      %930 = vmax.xlane.f32.xlu0 %v929
      %v931 = vpop.xlane.xlu0 %930
      %v932 = vsel %vm723, %v848, -inf
      %933 = vmax.xlane.f32.xlu0 %v932
      %v934 = vpop.xlane.xlu0 %933
      %v935 = vsel %vm723, %v850, -inf
      %936 = vmax.xlane.f32.xlu0 %v935
      %v937 = vpop.xlane.xlu0 %936
      %v938 = vsel %vm723, %v853, -inf
      %939 = vmax.xlane.f32.xlu0 %v938
      %v940 = vpop.xlane.xlu0 %939
      %v941 = vsel %vm723, %v855, -inf
      %942 = vmax.xlane.f32.xlu0 %v941
      %v943 = vpop.xlane.xlu0 %942
      %v944 = vsel %vm723, %v899, -inf
      %945 = vmax.xlane.f32.xlu0 %v944
      %v946 = vpop.xlane.xlu0 %945
      %v947 = vsel %vm723, %v901, -inf
      %948 = vmax.xlane.f32.xlu0 %v947
      %v949 = vpop.xlane.xlu0 %948
      %v950 = vsel %vm723, %v904, -inf
      %951 = vmax.xlane.f32.xlu0 %v950
      %v952 = vpop.xlane.xlu0 %951
      %v953 = vsel %vm723, %v906, -inf
      %954 = vmax.xlane.f32.xlu0 %v953
      %v955 = vpop.xlane.xlu0 %954
      %v956 = vsub.f32 %v746, %v910
      %v957 = vsub.f32 %v748, %v913
      %v958 = vsub.f32 %v751, %v916
      %v959 = vsub.f32 %v753, %v919
      %v960 = vsub.f32 %v797, %v922
      %v961 = vsub.f32 %v799, %v925
      %v962 = vsub.f32 %v802, %v928
      %v963 = vsub.f32 %v804, %v931
      %v964 = vsub.f32 %v848, %v934
      %v965 = vsub.f32 %v850, %v937
      %v966 = vsub.f32 %v853, %v940
      %v967 = vsub.f32 %v855, %v943
      %v968 = vsub.f32 %v899, %v946
      %v969 = vsub.f32 %v901, %v949
      %v970 = vsub.f32 %v904, %v952
      %v971 = vsub.f32 %v906, %v955
      %v972 = vmul.f32 %v956, 1.442695
      %v973 = vpow.pop %v972
      %v974 = vmul.f32 %v957, 1.442695
      %v975 = vpow.pop %v974
      %v976 = vmul.f32 %v958, 1.442695
      %v977 = vpow.pop %v976
      %v978 = vmul.f32 %v959, 1.442695
      %v979 = vpow.pop %v978
      %v980 = vmul.f32 %v960, 1.442695
      %v981 = vpow.pop %v980
      %v982 = vmul.f32 %v961, 1.442695
      %v983 = vpow.pop %v982
      %v984 = vmul.f32 %v962, 1.442695
      %v985 = vpow.pop %v984
      %v986 = vmul.f32 %v963, 1.442695
      %v987 = vpow.pop %v986
      %v988 = vmul.f32 %v964, 1.442695
      %v989 = vpow.pop %v988
      %v990 = vmul.f32 %v965, 1.442695
      %v991 = vpow.pop %v990
      %v992 = vmul.f32 %v966, 1.442695
      %v993 = vpow.pop %v992
      %v994 = vmul.f32 %v967, 1.442695
      %v995 = vpow.pop %v994
      %v996 = vmul.f32 %v968, 1.442695
      %v997 = vpow.pop %v996
      %v998 = vmul.f32 %v969, 1.442695
      %v999 = vpow.pop %v998
      %v1000 = vmul.f32 %v970, 1.442695
      %v1001 = vpow.pop %v1000
      %v1002 = vmul.f32 %v971, 1.442695
      %v1003 = vpow.pop %v1002
      %v1004 = vsel %vm723, %v973, 0.0
      %1005 = vadd.xlane.f32.xlu0 %v1004
      %v1006 = vpop.xlane.xlu0 %1005
      %v1007 = vsel %vm723, %v975, 0.0
      %1008 = vadd.xlane.f32.xlu0 %v1007
      %v1009 = vpop.xlane.xlu0 %1008
      %v1010 = vsel %vm723, %v977, 0.0
      %1011 = vadd.xlane.f32.xlu0 %v1010
      %v1012 = vpop.xlane.xlu0 %1011
      %v1013 = vsel %vm723, %v979, 0.0
      %1014 = vadd.xlane.f32.xlu0 %v1013
      %v1015 = vpop.xlane.xlu0 %1014
      %v1016 = vsel %vm723, %v981, 0.0
      %1017 = vadd.xlane.f32.xlu0 %v1016
      %v1018 = vpop.xlane.xlu0 %1017
      %v1019 = vsel %vm723, %v983, 0.0
      %1020 = vadd.xlane.f32.xlu0 %v1019
      %v1021 = vpop.xlane.xlu0 %1020
      %v1022 = vsel %vm723, %v985, 0.0
      %1023 = vadd.xlane.f32.xlu0 %v1022
      %v1024 = vpop.xlane.xlu0 %1023
      %v1025 = vsel %vm723, %v987, 0.0
      %1026 = vadd.xlane.f32.xlu0 %v1025
      %v1027 = vpop.xlane.xlu0 %1026
      %v1028 = vsel %vm723, %v989, 0.0
      %1029 = vadd.xlane.f32.xlu0 %v1028
      %v1030 = vpop.xlane.xlu0 %1029
      %v1031 = vsel %vm723, %v991, 0.0
      %1032 = vadd.xlane.f32.xlu0 %v1031
      %v1033 = vpop.xlane.xlu0 %1032
      %v1034 = vsel %vm723, %v993, 0.0
      %1035 = vadd.xlane.f32.xlu0 %v1034
      %v1036 = vpop.xlane.xlu0 %1035
      %v1037 = vsel %vm723, %v995, 0.0
      %1038 = vadd.xlane.f32.xlu0 %v1037
      %v1039 = vpop.xlane.xlu0 %1038
      %v1040 = vsel %vm723, %v997, 0.0
      %1041 = vadd.xlane.f32.xlu0 %v1040
      %v1042 = vpop.xlane.xlu0 %1041
      %v1043 = vsel %vm723, %v999, 0.0
      %1044 = vadd.xlane.f32.xlu0 %v1043
      %v1045 = vpop.xlane.xlu0 %1044
      %v1046 = vsel %vm723, %v1001, 0.0
      %1047 = vadd.xlane.f32.xlu0 %v1046
      %v1048 = vpop.xlane.xlu0 %1047
      %v1049 = vsel %vm723, %v1003, 0.0
      %1050 = vadd.xlane.f32.xlu0 %v1049
      %v1051 = vpop.xlane.xlu0 %1050
      %v1052 = vrcp.pop %v1006
      %v1053 = vrcp.pop %v1009
      %v1054 = vrcp.pop %v1012
      %v1055 = vrcp.pop %v1015
      %v1056 = vrcp.pop %v1018
      %v1057 = vrcp.pop %v1021
      %v1058 = vrcp.pop %v1024
      %v1059 = vrcp.pop %v1027
      %v1060 = vrcp.pop %v1030
      %v1061 = vrcp.pop %v1033
      %v1062 = vrcp.pop %v1036
      %v1063 = vrcp.pop %v1039
      %v1064 = vrcp.pop %v1042
      %v1065 = vrcp.pop %v1045
      %v1066 = vrcp.pop %v1048
      %v1067 = vrcp.pop %v1051
      %v1068 = vmul.f32 %v973, %v1052
      %v1069 = vmul.f32 %v975, %v1053
      %v1070 = vmul.f32 %v977, %v1054
      %v1071 = vmul.f32 %v979, %v1055
      %v1072 = vmul.f32 %v981, %v1056
      %v1073 = vmul.f32 %v983, %v1057
      %v1074 = vmul.f32 %v985, %v1058
      %v1075 = vmul.f32 %v987, %v1059
      %v1076 = vmul.f32 %v989, %v1060
      %v1077 = vmul.f32 %v991, %v1061
      %v1078 = vmul.f32 %v993, %v1062
      %v1079 = vmul.f32 %v995, %v1063
      %v1080 = vmul.f32 %v997, %v1064
      %v1081 = vmul.f32 %v999, %v1065
      %v1082 = vmul.f32 %v1001, %v1066
      %v1083 = vmul.f32 %v1003, %v1067
      %v1084 = vpack.c.bf16 %v1068, %v1068
      %v1085 = vpack.c.bf16 %v1069, %v1069
      %v1086 = vpack.c.bf16 %v1070, %v1070
      %v1087 = vpack.c.bf16 %v1071, %v1071
      %v1088 = vpack.c.bf16 %v1072, %v1072
      %v1089 = vpack.c.bf16 %v1073, %v1073
      %v1090 = vpack.c.bf16 %v1074, %v1074
      %v1091 = vpack.c.bf16 %v1075, %v1075
      %v1092 = vpack.c.bf16 %v1076, %v1076
      %v1093 = vpack.c.bf16 %v1077, %v1077
      %v1094 = vpack.c.bf16 %v1078, %v1078
      %v1095 = vpack.c.bf16 %v1079, %v1079
      %v1096 = vpack.c.bf16 %v1080, %v1080
      %v1097 = vpack.c.bf16 %v1081, %v1081
      %v1098 = vpack.c.bf16 %v1082, %v1082
      %v1099 = vpack.c.bf16 %v1083, %v1083
      %v1104 = vunpack.c.l.b16 %v1084
      %v1105 = vunpack.c.l.b16 %v1085
      %v1106 = vunpack.c.l.b16 %v1086
      %v1107 = vunpack.c.l.b16 %v1087
      %v1108 = vpack.c.b16 %v1105, %v1104
      %v1109 = vpack.c.b16 %v1107, %v1106
      %v1114 = vunpack.c.l.b16 %v679
      %v1115 = vunpack.c.l.b16 %v680
      %v1116 = vunpack.c.l.b16 %v681
      %v1117 = vunpack.c.l.b16 %v682
      %v1118 = vpack.c.b16 %v1115, %v1114
      %v1119 = vpack.c.b16 %v1117, %v1116
      %v1123 = vsel %vm723, %v1108, 0
      %v1126 = vsel %vm723, %v1109, 0
      %1128 = vmatpush.bf16.msra.mxu0 0
      %1129 = vmatpush.bf16.msra.mxu0 0
      %1130 = vmatpush.bf16.msra.mxu0 0
      %1131 = vmatpush.bf16.msra.mxu0 0
      %1132 = vmatpush.bf16.msra.mxu0 0
      %1133 = vmatpush.bf16.msra.mxu0 0
      %1134 = vmatpush.bf16.msra.mxu0 %v1119
      %1135 = vmatpush.bf16.msra.mxu0 %v1118
      %1136 = vmatmul.bf16.gmra.mxu0 %v1123
      %v1137 = vpop.f32.mrf.mxu0
      %v1138 = vadd.f32 0.0, %v1137
      %v1139 = vpop.f32.mrf.mxu0
      %v1140 = vadd.f32 0.0, %v1139
      %1141 = vmatmul.bf16.gmra.mxu0 %v1126
      %v1142 = vpop.f32.mrf.mxu0
      %v1143 = vadd.f32 0.0, %v1142
      %v1144 = vpop.f32.mrf.mxu0
      %v1145 = vadd.f32 0.0, %v1144
      %1146 = vdwg.mxu0
      %v1151 = vunpack.c.l.b16 %v1088
      %v1152 = vunpack.c.l.b16 %v1089
      %v1153 = vunpack.c.l.b16 %v1090
      %v1154 = vunpack.c.l.b16 %v1091
      %v1155 = vpack.c.b16 %v1152, %v1151
      %v1156 = vpack.c.b16 %v1154, %v1153
      %v1161 = vunpack.c.l.b16 %v683
      %v1162 = vunpack.c.l.b16 %v684
      %v1163 = vunpack.c.l.b16 %v685
      %v1164 = vunpack.c.l.b16 %v686
      %v1165 = vpack.c.b16 %v1162, %v1161
      %v1166 = vpack.c.b16 %v1164, %v1163
      %v1170 = vsel %vm723, %v1155, 0
      %v1173 = vsel %vm723, %v1156, 0
      %1175 = vmatpush.bf16.msra.mxu0 0
      %1176 = vmatpush.bf16.msra.mxu0 0
      %1177 = vmatpush.bf16.msra.mxu0 0
      %1178 = vmatpush.bf16.msra.mxu0 0
      %1179 = vmatpush.bf16.msra.mxu0 0
      %1180 = vmatpush.bf16.msra.mxu0 0
      %1181 = vmatpush.bf16.msra.mxu0 %v1166
      %1182 = vmatpush.bf16.msra.mxu0 %v1165
      %1183 = vmatmul.bf16.gmra.mxu0 %v1170
      %v1184 = vpop.f32.mrf.mxu0
      %v1185 = vadd.f32 0.0, %v1184
      %v1186 = vpop.f32.mrf.mxu0
      %v1187 = vadd.f32 0.0, %v1186
      %1188 = vmatmul.bf16.gmra.mxu0 %v1173
      %v1189 = vpop.f32.mrf.mxu0
      %v1190 = vadd.f32 0.0, %v1189
      %v1191 = vpop.f32.mrf.mxu0
      %v1192 = vadd.f32 0.0, %v1191
      %1193 = vdwg.mxu0
      %v1198 = vunpack.c.l.b16 %v1092
      %v1199 = vunpack.c.l.b16 %v1093
      %v1200 = vunpack.c.l.b16 %v1094
      %v1201 = vunpack.c.l.b16 %v1095
      %v1202 = vpack.c.b16 %v1199, %v1198
      %v1203 = vpack.c.b16 %v1201, %v1200
      %v1208 = vunpack.c.l.b16 %v687
      %v1209 = vunpack.c.l.b16 %v688
      %v1210 = vunpack.c.l.b16 %v689
      %v1211 = vunpack.c.l.b16 %v690
      %v1212 = vpack.c.b16 %v1209, %v1208
      %v1213 = vpack.c.b16 %v1211, %v1210
      %v1217 = vsel %vm723, %v1202, 0
      %v1220 = vsel %vm723, %v1203, 0
      %1222 = vmatpush.bf16.msra.mxu0 0
      %1223 = vmatpush.bf16.msra.mxu0 0
      %1224 = vmatpush.bf16.msra.mxu0 0
      %1225 = vmatpush.bf16.msra.mxu0 0
      %1226 = vmatpush.bf16.msra.mxu0 0
      %1227 = vmatpush.bf16.msra.mxu0 0
      %1228 = vmatpush.bf16.msra.mxu0 %v1213
      %1229 = vmatpush.bf16.msra.mxu0 %v1212
      %1230 = vmatmul.bf16.gmra.mxu0 %v1217
      %v1231 = vpop.f32.mrf.mxu0
      %v1232 = vadd.f32 0.0, %v1231
      %v1233 = vpop.f32.mrf.mxu0
      %v1234 = vadd.f32 0.0, %v1233
      %1235 = vmatmul.bf16.gmra.mxu0 %v1220
      %v1236 = vpop.f32.mrf.mxu0
      %v1237 = vadd.f32 0.0, %v1236
      %v1238 = vpop.f32.mrf.mxu0
      %v1239 = vadd.f32 0.0, %v1238
      %1240 = vdwg.mxu0
      %v1245 = vunpack.c.l.b16 %v1096
      %v1246 = vunpack.c.l.b16 %v1097
      %v1247 = vunpack.c.l.b16 %v1098
      %v1248 = vunpack.c.l.b16 %v1099
      %v1249 = vpack.c.b16 %v1246, %v1245
      %v1250 = vpack.c.b16 %v1248, %v1247
      %v1255 = vunpack.c.l.b16 %v691
      %v1256 = vunpack.c.l.b16 %v692
      %v1257 = vunpack.c.l.b16 %v693
      %v1258 = vunpack.c.l.b16 %v694
      %v1259 = vpack.c.b16 %v1256, %v1255
      %v1260 = vpack.c.b16 %v1258, %v1257
      %v1264 = vsel %vm723, %v1249, 0
      %v1267 = vsel %vm723, %v1250, 0
      %1269 = vmatpush.bf16.msra.mxu0 0
      %1270 = vmatpush.bf16.msra.mxu0 0
      %1271 = vmatpush.bf16.msra.mxu0 0
      %1272 = vmatpush.bf16.msra.mxu0 0
      %1273 = vmatpush.bf16.msra.mxu0 0
      %1274 = vmatpush.bf16.msra.mxu0 0
      %1275 = vmatpush.bf16.msra.mxu0 %v1260
      %1276 = vmatpush.bf16.msra.mxu0 %v1259
      %1277 = vmatmul.bf16.gmra.mxu0 %v1264
      %v1278 = vpop.f32.mrf.mxu0
      %v1279 = vadd.f32 0.0, %v1278
      %v1280 = vpop.f32.mrf.mxu0
      %v1281 = vadd.f32 0.0, %v1280
      %1282 = vmatmul.bf16.gmra.mxu0 %v1267
      %v1283 = vpop.f32.mrf.mxu0
      %v1284 = vadd.f32 0.0, %v1283
      %v1285 = vpop.f32.mrf.mxu0
      %v1286 = vadd.f32 0.0, %v1285
      %1287 = vdwg.mxu0
      %v1288 = vpack.c.bf16 %v1138, %v1138
      %v1289 = vpack.c.bf16 %v1140, %v1140
      %v1290 = vpack.c.bf16 %v1143, %v1143
      %v1291 = vpack.c.bf16 %v1145, %v1145
      %v1292 = vpack.c.bf16 %v1185, %v1185
      %v1293 = vpack.c.bf16 %v1187, %v1187
      %v1294 = vpack.c.bf16 %v1190, %v1190
      %v1295 = vpack.c.bf16 %v1192, %v1192
      %v1296 = vpack.c.bf16 %v1232, %v1232
      %v1297 = vpack.c.bf16 %v1234, %v1234
      %v1298 = vpack.c.bf16 %v1237, %v1237
      %v1299 = vpack.c.bf16 %v1239, %v1239
      %v1300 = vpack.c.bf16 %v1279, %v1279
      %v1301 = vpack.c.bf16 %v1281, %v1281
      %v1302 = vpack.c.bf16 %v1284, %v1284
      %v1303 = vpack.c.bf16 %v1286, %v1286
      %v1304 = vld [vmem:[%s5] sm:$0xf]
      %v1305 = vld [vmem:[%s5 + $0x4] sm:$0xf]
      %v1306 = vld [vmem:[%s5 + $0x8] sm:$0xf]
      %v1307 = vld [vmem:[%s5 + $0xc] sm:$0xf]
      %v1308 = vld [vmem:[%s5 + $0x10] sm:$0xf]
      %v1309 = vld [vmem:[%s5 + $0x14] sm:$0xf]
      %v1310 = vld [vmem:[%s5 + $0x18] sm:$0xf]
      %v1311 = vld [vmem:[%s5 + $0x1c] sm:$0xf]
      %v1312 = vld [vmem:[%s5 + $0x20] sm:$0xf]
      %v1313 = vld [vmem:[%s5 + $0x24] sm:$0xf]
      %v1314 = vld [vmem:[%s5 + $0x28] sm:$0xf]
      %v1315 = vld [vmem:[%s5 + $0x2c] sm:$0xf]
      %v1316 = vld [vmem:[%s5 + $0x30] sm:$0xf]
      %v1317 = vld [vmem:[%s5 + $0x34] sm:$0xf]
      %v1318 = vld [vmem:[%s5 + $0x38] sm:$0xf]
      %v1319 = vld [vmem:[%s5 + $0x3c] sm:$0xf]
      %v1324 = vunpack.c.l.b16 %v1288
      %v1325 = vunpack.c.l.b16 %v1289
      %v1326 = vunpack.c.l.b16 %v1290
      %v1327 = vunpack.c.l.b16 %v1291
      %v1328 = vpack.c.b16 %v1325, %v1324
      %v1329 = vpack.c.b16 %v1327, %v1326
      %v1334 = vunpack.c.l.b16 %v1304
      %v1335 = vunpack.c.l.b16 %v1305
      %v1336 = vunpack.c.l.b16 %v1306
      %v1337 = vunpack.c.l.b16 %v1307
      %v1338 = vpack.c.b16 %v1335, %v1334
      %v1339 = vpack.c.b16 %v1337, %v1336
      %v1343 = vsel %vm723, %v1328, 0
      %v1346 = vsel %vm723, %v1329, 0
      %1348 = vmatpush.bf16.msra.mxu0 0
      %1349 = vmatpush.bf16.msra.mxu0 0
      %1350 = vmatpush.bf16.msra.mxu0 0
      %1351 = vmatpush.bf16.msra.mxu0 0
      %1352 = vmatpush.bf16.msra.mxu0 0
      %1353 = vmatpush.bf16.msra.mxu0 0
      %1354 = vmatpush.bf16.msra.mxu0 %v1339
      %1355 = vmatpush.bf16.msra.mxu0 %v1338
      %1356 = vmatmul.bf16.gmra.mxu0 %v1343
      %v1357 = vpop.f32.mrf.mxu0
      %v1358 = vadd.f32 0.0, %v1357
      %v1359 = vpop.f32.mrf.mxu0
      %v1360 = vadd.f32 0.0, %v1359
      %1361 = vmatmul.bf16.gmra.mxu0 %v1346
      %v1362 = vpop.f32.mrf.mxu0
      %v1363 = vadd.f32 0.0, %v1362
      %v1364 = vpop.f32.mrf.mxu0
      %v1365 = vadd.f32 0.0, %v1364
      %1366 = vdwg.mxu0
      %v1371 = vunpack.c.l.b16 %v1292
      %v1372 = vunpack.c.l.b16 %v1293
      %v1373 = vunpack.c.l.b16 %v1294
      %v1374 = vunpack.c.l.b16 %v1295
      %v1375 = vpack.c.b16 %v1372, %v1371
      %v1376 = vpack.c.b16 %v1374, %v1373
      %v1381 = vunpack.c.l.b16 %v1308
      %v1382 = vunpack.c.l.b16 %v1309
      %v1383 = vunpack.c.l.b16 %v1310
      %v1384 = vunpack.c.l.b16 %v1311
      %v1385 = vpack.c.b16 %v1382, %v1381
      %v1386 = vpack.c.b16 %v1384, %v1383
      %v1390 = vsel %vm723, %v1375, 0
      %v1393 = vsel %vm723, %v1376, 0
      %1395 = vmatpush.bf16.msra.mxu0 0
      %1396 = vmatpush.bf16.msra.mxu0 0
      %1397 = vmatpush.bf16.msra.mxu0 0
      %1398 = vmatpush.bf16.msra.mxu0 0
      %1399 = vmatpush.bf16.msra.mxu0 0
      %1400 = vmatpush.bf16.msra.mxu0 0
      %1401 = vmatpush.bf16.msra.mxu0 %v1386
      %1402 = vmatpush.bf16.msra.mxu0 %v1385
      %1403 = vmatmul.bf16.gmra.mxu0 %v1390
      %v1404 = vpop.f32.mrf.mxu0
      %v1405 = vadd.f32 0.0, %v1404
      %v1406 = vpop.f32.mrf.mxu0
      %v1407 = vadd.f32 0.0, %v1406
      %1408 = vmatmul.bf16.gmra.mxu0 %v1393
      %v1409 = vpop.f32.mrf.mxu0
      %v1410 = vadd.f32 0.0, %v1409
      %v1411 = vpop.f32.mrf.mxu0
      %v1412 = vadd.f32 0.0, %v1411
      %1413 = vdwg.mxu0
      %v1418 = vunpack.c.l.b16 %v1296
      %v1419 = vunpack.c.l.b16 %v1297
      %v1420 = vunpack.c.l.b16 %v1298
      %v1421 = vunpack.c.l.b16 %v1299
      %v1422 = vpack.c.b16 %v1419, %v1418
      %v1423 = vpack.c.b16 %v1421, %v1420
      %v1428 = vunpack.c.l.b16 %v1312
      %v1429 = vunpack.c.l.b16 %v1313
      %v1430 = vunpack.c.l.b16 %v1314
      %v1431 = vunpack.c.l.b16 %v1315
      %v1432 = vpack.c.b16 %v1429, %v1428
      %v1433 = vpack.c.b16 %v1431, %v1430
      %v1437 = vsel %vm723, %v1422, 0
      %v1440 = vsel %vm723, %v1423, 0
      %1442 = vmatpush.bf16.msra.mxu0 0
      %1443 = vmatpush.bf16.msra.mxu0 0
      %1444 = vmatpush.bf16.msra.mxu0 0
      %1445 = vmatpush.bf16.msra.mxu0 0
      %1446 = vmatpush.bf16.msra.mxu0 0
      %1447 = vmatpush.bf16.msra.mxu0 0
      %1448 = vmatpush.bf16.msra.mxu0 %v1433
      %1449 = vmatpush.bf16.msra.mxu0 %v1432
      %1450 = vmatmul.bf16.gmra.mxu0 %v1437
      %v1451 = vpop.f32.mrf.mxu0
      %v1452 = vadd.f32 0.0, %v1451
      %v1453 = vpop.f32.mrf.mxu0
      %v1454 = vadd.f32 0.0, %v1453
      %1455 = vmatmul.bf16.gmra.mxu0 %v1440
      %v1456 = vpop.f32.mrf.mxu0
      %v1457 = vadd.f32 0.0, %v1456
      %v1458 = vpop.f32.mrf.mxu0
      %v1459 = vadd.f32 0.0, %v1458
      %1460 = vdwg.mxu0
      %v1465 = vunpack.c.l.b16 %v1300
      %v1466 = vunpack.c.l.b16 %v1301
      %v1467 = vunpack.c.l.b16 %v1302
      %v1468 = vunpack.c.l.b16 %v1303
      %v1469 = vpack.c.b16 %v1466, %v1465
      %v1470 = vpack.c.b16 %v1468, %v1467
      %v1475 = vunpack.c.l.b16 %v1316
      %v1476 = vunpack.c.l.b16 %v1317
      %v1477 = vunpack.c.l.b16 %v1318
      %v1478 = vunpack.c.l.b16 %v1319
      %v1479 = vpack.c.b16 %v1476, %v1475
      %v1480 = vpack.c.b16 %v1478, %v1477
      %v1484 = vsel %vm723, %v1469, 0
      %v1487 = vsel %vm723, %v1470, 0
      %1489 = vmatpush.bf16.msra.mxu0 0
      %1490 = vmatpush.bf16.msra.mxu0 0
      %1491 = vmatpush.bf16.msra.mxu0 0
      %1492 = vmatpush.bf16.msra.mxu0 0
      %1493 = vmatpush.bf16.msra.mxu0 0
      %1494 = vmatpush.bf16.msra.mxu0 0
      %1495 = vmatpush.bf16.msra.mxu0 %v1480
      %1496 = vmatpush.bf16.msra.mxu0 %v1479
      %1497 = vmatmul.bf16.gmra.mxu0 %v1484
      %v1498 = vpop.f32.mrf.mxu0
      %v1499 = vadd.f32 0.0, %v1498
      %v1500 = vpop.f32.mrf.mxu0
      %v1501 = vadd.f32 0.0, %v1500
      %1502 = vmatmul.bf16.gmra.mxu0 %v1487
      %v1503 = vpop.f32.mrf.mxu0
      %v1504 = vadd.f32 0.0, %v1503
      %v1505 = vpop.f32.mrf.mxu0
      %v1506 = vadd.f32 0.0, %v1505
      %1507 = vdwg.mxu0
      %v1508 = vadd.f32 %v1358, %v1405
      %v1509 = vadd.f32 %v1508, %v1452
      %v1510 = vadd.f32 %v1509, %v1499
      %v1511 = vadd.f32 %v1360, %v1407
      %v1512 = vadd.f32 %v1511, %v1454
      %v1513 = vadd.f32 %v1512, %v1501
      %v1514 = vadd.f32 %v1363, %v1410
      %v1515 = vadd.f32 %v1514, %v1457
      %v1516 = vadd.f32 %v1515, %v1504
      %v1517 = vadd.f32 %v1365, %v1412
      %v1518 = vadd.f32 %v1517, %v1459
      %v1519 = vadd.f32 %v1518, %v1506
      %v1520 = vld [vmem:[%s6] sm:$0x1]
      %v1522 = vperm.slane %v1520, 0
      %v1524 = vadd.f32 %v1510, %v1522
      %v1525 = vadd.f32 %v1513, %v1522
      %v1526 = vadd.f32 %v1516, %v1522
      %v1527 = vadd.f32 %v1519, %v1522
      %v1528 = vld [vmem:[%s604] sm:$0xff]
      %v1529 = vld [vmem:[%s604 + $0x8] sm:$0xff]
      %v1530 = vld [vmem:[%s604 + $0x10] sm:$0xff]
      %v1531 = vld [vmem:[%s604 + $0x18] sm:$0xff]
      %v1532 = vadd.f32 %v1528, %v1524
      %v1533 = vadd.f32 %v1529, %v1525
      %v1534 = vadd.f32 %v1530, %v1526
      %v1535 = vadd.f32 %v1531, %v1527
      %v1536 = vld [vmem:[%s7] sm:$0x1]
      %v1537 = vld [vmem:[%s8] sm:$0x1]
      %1538 = vadd.xlane.f32.xlu0 %v1532
      %v1539 = vpop.xlane.xlu0 %1538
      %1540 = vadd.xlane.f32.xlu0 %v1533
      %v1541 = vpop.xlane.xlu0 %1540
      %1542 = vadd.xlane.f32.xlu0 %v1534
      %v1543 = vpop.xlane.xlu0 %1542
      %1544 = vadd.xlane.f32.xlu0 %v1535
      %v1545 = vpop.xlane.xlu0 %1544
      %v1546 = vrcp.pop 128.0
      %v1547 = vmul.f32 128.0, %v1546
      %v1548 = vsub.f32 1.0, %v1547
      %v1549 = vmul.f32 %v1546, %v1548
      %v1550 = vadd.f32 %v1546, %v1549
      %vm1551 = vweird.f32 %v1546
      %v1552 = vsel %vm1551, %v1546, %v1550
      %v1553 = vmul.f32 %v1539, %v1552
      %v1554 = vmul.f32 %v1541, %v1552
      %v1555 = vmul.f32 %v1543, %v1552
      %v1556 = vmul.f32 %v1545, %v1552
      %v1557 = vsub.f32 %v1532, %v1553
      %v1558 = vsub.f32 %v1533, %v1554
      %v1559 = vsub.f32 %v1534, %v1555
      %v1560 = vsub.f32 %v1535, %v1556
      %v1561 = vmul.f32 %v1557, %v1557
      %v1562 = vmul.f32 %v1558, %v1558
      %v1563 = vmul.f32 %v1559, %v1559
      %v1564 = vmul.f32 %v1560, %v1560
      %1565 = vadd.xlane.f32.xlu0 %v1561
      %v1566 = vpop.xlane.xlu0 %1565
      %1567 = vadd.xlane.f32.xlu0 %v1562
      %v1568 = vpop.xlane.xlu0 %1567
      %1569 = vadd.xlane.f32.xlu0 %v1563
      %v1570 = vpop.xlane.xlu0 %1569
      %1571 = vadd.xlane.f32.xlu0 %v1564
      %v1572 = vpop.xlane.xlu0 %1571
      %v1573 = vmul.f32 %v1566, %v1552
      %v1574 = vmul.f32 %v1568, %v1552
      %v1575 = vmul.f32 %v1570, %v1552
      %v1576 = vmul.f32 %v1572, %v1552
      %v1577 = vadd.f32 %v1573, 1e-05
      %v1578 = vadd.f32 %v1574, 1e-05
      %v1579 = vadd.f32 %v1575, 1e-05
      %v1580 = vadd.f32 %v1576, 1e-05
      %v1581 = vrsqrt.pop %v1577
      %v1582 = vmul.f32 %v1581, %v1577
      %v1583 = vmul.f32 %v1582, %v1581
      %v1584 = vmul.f32 0.5, %v1583
      %v1585 = vsub.f32 1.5, %v1584
      %v1586 = vmul.f32 %v1581, %v1585
      %vm1587 = vweird.f32 %v1577
      %vm1588 = vweird.f32 %v1581
      %vm1589 = vmor %vm1587, %vm1588
      %v1590 = vsel %vm1589, %v1581, %v1586
      %v1591 = vrsqrt.pop %v1578
      %v1592 = vmul.f32 %v1591, %v1578
      %v1593 = vmul.f32 %v1592, %v1591
      %v1594 = vmul.f32 0.5, %v1593
      %v1595 = vsub.f32 1.5, %v1594
      %v1596 = vmul.f32 %v1591, %v1595
      %vm1597 = vweird.f32 %v1578
      %vm1598 = vweird.f32 %v1591
      %vm1599 = vmor %vm1597, %vm1598
      %v1600 = vsel %vm1599, %v1591, %v1596
      %v1601 = vrsqrt.pop %v1579
      %v1602 = vmul.f32 %v1601, %v1579
      %v1603 = vmul.f32 %v1602, %v1601
      %v1604 = vmul.f32 0.5, %v1603
      %v1605 = vsub.f32 1.5, %v1604
      %v1606 = vmul.f32 %v1601, %v1605
      %vm1607 = vweird.f32 %v1579
      %vm1608 = vweird.f32 %v1601
      %vm1609 = vmor %vm1607, %vm1608
      %v1610 = vsel %vm1609, %v1601, %v1606
      %v1611 = vrsqrt.pop %v1580
      %v1612 = vmul.f32 %v1611, %v1580
      %v1613 = vmul.f32 %v1612, %v1611
      %v1614 = vmul.f32 0.5, %v1613
      %v1615 = vsub.f32 1.5, %v1614
      %v1616 = vmul.f32 %v1611, %v1615
      %vm1617 = vweird.f32 %v1580
      %vm1618 = vweird.f32 %v1611
      %vm1619 = vmor %vm1617, %vm1618
      %v1620 = vsel %vm1619, %v1611, %v1616
      %v1621 = vmul.f32 %v1557, %v1590
      %v1622 = vmul.f32 %v1558, %v1600
      %v1623 = vmul.f32 %v1559, %v1610
      %v1624 = vmul.f32 %v1560, %v1620
      %v1626 = vperm.slane %v1536, 0
      %v1628 = vmul.f32 %v1621, %v1626
      %v1629 = vmul.f32 %v1622, %v1626
      %v1630 = vmul.f32 %v1623, %v1626
      %v1631 = vmul.f32 %v1624, %v1626
      %v1633 = vperm.slane %v1537, 0
      %v1635 = vadd.f32 %v1628, %v1633
      %v1636 = vadd.f32 %v1629, %v1633
      %v1637 = vadd.f32 %v1630, %v1633
      %v1638 = vadd.f32 %v1631, %v1633
      %v1639 = vpack.c.bf16 %v1636, %v1635
      %v1640 = vpack.c.bf16 %v1638, %v1637
      %v1641 = vld [vmem:[%s9] sm:$0xff]
      %v1642 = vld [vmem:[%s9 + $0x8] sm:$0xff]
      %v1643 = vld [vmem:[%s9 + $0x10] sm:$0xff]
      %v1644 = vld [vmem:[%s9 + $0x18] sm:$0xff]
      %v1645 = vld [vmem:[%s9 + $0x20] sm:$0xff]
      %v1646 = vld [vmem:[%s9 + $0x28] sm:$0xff]
      %v1647 = vld [vmem:[%s9 + $0x30] sm:$0xff]
      %v1648 = vld [vmem:[%s9 + $0x38] sm:$0xff]
      %v1649 = vld [vmem:[%s9 + $0x40] sm:$0xff]
      %v1650 = vld [vmem:[%s9 + $0x48] sm:$0xff]
      %v1651 = vld [vmem:[%s9 + $0x50] sm:$0xff]
      %v1652 = vld [vmem:[%s9 + $0x58] sm:$0xff]
      %v1653 = vld [vmem:[%s9 + $0x60] sm:$0xff]
      %v1654 = vld [vmem:[%s9 + $0x68] sm:$0xff]
      %v1655 = vld [vmem:[%s9 + $0x70] sm:$0xff]
      %v1656 = vld [vmem:[%s9 + $0x78] sm:$0xff]
      %v1657 = vld [vmem:[%s10] sm:$0x3]
      %v1659 = vperm.slane %v1657, 0
      %v1660 = vperm.slane %v1657, 1
      %v1679 = vunpack.c.l.b16 %v1641
      %v1680 = vunpack.c.h.b16 %v1641
      %v1681 = vunpack.c.l.b16 %v1642
      %v1682 = vunpack.c.h.b16 %v1642
      %v1683 = vunpack.c.l.b16 %v1643
      %v1684 = vunpack.c.h.b16 %v1643
      %v1685 = vunpack.c.l.b16 %v1644
      %v1686 = vunpack.c.h.b16 %v1644
      %v1687 = vunpack.c.l.b16 %v1645
      %v1688 = vunpack.c.h.b16 %v1645
      %v1689 = vunpack.c.l.b16 %v1646
      %v1690 = vunpack.c.h.b16 %v1646
      %v1691 = vunpack.c.l.b16 %v1647
      %v1692 = vunpack.c.h.b16 %v1647
      %v1693 = vunpack.c.l.b16 %v1648
      %v1694 = vunpack.c.h.b16 %v1648
      %v1695 = vunpack.c.l.b16 %v1649
      %v1696 = vunpack.c.h.b16 %v1649
      %v1697 = vunpack.c.l.b16 %v1650
      %v1698 = vunpack.c.h.b16 %v1650
      %v1699 = vunpack.c.l.b16 %v1651
      %v1700 = vunpack.c.h.b16 %v1651
      %v1701 = vunpack.c.l.b16 %v1652
      %v1702 = vunpack.c.h.b16 %v1652
      %v1703 = vunpack.c.l.b16 %v1653
      %v1704 = vunpack.c.h.b16 %v1653
      %v1705 = vunpack.c.l.b16 %v1654
      %v1706 = vunpack.c.h.b16 %v1654
      %v1707 = vunpack.c.l.b16 %v1655
      %v1708 = vunpack.c.h.b16 %v1655
      %v1709 = vunpack.c.l.b16 %v1656
      %v1710 = vunpack.c.h.b16 %v1656
      %v1711 = vpack.c.b16 %v1681, %v1679
      %v1712 = vpack.c.b16 %v1682, %v1680
      %v1713 = vpack.c.b16 %v1685, %v1683
      %v1714 = vpack.c.b16 %v1686, %v1684
      %v1715 = vpack.c.b16 %v1689, %v1687
      %v1716 = vpack.c.b16 %v1690, %v1688
      %v1717 = vpack.c.b16 %v1693, %v1691
      %v1718 = vpack.c.b16 %v1694, %v1692
      %v1719 = vpack.c.b16 %v1697, %v1695
      %v1720 = vpack.c.b16 %v1698, %v1696
      %v1721 = vpack.c.b16 %v1701, %v1699
      %v1722 = vpack.c.b16 %v1702, %v1700
      %v1723 = vpack.c.b16 %v1705, %v1703
      %v1724 = vpack.c.b16 %v1706, %v1704
      %v1725 = vpack.c.b16 %v1709, %v1707
      %v1726 = vpack.c.b16 %v1710, %v1708
      %1743 = vmatpush.bf16.msra.mxu0 %v1725
      %1744 = vmatpush.bf16.msra.mxu0 %v1723
      %1745 = vmatpush.bf16.msra.mxu0 %v1721
      %1746 = vmatpush.bf16.msra.mxu0 %v1719
      %1747 = vmatpush.bf16.msra.mxu0 %v1717
      %1748 = vmatpush.bf16.msra.mxu0 %v1715
      %1749 = vmatpush.bf16.msra.mxu0 %v1713
      %1750 = vmatpush.bf16.msra.mxu0 %v1711
      %1751 = vmatmul.bf16.gmra.mxu0 %v1639
      %v1752 = vpop.f32.mrf.mxu0
      %v1753 = vadd.f32 %v1659, %v1752
      %v1754 = vpop.f32.mrf.mxu0
      %v1755 = vadd.f32 %v1659, %v1754
      %1756 = vmatmul.bf16.gmra.mxu0 %v1640
      %v1757 = vpop.f32.mrf.mxu0
      %v1758 = vadd.f32 %v1659, %v1757
      %v1759 = vpop.f32.mrf.mxu0
      %v1760 = vadd.f32 %v1659, %v1759
      %1761 = vdwg.mxu0
      %1762 = vmatpush.bf16.msra.mxu0 %v1726
      %1763 = vmatpush.bf16.msra.mxu0 %v1724
      %1764 = vmatpush.bf16.msra.mxu0 %v1722
      %1765 = vmatpush.bf16.msra.mxu0 %v1720
      %1766 = vmatpush.bf16.msra.mxu0 %v1718
      %1767 = vmatpush.bf16.msra.mxu0 %v1716
      %1768 = vmatpush.bf16.msra.mxu0 %v1714
      %1769 = vmatpush.bf16.msra.mxu0 %v1712
      %1770 = vmatmul.bf16.gmra.mxu0 %v1639
      %v1771 = vpop.f32.mrf.mxu0
      %v1772 = vadd.f32 %v1660, %v1771
      %v1773 = vpop.f32.mrf.mxu0
      %v1774 = vadd.f32 %v1660, %v1773
      %1775 = vmatmul.bf16.gmra.mxu0 %v1640
      %v1776 = vpop.f32.mrf.mxu0
      %v1777 = vadd.f32 %v1660, %v1776
      %v1778 = vpop.f32.mrf.mxu0
      %v1779 = vadd.f32 %v1660, %v1778
      %1780 = vdwg.mxu0
      %v1781 = vmax.f32 %v1753, 0.0
      %v1782 = vmax.f32 %v1772, 0.0
      %v1783 = vmax.f32 %v1755, 0.0
      %v1784 = vmax.f32 %v1774, 0.0
      %v1785 = vmax.f32 %v1758, 0.0
      %v1786 = vmax.f32 %v1777, 0.0
      %v1787 = vmax.f32 %v1760, 0.0
      %v1788 = vmax.f32 %v1779, 0.0
      %v1789 = vpack.c.bf16 %v1783, %v1781
      %v1790 = vpack.c.bf16 %v1784, %v1782
      %v1791 = vpack.c.bf16 %v1787, %v1785
      %v1792 = vpack.c.bf16 %v1788, %v1786
      %v1793 = vld [vmem:[%s11] sm:$0xf]
      %v1794 = vld [vmem:[%s11 + $0x4] sm:$0xf]
      %v1795 = vld [vmem:[%s11 + $0x8] sm:$0xf]
      %v1796 = vld [vmem:[%s11 + $0xc] sm:$0xf]
      %v1797 = vld [vmem:[%s11 + $0x10] sm:$0xf]
      %v1798 = vld [vmem:[%s11 + $0x14] sm:$0xf]
      %v1799 = vld [vmem:[%s11 + $0x18] sm:$0xf]
      %v1800 = vld [vmem:[%s11 + $0x1c] sm:$0xf]
      %v1801 = vld [vmem:[%s11 + $0x20] sm:$0xf]
      %v1802 = vld [vmem:[%s11 + $0x24] sm:$0xf]
      %v1803 = vld [vmem:[%s11 + $0x28] sm:$0xf]
      %v1804 = vld [vmem:[%s11 + $0x2c] sm:$0xf]
      %v1805 = vld [vmem:[%s11 + $0x30] sm:$0xf]
      %v1806 = vld [vmem:[%s11 + $0x34] sm:$0xf]
      %v1807 = vld [vmem:[%s11 + $0x38] sm:$0xf]
      %v1808 = vld [vmem:[%s11 + $0x3c] sm:$0xf]
      %v1809 = vld [vmem:[%s11 + $0x40] sm:$0xf]
      %v1810 = vld [vmem:[%s11 + $0x44] sm:$0xf]
      %v1811 = vld [vmem:[%s11 + $0x48] sm:$0xf]
      %v1812 = vld [vmem:[%s11 + $0x4c] sm:$0xf]
      %v1813 = vld [vmem:[%s11 + $0x50] sm:$0xf]
      %v1814 = vld [vmem:[%s11 + $0x54] sm:$0xf]
      %v1815 = vld [vmem:[%s11 + $0x58] sm:$0xf]
      %v1816 = vld [vmem:[%s11 + $0x5c] sm:$0xf]
      %v1817 = vld [vmem:[%s11 + $0x60] sm:$0xf]
      %v1818 = vld [vmem:[%s11 + $0x64] sm:$0xf]
      %v1819 = vld [vmem:[%s11 + $0x68] sm:$0xf]
      %v1820 = vld [vmem:[%s11 + $0x6c] sm:$0xf]
      %v1821 = vld [vmem:[%s11 + $0x70] sm:$0xf]
      %v1822 = vld [vmem:[%s11 + $0x74] sm:$0xf]
      %v1823 = vld [vmem:[%s11 + $0x78] sm:$0xf]
      %v1824 = vld [vmem:[%s11 + $0x7c] sm:$0xf]
      %v1825 = vld [vmem:[%s12] sm:$0x1]
      %v1827 = vperm.slane %v1825, 0
      %v1861 = vunpack.c.l.b16 %v1793
      %v1862 = vunpack.c.l.b16 %v1794
      %v1863 = vunpack.c.l.b16 %v1795
      %v1864 = vunpack.c.l.b16 %v1796
      %v1865 = vunpack.c.l.b16 %v1797
      %v1866 = vunpack.c.l.b16 %v1798
      %v1867 = vunpack.c.l.b16 %v1799
      %v1868 = vunpack.c.l.b16 %v1800
      %v1869 = vunpack.c.l.b16 %v1801
      %v1870 = vunpack.c.l.b16 %v1802
      %v1871 = vunpack.c.l.b16 %v1803
      %v1872 = vunpack.c.l.b16 %v1804
      %v1873 = vunpack.c.l.b16 %v1805
      %v1874 = vunpack.c.l.b16 %v1806
      %v1875 = vunpack.c.l.b16 %v1807
      %v1876 = vunpack.c.l.b16 %v1808
      %v1877 = vunpack.c.l.b16 %v1809
      %v1878 = vunpack.c.l.b16 %v1810
      %v1879 = vunpack.c.l.b16 %v1811
      %v1880 = vunpack.c.l.b16 %v1812
      %v1881 = vunpack.c.l.b16 %v1813
      %v1882 = vunpack.c.l.b16 %v1814
      %v1883 = vunpack.c.l.b16 %v1815
      %v1884 = vunpack.c.l.b16 %v1816
      %v1885 = vunpack.c.l.b16 %v1817
      %v1886 = vunpack.c.l.b16 %v1818
      %v1887 = vunpack.c.l.b16 %v1819
      %v1888 = vunpack.c.l.b16 %v1820
      %v1889 = vunpack.c.l.b16 %v1821
      %v1890 = vunpack.c.l.b16 %v1822
      %v1891 = vunpack.c.l.b16 %v1823
      %v1892 = vunpack.c.l.b16 %v1824
      %v1893 = vpack.c.b16 %v1862, %v1861
      %v1894 = vpack.c.b16 %v1864, %v1863
      %v1895 = vpack.c.b16 %v1866, %v1865
      %v1896 = vpack.c.b16 %v1868, %v1867
      %v1897 = vpack.c.b16 %v1870, %v1869
      %v1898 = vpack.c.b16 %v1872, %v1871
      %v1899 = vpack.c.b16 %v1874, %v1873
      %v1900 = vpack.c.b16 %v1876, %v1875
      %v1901 = vpack.c.b16 %v1878, %v1877
      %v1902 = vpack.c.b16 %v1880, %v1879
      %v1903 = vpack.c.b16 %v1882, %v1881
      %v1904 = vpack.c.b16 %v1884, %v1883
      %v1905 = vpack.c.b16 %v1886, %v1885
      %v1906 = vpack.c.b16 %v1888, %v1887
      %v1907 = vpack.c.b16 %v1890, %v1889
      %v1908 = vpack.c.b16 %v1892, %v1891
      %1925 = vmatpush.bf16.msra.mxu0 %v1900
      %1926 = vmatpush.bf16.msra.mxu0 %v1899
      %1927 = vmatpush.bf16.msra.mxu0 %v1898
      %1928 = vmatpush.bf16.msra.mxu0 %v1897
      %1929 = vmatpush.bf16.msra.mxu0 %v1896
      %1930 = vmatpush.bf16.msra.mxu0 %v1895
      %1931 = vmatpush.bf16.msra.mxu0 %v1894
      %1932 = vmatpush.bf16.msra.mxu0 %v1893
      %1933 = vmatmul.bf16.gmra.mxu0 %v1789
      %v1934 = vpop.f32.mrf.mxu0
      %v1935 = vadd.f32 %v1827, %v1934
      %v1936 = vpop.f32.mrf.mxu0
      %v1937 = vadd.f32 %v1827, %v1936
      %1938 = vmatmul.bf16.gmra.mxu0 %v1791
      %v1939 = vpop.f32.mrf.mxu0
      %v1940 = vadd.f32 %v1827, %v1939
      %v1941 = vpop.f32.mrf.mxu0
      %v1942 = vadd.f32 %v1827, %v1941
      %1943 = vdwg.mxu0
      %1944 = vmatpush.bf16.msra.mxu0 %v1908
      %1945 = vmatpush.bf16.msra.mxu0 %v1907
      %1946 = vmatpush.bf16.msra.mxu0 %v1906
      %1947 = vmatpush.bf16.msra.mxu0 %v1905
      %1948 = vmatpush.bf16.msra.mxu0 %v1904
      %1949 = vmatpush.bf16.msra.mxu0 %v1903
      %1950 = vmatpush.bf16.msra.mxu0 %v1902
      %1951 = vmatpush.bf16.msra.mxu0 %v1901
      %1952 = vmatmul.bf16.gmra.mxu0 %v1790
      %v1953 = vpop.f32.mrf.mxu0
      %v1954 = vadd.f32 %v1935, %v1953
      %v1955 = vpop.f32.mrf.mxu0
      %v1956 = vadd.f32 %v1937, %v1955
      %1957 = vmatmul.bf16.gmra.mxu0 %v1792
      %v1958 = vpop.f32.mrf.mxu0
      %v1959 = vadd.f32 %v1940, %v1958
      %v1960 = vpop.f32.mrf.mxu0
      %v1961 = vadd.f32 %v1942, %v1960
      %1962 = vdwg.mxu0
      %v1963 = vadd.f32 %v1635, %v1954
      %v1964 = vadd.f32 %v1636, %v1956
      %v1965 = vadd.f32 %v1637, %v1959
      %v1966 = vadd.f32 %v1638, %v1961
      %v1967 = vld [vmem:[%s13] sm:$0x1]
      %v1968 = vld [vmem:[%s14] sm:$0x1]
      %1969 = vadd.xlane.f32.xlu0 %v1963
      %v1970 = vpop.xlane.xlu0 %1969
      %1971 = vadd.xlane.f32.xlu0 %v1964
      %v1972 = vpop.xlane.xlu0 %1971
      %1973 = vadd.xlane.f32.xlu0 %v1965
      %v1974 = vpop.xlane.xlu0 %1973
      %1975 = vadd.xlane.f32.xlu0 %v1966
      %v1976 = vpop.xlane.xlu0 %1975
      %v1977 = vmul.f32 %v1970, %v1552
      %v1978 = vmul.f32 %v1972, %v1552
      %v1979 = vmul.f32 %v1974, %v1552
      %v1980 = vmul.f32 %v1976, %v1552
      %v1981 = vsub.f32 %v1963, %v1977
      %v1982 = vsub.f32 %v1964, %v1978
      %v1983 = vsub.f32 %v1965, %v1979
      %v1984 = vsub.f32 %v1966, %v1980
      %v1985 = vmul.f32 %v1981, %v1981
      %v1986 = vmul.f32 %v1982, %v1982
      %v1987 = vmul.f32 %v1983, %v1983
      %v1988 = vmul.f32 %v1984, %v1984
      %1989 = vadd.xlane.f32.xlu0 %v1985
      %v1990 = vpop.xlane.xlu0 %1989
      %1991 = vadd.xlane.f32.xlu0 %v1986
      %v1992 = vpop.xlane.xlu0 %1991
      %1993 = vadd.xlane.f32.xlu0 %v1987
      %v1994 = vpop.xlane.xlu0 %1993
      %1995 = vadd.xlane.f32.xlu0 %v1988
      %v1996 = vpop.xlane.xlu0 %1995
      %v1997 = vmul.f32 %v1990, %v1552
      %v1998 = vmul.f32 %v1992, %v1552
      %v1999 = vmul.f32 %v1994, %v1552
      %v2000 = vmul.f32 %v1996, %v1552
      %v2001 = vadd.f32 %v1997, 1e-05
      %v2002 = vadd.f32 %v1998, 1e-05
      %v2003 = vadd.f32 %v1999, 1e-05
      %v2004 = vadd.f32 %v2000, 1e-05
      %v2005 = vrsqrt.pop %v2001
      %v2006 = vmul.f32 %v2005, %v2001
      %v2007 = vmul.f32 %v2006, %v2005
      %v2008 = vmul.f32 0.5, %v2007
      %v2009 = vsub.f32 1.5, %v2008
      %v2010 = vmul.f32 %v2005, %v2009
      %vm2011 = vweird.f32 %v2001
      %vm2012 = vweird.f32 %v2005
      %vm2013 = vmor %vm2011, %vm2012
      %v2014 = vsel %vm2013, %v2005, %v2010
      %v2015 = vrsqrt.pop %v2002
      %v2016 = vmul.f32 %v2015, %v2002
      %v2017 = vmul.f32 %v2016, %v2015
      %v2018 = vmul.f32 0.5, %v2017
      %v2019 = vsub.f32 1.5, %v2018
      %v2020 = vmul.f32 %v2015, %v2019
      %vm2021 = vweird.f32 %v2002
      %vm2022 = vweird.f32 %v2015
      %vm2023 = vmor %vm2021, %vm2022
      %v2024 = vsel %vm2023, %v2015, %v2020
      %v2025 = vrsqrt.pop %v2003
      %v2026 = vmul.f32 %v2025, %v2003
      %v2027 = vmul.f32 %v2026, %v2025
      %v2028 = vmul.f32 0.5, %v2027
      %v2029 = vsub.f32 1.5, %v2028
      %v2030 = vmul.f32 %v2025, %v2029
      %vm2031 = vweird.f32 %v2003
      %vm2032 = vweird.f32 %v2025
      %vm2033 = vmor %vm2031, %vm2032
      %v2034 = vsel %vm2033, %v2025, %v2030
      %v2035 = vrsqrt.pop %v2004
      %v2036 = vmul.f32 %v2035, %v2004
      %v2037 = vmul.f32 %v2036, %v2035
      %v2038 = vmul.f32 0.5, %v2037
      %v2039 = vsub.f32 1.5, %v2038
      %v2040 = vmul.f32 %v2035, %v2039
      %vm2041 = vweird.f32 %v2004
      %vm2042 = vweird.f32 %v2035
      %vm2043 = vmor %vm2041, %vm2042
      %v2044 = vsel %vm2043, %v2035, %v2040
      %v2045 = vmul.f32 %v1981, %v2014
      %v2046 = vmul.f32 %v1982, %v2024
      %v2047 = vmul.f32 %v1983, %v2034
      %v2048 = vmul.f32 %v1984, %v2044
      %v2050 = vperm.slane %v1967, 0
      %v2052 = vmul.f32 %v2045, %v2050
      %v2053 = vmul.f32 %v2046, %v2050
      %v2054 = vmul.f32 %v2047, %v2050
      %v2055 = vmul.f32 %v2048, %v2050
      %v2057 = vperm.slane %v1968, 0
      %v2059 = vadd.f32 %v2052, %v2057
      %v2060 = vadd.f32 %v2053, %v2057
      %v2061 = vadd.f32 %v2054, %v2057
      %v2062 = vadd.f32 %v2055, %v2057
      %v2063 = vpack.c.bf16 %v2059, %v2059
      %v2064 = vpack.c.bf16 %v2060, %v2060
      %v2065 = vpack.c.bf16 %v2061, %v2061
      %v2066 = vpack.c.bf16 %v2062, %v2062
      %2067 = vst [vmem:[%s644] sm:$0xf] %v2063
      %2068 = vst [vmem:[%s644 + $0x4] sm:$0xf] %v2064
      %2069 = vst [vmem:[%s644 + $0x8] sm:$0xf] %v2065
      %2070 = vst [vmem:[%s644 + $0xc] sm:$0xf] %v2066
      %s2071 = smul.u32 4, %s31
      %p2072 = scmp.lt.s32.totalorder %s30, 1
      %s2073 = scalar_select %p2072, %s30, 1
      %p2074 = scmp.lt.s32.totalorder %s2071, 3
      %s2075 = scalar_select %p2074, %s2071, 3
      %s2076 = smul.addr %s2073, 4
      %s2077 = sadd.s32 %s2075, %s2076
      %s2078 = smul.addr %s2077, 4
      %s2079 = scalar_lea.vmem %s15, %s2078
      // Predicated region
      $region81: #{encoder_forward.2} parent=79 // pred_check
        %p2080 = pneg %p404
      $region82: #{encoder_forward.2} parent=79 // pred_check_branch
        %2082 = sbr.rel (%p2080) target = $region84
      $region83: #{encoder_forward.2} parent=79 // pred_region
        %s2083 = smul.u32 4, %s31
      $region84: #{encoder_forward.2} parent=79 // pred_fallthru
        _
    $region80: #{encoder_forward.2} parent=5 // pred_fallthru
      _
    %p2084 = scmp.le.s32.totalorder 2, %s21
    // Predicated region
    $region85: #{encoder_forward.2} parent=5 // pred_check
      %p2085 = pneg %p2084
    $region86: #{encoder_forward.2} parent=5 // pred_check_branch
      %2087 = sbr.rel (%p2085) target = $region88
    $region87: #{encoder_forward.2} parent=5 // pred_region
      %s2088 = ssub.s32 %s21, 2
      // Predicated region
      $region89: #{encoder_forward.2} parent=87 // pred_check
        %p2089 = pneg %p410
      $region90: #{encoder_forward.2} parent=87 // pred_check_branch
        %2091 = sbr.rel (%p2089) target = $region92
      $region91: #{encoder_forward.2} parent=87 // pred_region
        %s2092 = smul.u32 4, %s33
        %p2093 = scmp.lt.s32.totalorder %s32, 1
        %s2094 = scalar_select %p2093, %s32, 1
        %p2095 = scmp.lt.s32.totalorder %s2092, 3
        %s2096 = scalar_select %p2095, %s2092, 3
        %s2097 = smul.addr %s2094, 4
        %s2098 = sadd.s32 %s2096, %s2097
        %s2099 = smul.addr %s2098, 4
        %s2100 = scalar_lea.vmem %s15, %s2099
      $region92: #{encoder_forward.2} parent=87 // pred_fallthru
        _
    $region88: #{encoder_forward.2} parent=5 // pred_fallthru
      _
  $region6: #{encoder_forward.2} parent=0 // loop_footer
    %s25 = sadd.s32 1, %s21
  $region7: #{encoder_forward.2} parent=0 // loop_footer_branch
    %20 = sbr.rel target = $region3
  $region8: #{encoder_forward.2} parent=0 // loop_exit
    _

// kernel: encoder_forward.3
$region0: #{encoder_forward.3}
  #allocation0 [shape = 'u32[]', space=smem, size = 0x4, offset = 0x4, fixed_abs, tag = 'smem constant byte address 0x4 - core index']
  #allocation1 [shape = 'u32[72,128]{1,0:T(1,128)}', space=vmem, size = 0x9000, scoped, tag = 'internal scratch']
  %s0 = inlined_call_operand.vmem [shape: bf16[2,32,128], index: 0, kind: input, shape index: {}]
  %s1 = inlined_call_operand.vmem [shape: bf16[2,32,32], index: 1, kind: input, shape index: {}]
  %s2 = inlined_call_operand.vmem [shape: bf16[2,4,32,32], index: 2, kind: input, shape index: {}]
  %s3 = inlined_call_operand.vmem [shape: bf16[2,4,32,32], index: 3, kind: input, shape index: {}]
  %s4 = inlined_call_operand.vmem [shape: bf16[2,4,32,32], index: 4, kind: input, shape index: {}]
  %s5 = inlined_call_operand.vmem [shape: bf16[4,32,128], index: 5, kind: input, shape index: {}]
  %s6 = inlined_call_operand.vmem [shape: f32[1,128], index: 6, kind: input, shape index: {}]
  %s7 = inlined_call_operand.vmem [shape: f32[1,128], index: 7, kind: input, shape index: {}]
  %s8 = inlined_call_operand.vmem [shape: f32[1,128], index: 8, kind: input, shape index: {}]
  %s9 = inlined_call_operand.vmem [shape: bf16[128,256], index: 9, kind: input, shape index: {}]
  %s10 = inlined_call_operand.vmem [shape: f32[1,256], index: 10, kind: input, shape index: {}]
  %s11 = inlined_call_operand.vmem [shape: bf16[256,128], index: 11, kind: input, shape index: {}]
  %s12 = inlined_call_operand.vmem [shape: f32[1,128], index: 12, kind: input, shape index: {}]
  %s13 = inlined_call_operand.vmem [shape: f32[1,128], index: 13, kind: input, shape index: {}]
  %s14 = inlined_call_operand.vmem [shape: f32[1,128], index: 14, kind: input, shape index: {}]
  %s15 = inlined_call_operand.hbm [shape: f32[2,32,128], index: 15, kind: output, shape index: {}]
  %s16 = sld [smem:[#allocation0]]
  $region93: #{encoder_forward.3} parent=0
    _
  %s18 = ssub.s32 1, %s16
  %s19 = scalar_select 0, %s18, %s16
  $region1: #{encoder_forward.3} parent=0
    #allocation2 [shape = 'u8[32768]{0}', space=vmem, size = 0x8000, scoped, tag = 'output window, operand 0']
    #allocation3 [shape = 's32[2]{0}', space=sflag, size = 0x8, scoped, tag = 'scoped memory for encoder_forward.3']
    %20 = vsyncpa [#allocation3], 0
    %s21 = scalar_lea.sflag [#allocation3], 1
    %22 = vsyncpa %s21, 0
    loop: start=0, step=1, limit=4
    $region2: #{encoder_forward.3} parent=1 // loop_pre_header
      _
    $region3: #{encoder_forward.3} parent=1 // loop_header
      %s24 = sphi 0, %s28
      %p25 = scmp.ge.s32.totalorder %s24, 4
      %s31 = sphi 0, %s43
      %s32 = sphi 0, %s39
      %s33 = sphi 0, %s31
      %s34 = sphi 0, %s32
      %s35 = sphi 0, %s33
      %s36 = sphi 0, %s34
      %s48 = sphi 0, %s50
      %s51 = sphi 0, %s48
      %s52 = sphi 0, %s51
      %s68 = sphi 0, %s52
      %s76 = sphi 0, %s78
      %s79 = sphi 0, %s76
      %s80 = sphi 0, %s79
      %s96 = sphi 0, %s80
      %s104 = sphi 0, %s106
      %s107 = sphi 0, %s104
      %s108 = sphi 0, %s107
      %s124 = sphi 0, %s108
      %s130 = sphi 0, %s132
      %s133 = sphi 0, %s130
      %s134 = sphi 0, %s133
      %s150 = sphi 0, %s134
      %s156 = sphi 0, %s158
      %s159 = sphi 0, %s156
      %s160 = sphi 0, %s159
      %s176 = sphi 0, %s160
      %s180 = sphi 0, %s180
      %s182 = sphi 0, %s180
      %s183 = sphi 0, %s182
      %s197 = sphi 0, %s183
      %s201 = sphi 0, %s201
      %s203 = sphi 0, %s201
      %s204 = sphi 0, %s203
      %s218 = sphi 0, %s204
      %s222 = sphi 0, %s222
      %s224 = sphi 0, %s222
      %s225 = sphi 0, %s224
      %s239 = sphi 0, %s225
      %s243 = sphi 0, %s243
      %s245 = sphi 0, %s243
      %s246 = sphi 0, %s245
      %s260 = sphi 0, %s246
      %s264 = sphi 0, %s264
      %s266 = sphi 0, %s264
      %s267 = sphi 0, %s266
      %s281 = sphi 0, %s267
      %s285 = sphi 0, %s285
      %s287 = sphi 0, %s285
      %s288 = sphi 0, %s287
      %s302 = sphi 0, %s288
      %s306 = sphi 0, %s306
      %s308 = sphi 0, %s306
      %s309 = sphi 0, %s308
      %s323 = sphi 0, %s309
      %s327 = sphi 0, %s327
      %s329 = sphi 0, %s327
      %s330 = sphi 0, %s329
      %s344 = sphi 0, %s330
      %s348 = sphi 0, %s348
      %s350 = sphi 0, %s348
      %s351 = sphi 0, %s350
      %s365 = sphi 0, %s351
      %s369 = sphi 0, %s369
      %s371 = sphi 0, %s369
      %s372 = sphi 0, %s371
      %s386 = sphi 0, %s372
      %s394 = sphi 0, %s396
      %s397 = sphi 0, %s394
      %s398 = sphi 0, %s397
      %s414 = sphi 0, %s398
    $region4: #{encoder_forward.3} parent=1 // loop_header_branch
      %27 = sbr.rel (%p25) target = $region8
    $region5: #{encoder_forward.3} parent=1 // loop_body
      %s29 = ssub.s32 %s24, 1
      %s30 = ssub.s32 %s24, 2
      %s37 = sadd.s32 1, %s32
      %p38 = scmp.ge.s32.totalorder %s37, 1
      %s39 = scalar_select %p38, 0, %s37
      %s40 = sadd.s32 1, %s31
      %s41 = scalar_select %p38, %s40, %s31
      %p42 = scmp.ge.s32.totalorder %s41, 2
      %s43 = scalar_select %p42, 0, %s41
      %s44 = ssub.s32 %s31, %s43
      %s45 = ssub.s32 %s32, %s39
      %s46 = sor.u32 %s44, %s45
      %p47 = scmp.eq.s32.totalorder %s46, 0
      %s49 = sadd.s32 %s48, 1
      %s50 = scalar_select %p47, %s48, %s49
      %p53 = pneg %p47
      %p54 = scmp.eq.s32.totalorder %s24, 1
      %p55 = por %p53, %p54
      %p56 = scmp.ne.s32.totalorder %s48, %s51
      %p57 = scmp.eq.s32.totalorder %s24, 0
      %p58 = por %p56, %p57
      %p59 = scmp.ne.s32.totalorder %s48, %s51
      %p60 = scmp.eq.s32.totalorder %s29, 1
      %p61 = por %p59, %p60
      %p62 = scmp.ne.s32.totalorder %s51, %s52
      %p63 = scmp.eq.s32.totalorder %s29, 0
      %p64 = por %p62, %p63
      %p65 = scmp.ne.s32.totalorder %s51, %s52
      %p66 = scmp.eq.s32.totalorder %s30, 1
      %p67 = por %p65, %p66
      %p69 = scmp.ne.s32.totalorder %s52, %s68
      %p70 = scmp.eq.s32.totalorder %s30, 0
      %p71 = por %p69, %p70
      %s72 = ssub.s32 %s31, %s43
      %s73 = ssub.s32 %s32, %s39
      %s74 = sor.u32 %s72, %s73
      %p75 = scmp.eq.s32.totalorder %s74, 0
      %s77 = sadd.s32 %s76, 1
      %s78 = scalar_select %p75, %s76, %s77
      %p81 = pneg %p75
      %p82 = scmp.eq.s32.totalorder %s24, 1
      %p83 = por %p81, %p82
      %p84 = scmp.ne.s32.totalorder %s76, %s79
      %p85 = scmp.eq.s32.totalorder %s24, 0
      %p86 = por %p84, %p85
      %p87 = scmp.ne.s32.totalorder %s76, %s79
      %p88 = scmp.eq.s32.totalorder %s29, 1
      %p89 = por %p87, %p88
      %p90 = scmp.ne.s32.totalorder %s79, %s80
      %p91 = scmp.eq.s32.totalorder %s29, 0
      %p92 = por %p90, %p91
      %p93 = scmp.ne.s32.totalorder %s79, %s80
      %p94 = scmp.eq.s32.totalorder %s30, 1
      %p95 = por %p93, %p94
      %p97 = scmp.ne.s32.totalorder %s80, %s96
      %p98 = scmp.eq.s32.totalorder %s30, 0
      %p99 = por %p97, %p98
      %s100 = ssub.s32 %s31, %s43
      %s101 = ssub.s32 %s32, %s39
      %s102 = sor.u32 %s100, %s101
      %p103 = scmp.eq.s32.totalorder %s102, 0
      %s105 = sadd.s32 %s104, 1
      %s106 = scalar_select %p103, %s104, %s105
      %p109 = pneg %p103
      %p110 = scmp.eq.s32.totalorder %s24, 1
      %p111 = por %p109, %p110
      %p112 = scmp.ne.s32.totalorder %s104, %s107
      %p113 = scmp.eq.s32.totalorder %s24, 0
      %p114 = por %p112, %p113
      %p115 = scmp.ne.s32.totalorder %s104, %s107
      %p116 = scmp.eq.s32.totalorder %s29, 1
      %p117 = por %p115, %p116
      %p118 = scmp.ne.s32.totalorder %s107, %s108
      %p119 = scmp.eq.s32.totalorder %s29, 0
      %p120 = por %p118, %p119
      %p121 = scmp.ne.s32.totalorder %s107, %s108
      %p122 = scmp.eq.s32.totalorder %s30, 1
      %p123 = por %p121, %p122
      %p125 = scmp.ne.s32.totalorder %s108, %s124
      %p126 = scmp.eq.s32.totalorder %s30, 0
      %p127 = por %p125, %p126
      %s128 = ssub.s32 %s31, %s43
      %p129 = scmp.eq.s32.totalorder %s128, 0
      %s131 = sadd.s32 %s130, 1
      %s132 = scalar_select %p129, %s130, %s131
      %p135 = pneg %p129
      %p136 = scmp.eq.s32.totalorder %s24, 1
      %p137 = por %p135, %p136
      %p138 = scmp.ne.s32.totalorder %s130, %s133
      %p139 = scmp.eq.s32.totalorder %s24, 0
      %p140 = por %p138, %p139
      %p141 = scmp.ne.s32.totalorder %s130, %s133
      %p142 = scmp.eq.s32.totalorder %s29, 1
      %p143 = por %p141, %p142
      %p144 = scmp.ne.s32.totalorder %s133, %s134
      %p145 = scmp.eq.s32.totalorder %s29, 0
      %p146 = por %p144, %p145
      %p147 = scmp.ne.s32.totalorder %s133, %s134
      %p148 = scmp.eq.s32.totalorder %s30, 1
      %p149 = por %p147, %p148
      %p151 = scmp.ne.s32.totalorder %s134, %s150
      %p152 = scmp.eq.s32.totalorder %s30, 0
      %p153 = por %p151, %p152
      %s154 = ssub.s32 %s31, %s43
      %p155 = scmp.eq.s32.totalorder %s154, 0
      %s157 = sadd.s32 %s156, 1
      %s158 = scalar_select %p155, %s156, %s157
      %p161 = pneg %p155
      %p162 = scmp.eq.s32.totalorder %s24, 1
      %p163 = por %p161, %p162
      %p164 = scmp.ne.s32.totalorder %s156, %s159
      %p165 = scmp.eq.s32.totalorder %s24, 0
      %p166 = por %p164, %p165
      %p167 = scmp.ne.s32.totalorder %s156, %s159
      %p168 = scmp.eq.s32.totalorder %s29, 1
      %p169 = por %p167, %p168
      %p170 = scmp.ne.s32.totalorder %s159, %s160
      %p171 = scmp.eq.s32.totalorder %s29, 0
      %p172 = por %p170, %p171
      %p173 = scmp.ne.s32.totalorder %s159, %s160
      %p174 = scmp.eq.s32.totalorder %s30, 1
      %p175 = por %p173, %p174
      %p177 = scmp.ne.s32.totalorder %s160, %s176
      %p178 = scmp.eq.s32.totalorder %s30, 0
      %p179 = por %p177, %p178
      %s181 = sadd.s32 %s180, 1
      %p184 = scmp.eq.s32.totalorder %s24, 1
      %p185 = scmp.ne.s32.totalorder %s180, %s182
      %p186 = scmp.eq.s32.totalorder %s24, 0
      %p187 = por %p185, %p186
      %p188 = scmp.ne.s32.totalorder %s180, %s182
      %p189 = scmp.eq.s32.totalorder %s29, 1
      %p190 = por %p188, %p189
      %p191 = scmp.ne.s32.totalorder %s182, %s183
      %p192 = scmp.eq.s32.totalorder %s29, 0
      %p193 = por %p191, %p192
      %p194 = scmp.ne.s32.totalorder %s182, %s183
      %p195 = scmp.eq.s32.totalorder %s30, 1
      %p196 = por %p194, %p195
      %p198 = scmp.ne.s32.totalorder %s183, %s197
      %p199 = scmp.eq.s32.totalorder %s30, 0
      %p200 = por %p198, %p199
      %s202 = sadd.s32 %s201, 1
      %p205 = scmp.eq.s32.totalorder %s24, 1
      %p206 = scmp.ne.s32.totalorder %s201, %s203
      %p207 = scmp.eq.s32.totalorder %s24, 0
      %p208 = por %p206, %p207
      %p209 = scmp.ne.s32.totalorder %s201, %s203
      %p210 = scmp.eq.s32.totalorder %s29, 1
      %p211 = por %p209, %p210
      %p212 = scmp.ne.s32.totalorder %s203, %s204
      %p213 = scmp.eq.s32.totalorder %s29, 0
      %p214 = por %p212, %p213
      %p215 = scmp.ne.s32.totalorder %s203, %s204
      %p216 = scmp.eq.s32.totalorder %s30, 1
      %p217 = por %p215, %p216
      %p219 = scmp.ne.s32.totalorder %s204, %s218
      %p220 = scmp.eq.s32.totalorder %s30, 0
      %p221 = por %p219, %p220
      %s223 = sadd.s32 %s222, 1
      %p226 = scmp.eq.s32.totalorder %s24, 1
      %p227 = scmp.ne.s32.totalorder %s222, %s224
      %p228 = scmp.eq.s32.totalorder %s24, 0
      %p229 = por %p227, %p228
      %p230 = scmp.ne.s32.totalorder %s222, %s224
      %p231 = scmp.eq.s32.totalorder %s29, 1
      %p232 = por %p230, %p231
      %p233 = scmp.ne.s32.totalorder %s224, %s225
      %p234 = scmp.eq.s32.totalorder %s29, 0
      %p235 = por %p233, %p234
      %p236 = scmp.ne.s32.totalorder %s224, %s225
      %p237 = scmp.eq.s32.totalorder %s30, 1
      %p238 = por %p236, %p237
      %p240 = scmp.ne.s32.totalorder %s225, %s239
      %p241 = scmp.eq.s32.totalorder %s30, 0
      %p242 = por %p240, %p241
      %s244 = sadd.s32 %s243, 1
      %p247 = scmp.eq.s32.totalorder %s24, 1
      %p248 = scmp.ne.s32.totalorder %s243, %s245
      %p249 = scmp.eq.s32.totalorder %s24, 0
      %p250 = por %p248, %p249
      %p251 = scmp.ne.s32.totalorder %s243, %s245
      %p252 = scmp.eq.s32.totalorder %s29, 1
      %p253 = por %p251, %p252
      %p254 = scmp.ne.s32.totalorder %s245, %s246
      %p255 = scmp.eq.s32.totalorder %s29, 0
      %p256 = por %p254, %p255
      %p257 = scmp.ne.s32.totalorder %s245, %s246
      %p258 = scmp.eq.s32.totalorder %s30, 1
      %p259 = por %p257, %p258
      %p261 = scmp.ne.s32.totalorder %s246, %s260
      %p262 = scmp.eq.s32.totalorder %s30, 0
      %p263 = por %p261, %p262
      %s265 = sadd.s32 %s264, 1
      %p268 = scmp.eq.s32.totalorder %s24, 1
      %p269 = scmp.ne.s32.totalorder %s264, %s266
      %p270 = scmp.eq.s32.totalorder %s24, 0
      %p271 = por %p269, %p270
      %p272 = scmp.ne.s32.totalorder %s264, %s266
      %p273 = scmp.eq.s32.totalorder %s29, 1
      %p274 = por %p272, %p273
      %p275 = scmp.ne.s32.totalorder %s266, %s267
      %p276 = scmp.eq.s32.totalorder %s29, 0
      %p277 = por %p275, %p276
      %p278 = scmp.ne.s32.totalorder %s266, %s267
      %p279 = scmp.eq.s32.totalorder %s30, 1
      %p280 = por %p278, %p279
      %p282 = scmp.ne.s32.totalorder %s267, %s281
      %p283 = scmp.eq.s32.totalorder %s30, 0
      %p284 = por %p282, %p283
      %s286 = sadd.s32 %s285, 1
      %p289 = scmp.eq.s32.totalorder %s24, 1
      %p290 = scmp.ne.s32.totalorder %s285, %s287
      %p291 = scmp.eq.s32.totalorder %s24, 0
      %p292 = por %p290, %p291
      %p293 = scmp.ne.s32.totalorder %s285, %s287
      %p294 = scmp.eq.s32.totalorder %s29, 1
      %p295 = por %p293, %p294
      %p296 = scmp.ne.s32.totalorder %s287, %s288
      %p297 = scmp.eq.s32.totalorder %s29, 0
      %p298 = por %p296, %p297
      %p299 = scmp.ne.s32.totalorder %s287, %s288
      %p300 = scmp.eq.s32.totalorder %s30, 1
      %p301 = por %p299, %p300
      %p303 = scmp.ne.s32.totalorder %s288, %s302
      %p304 = scmp.eq.s32.totalorder %s30, 0
      %p305 = por %p303, %p304
      %s307 = sadd.s32 %s306, 1
      %p310 = scmp.eq.s32.totalorder %s24, 1
      %p311 = scmp.ne.s32.totalorder %s306, %s308
      %p312 = scmp.eq.s32.totalorder %s24, 0
      %p313 = por %p311, %p312
      %p314 = scmp.ne.s32.totalorder %s306, %s308
      %p315 = scmp.eq.s32.totalorder %s29, 1
      %p316 = por %p314, %p315
      %p317 = scmp.ne.s32.totalorder %s308, %s309
      %p318 = scmp.eq.s32.totalorder %s29, 0
      %p319 = por %p317, %p318
      %p320 = scmp.ne.s32.totalorder %s308, %s309
      %p321 = scmp.eq.s32.totalorder %s30, 1
      %p322 = por %p320, %p321
      %p324 = scmp.ne.s32.totalorder %s309, %s323
      %p325 = scmp.eq.s32.totalorder %s30, 0
      %p326 = por %p324, %p325
      %s328 = sadd.s32 %s327, 1
      %p331 = scmp.eq.s32.totalorder %s24, 1
      %p332 = scmp.ne.s32.totalorder %s327, %s329
      %p333 = scmp.eq.s32.totalorder %s24, 0
      %p334 = por %p332, %p333
      %p335 = scmp.ne.s32.totalorder %s327, %s329
      %p336 = scmp.eq.s32.totalorder %s29, 1
      %p337 = por %p335, %p336
      %p338 = scmp.ne.s32.totalorder %s329, %s330
      %p339 = scmp.eq.s32.totalorder %s29, 0
      %p340 = por %p338, %p339
      %p341 = scmp.ne.s32.totalorder %s329, %s330
      %p342 = scmp.eq.s32.totalorder %s30, 1
      %p343 = por %p341, %p342
      %p345 = scmp.ne.s32.totalorder %s330, %s344
      %p346 = scmp.eq.s32.totalorder %s30, 0
      %p347 = por %p345, %p346
      %s349 = sadd.s32 %s348, 1
      %p352 = scmp.eq.s32.totalorder %s24, 1
      %p353 = scmp.ne.s32.totalorder %s348, %s350
      %p354 = scmp.eq.s32.totalorder %s24, 0
      %p355 = por %p353, %p354
      %p356 = scmp.ne.s32.totalorder %s348, %s350
      %p357 = scmp.eq.s32.totalorder %s29, 1
      %p358 = por %p356, %p357
      %p359 = scmp.ne.s32.totalorder %s350, %s351
      %p360 = scmp.eq.s32.totalorder %s29, 0
      %p361 = por %p359, %p360
      %p362 = scmp.ne.s32.totalorder %s350, %s351
      %p363 = scmp.eq.s32.totalorder %s30, 1
      %p364 = por %p362, %p363
      %p366 = scmp.ne.s32.totalorder %s351, %s365
      %p367 = scmp.eq.s32.totalorder %s30, 0
      %p368 = por %p366, %p367
      %s370 = sadd.s32 %s369, 1
      %p373 = scmp.eq.s32.totalorder %s24, 1
      %p374 = scmp.ne.s32.totalorder %s369, %s371
      %p375 = scmp.eq.s32.totalorder %s24, 0
      %p376 = por %p374, %p375
      %p377 = scmp.ne.s32.totalorder %s369, %s371
      %p378 = scmp.eq.s32.totalorder %s29, 1
      %p379 = por %p377, %p378
      %p380 = scmp.ne.s32.totalorder %s371, %s372
      %p381 = scmp.eq.s32.totalorder %s29, 0
      %p382 = por %p380, %p381
      %p383 = scmp.ne.s32.totalorder %s371, %s372
      %p384 = scmp.eq.s32.totalorder %s30, 1
      %p385 = por %p383, %p384
      %p387 = scmp.ne.s32.totalorder %s372, %s386
      %p388 = scmp.eq.s32.totalorder %s30, 0
      %p389 = por %p387, %p388
      %s390 = ssub.s32 %s31, %s43
      %s391 = ssub.s32 %s32, %s39
      %s392 = sor.u32 %s390, %s391
      %p393 = scmp.eq.s32.totalorder %s392, 0
      %s395 = sadd.s32 %s394, 1
      %s396 = scalar_select %p393, %s394, %s395
      %p399 = pneg %p393
      %p400 = scmp.eq.s32.totalorder %s24, 1
      %p401 = por %p399, %p400
      %p402 = scmp.ne.s32.totalorder %s394, %s397
      %p403 = scmp.eq.s32.totalorder %s24, 0
      %p404 = por %p402, %p403
      %p405 = scmp.ne.s32.totalorder %s394, %s397
      %p406 = scmp.eq.s32.totalorder %s29, 1
      %p407 = por %p405, %p406
      %p408 = scmp.ne.s32.totalorder %s397, %s398
      %p409 = scmp.eq.s32.totalorder %s29, 0
      %p410 = por %p408, %p409
      %p411 = scmp.ne.s32.totalorder %s397, %s398
      %p412 = scmp.eq.s32.totalorder %s30, 1
      %p413 = por %p411, %p412
      %p415 = scmp.ne.s32.totalorder %s398, %s414
      %p416 = scmp.eq.s32.totalorder %s30, 0
      %p417 = por %p415, %p416
      %p418 = scmp.le.s32.totalorder 1, %s24
      %p419 = scmp.lt.s32.totalorder %s24, 3
      %p420 = pnand %p418, %p419
      %p421 = pneg %p420
      // Predicated region
      $region9: #{encoder_forward.3} parent=5 // pred_check
        _
      $region10: #{encoder_forward.3} parent=5 // pred_check_branch
        %423 = sbr.rel (%p420) target = $region12
      $region11: #{encoder_forward.3} parent=5 // pred_region
        %s424 = ssub.s32 %s24, 1
        // Predicated region
        $region13: #{encoder_forward.3} parent=11 // pred_check
          %p425 = pneg %p193
        $region14: #{encoder_forward.3} parent=11 // pred_check_branch
          %427 = sbr.rel (%p425) target = $region16
        $region15: #{encoder_forward.3} parent=11 // pred_region
          _
        $region16: #{encoder_forward.3} parent=11 // pred_fallthru
          _
        // Predicated region
        $region17: #{encoder_forward.3} parent=11 // pred_check
          %p428 = pneg %p214
        $region18: #{encoder_forward.3} parent=11 // pred_check_branch
          %430 = sbr.rel (%p428) target = $region20
        $region19: #{encoder_forward.3} parent=11 // pred_region
          _
        $region20: #{encoder_forward.3} parent=11 // pred_fallthru
          _
        // Predicated region
        $region21: #{encoder_forward.3} parent=11 // pred_check
          %p431 = pneg %p235
        $region22: #{encoder_forward.3} parent=11 // pred_check_branch
          %433 = sbr.rel (%p431) target = $region24
        $region23: #{encoder_forward.3} parent=11 // pred_region
          _
        $region24: #{encoder_forward.3} parent=11 // pred_fallthru
          _
        // Predicated region
        $region25: #{encoder_forward.3} parent=11 // pred_check
          %p434 = pneg %p256
        $region26: #{encoder_forward.3} parent=11 // pred_check_branch
          %436 = sbr.rel (%p434) target = $region28
        $region27: #{encoder_forward.3} parent=11 // pred_region
          _
        $region28: #{encoder_forward.3} parent=11 // pred_fallthru
          _
        // Predicated region
        $region29: #{encoder_forward.3} parent=11 // pred_check
          %p437 = pneg %p277
        $region30: #{encoder_forward.3} parent=11 // pred_check_branch
          %439 = sbr.rel (%p437) target = $region32
        $region31: #{encoder_forward.3} parent=11 // pred_region
          _
        $region32: #{encoder_forward.3} parent=11 // pred_fallthru
          _
        // Predicated region
        $region33: #{encoder_forward.3} parent=11 // pred_check
          %p440 = pneg %p298
        $region34: #{encoder_forward.3} parent=11 // pred_check_branch
          %442 = sbr.rel (%p440) target = $region36
        $region35: #{encoder_forward.3} parent=11 // pred_region
          _
        $region36: #{encoder_forward.3} parent=11 // pred_fallthru
          _
        // Predicated region
        $region37: #{encoder_forward.3} parent=11 // pred_check
          %p443 = pneg %p319
        $region38: #{encoder_forward.3} parent=11 // pred_check_branch
          %445 = sbr.rel (%p443) target = $region40
        $region39: #{encoder_forward.3} parent=11 // pred_region
          _
        $region40: #{encoder_forward.3} parent=11 // pred_fallthru
          _
        // Predicated region
        $region41: #{encoder_forward.3} parent=11 // pred_check
          %p446 = pneg %p340
        $region42: #{encoder_forward.3} parent=11 // pred_check_branch
          %448 = sbr.rel (%p446) target = $region44
        $region43: #{encoder_forward.3} parent=11 // pred_region
          _
        $region44: #{encoder_forward.3} parent=11 // pred_fallthru
          _
        // Predicated region
        $region45: #{encoder_forward.3} parent=11 // pred_check
          %p449 = pneg %p361
        $region46: #{encoder_forward.3} parent=11 // pred_check_branch
          %451 = sbr.rel (%p449) target = $region48
        $region47: #{encoder_forward.3} parent=11 // pred_region
          _
        $region48: #{encoder_forward.3} parent=11 // pred_fallthru
          _
        // Predicated region
        $region49: #{encoder_forward.3} parent=11 // pred_check
          %p452 = pneg %p382
        $region50: #{encoder_forward.3} parent=11 // pred_check_branch
          %454 = sbr.rel (%p452) target = $region52
        $region51: #{encoder_forward.3} parent=11 // pred_region
          _
        $region52: #{encoder_forward.3} parent=11 // pred_fallthru
          _
      $region12: #{encoder_forward.3} parent=5 // pred_fallthru
        _
      %p455 = scmp.lt.s32.totalorder %s24, 2
      // Predicated region
      $region53: #{encoder_forward.3} parent=5 // pred_check
        %p456 = pneg %p455
      $region54: #{encoder_forward.3} parent=5 // pred_check_branch
        %458 = sbr.rel (%p456) target = $region56
      $region55: #{encoder_forward.3} parent=5 // pred_region
        // Predicated region
        $region57: #{encoder_forward.3} parent=55 // pred_check
          %p459 = pneg %p58
        $region58: #{encoder_forward.3} parent=55 // pred_check_branch
          %461 = sbr.rel (%p459) target = $region60
        $region59: #{encoder_forward.3} parent=55 // pred_region
          %s462 = smul.u32 4, %s32
          %p463 = scmp.lt.s32.totalorder %s31, 1
          %s464 = scalar_select %p463, %s31, 1
          %p465 = scmp.lt.s32.totalorder %s462, 3
          %s466 = scalar_select %p465, %s462, 3
          %s467 = smul.addr %s464, 4
          %s468 = sadd.s32 %s466, %s467
          %s469 = smul.addr %s468, 4
          %s470 = scalar_lea.vmem %s0, %s469
          %s471 = smul.u32 4, %s32
        $region60: #{encoder_forward.3} parent=55 // pred_fallthru
          _
        // Predicated region
        $region61: #{encoder_forward.3} parent=55 // pred_check
          %p472 = pneg %p86
        $region62: #{encoder_forward.3} parent=55 // pred_check_branch
          %474 = sbr.rel (%p472) target = $region64
        $region63: #{encoder_forward.3} parent=55 // pred_region
          %s475 = smul.u32 4, %s32
          %p476 = scmp.lt.s32.totalorder %s31, 1
          %s477 = scalar_select %p476, %s31, 1
          %p478 = scmp.lt.s32.totalorder %s475, 3
          %s479 = scalar_select %p478, %s475, 3
          %s480 = smul.addr %s477, 4
          %s481 = sadd.s32 %s479, %s480
          %s482 = smul.addr %s481, 4
          %s483 = scalar_lea.vmem %s1, %s482
          %s484 = smul.u32 4, %s32
        $region64: #{encoder_forward.3} parent=55 // pred_fallthru
          _
        // Predicated region
        $region65: #{encoder_forward.3} parent=55 // pred_check
          %p485 = pneg %p114
        $region66: #{encoder_forward.3} parent=55 // pred_check_branch
          %487 = sbr.rel (%p485) target = $region68
        $region67: #{encoder_forward.3} parent=55 // pred_region
          %s488 = smul.u32 4, %s32
          %p489 = scmp.lt.s32.totalorder %s31, 1
          %s490 = scalar_select %p489, %s31, 1
          %p491 = scmp.lt.s32.totalorder %s488, 3
          %s492 = scalar_select %p491, %s488, 3
          %s493 = smul.addr %s490, 16
          %s494 = sadd.s32 %s492, %s493
          %s495 = smul.addr %s494, 4
          %s496 = scalar_lea.vmem %s2, %s495
          %s497 = smul.u32 4, %s32
        $region68: #{encoder_forward.3} parent=55 // pred_fallthru
          _
        // Predicated region
        $region69: #{encoder_forward.3} parent=55 // pred_check
          %p498 = pneg %p140
        $region70: #{encoder_forward.3} parent=55 // pred_check_branch
          %500 = sbr.rel (%p498) target = $region72
        $region71: #{encoder_forward.3} parent=55 // pred_region
          %p501 = scmp.lt.s32.totalorder %s31, 1
          %s502 = scalar_select %p501, %s31, 1
          %s503 = smul.addr %s502, 16
          %s504 = smul.addr %s503, 4
          %s505 = scalar_lea.vmem %s3, %s504
        $region72: #{encoder_forward.3} parent=55 // pred_fallthru
          _
        // Predicated region
        $region73: #{encoder_forward.3} parent=55 // pred_check
          %p506 = pneg %p166
        $region74: #{encoder_forward.3} parent=55 // pred_check_branch
          %508 = sbr.rel (%p506) target = $region76
        $region75: #{encoder_forward.3} parent=55 // pred_region
          %p509 = scmp.lt.s32.totalorder %s31, 1
          %s510 = scalar_select %p509, %s31, 1
          %s511 = smul.addr %s510, 16
          %s512 = smul.addr %s511, 4
          %s513 = scalar_lea.vmem %s4, %s512
        $region76: #{encoder_forward.3} parent=55 // pred_fallthru
          _
      $region56: #{encoder_forward.3} parent=5 // pred_fallthru
        _
      %p514 = scmp.le.s32.totalorder 1, %s24
      %p515 = scmp.lt.s32.totalorder %s24, 3
      %p516 = pnand %p514, %p515
      %p517 = pneg %p516
      // Predicated region
      $region77: #{encoder_forward.3} parent=5 // pred_check
        _
      $region78: #{encoder_forward.3} parent=5 // pred_check_branch
        %519 = sbr.rel (%p516) target = $region80
      $region79: #{encoder_forward.3} parent=5 // pred_region
        %s520 = ssub.s32 %s24, 1
        %s521 = smul.u32 4, %s34
        %p522 = scmp.lt.s32.totalorder %s33, 1
        %s523 = scalar_select %p522, %s33, 1
        %p524 = scmp.lt.s32.totalorder %s521, 3
        %s525 = scalar_select %p524, %s521, 3
        %s526 = smul.addr %s523, 4
        %s527 = sadd.s32 %s525, %s526
        %s528 = smul.addr %s527, 4
        %s529 = scalar_lea.vmem %s0, %s528
        %p530 = pneg %p64
        %p531 = pneg %p61
        %s532 = smul.u32 4, %s34
        %p533 = scmp.lt.s32.totalorder %s33, 1
        %s534 = scalar_select %p533, %s33, 1
        %p535 = scmp.lt.s32.totalorder %s532, 3
        %s536 = scalar_select %p535, %s532, 3
        %s537 = smul.addr %s534, 4
        %s538 = sadd.s32 %s536, %s537
        %s539 = smul.addr %s538, 4
        %s540 = scalar_lea.vmem %s1, %s539
        %p541 = pneg %p92
        %p542 = pneg %p89
        %s543 = smul.u32 4, %s34
        %p544 = scmp.lt.s32.totalorder %s33, 1
        %s545 = scalar_select %p544, %s33, 1
        %p546 = scmp.lt.s32.totalorder %s543, 3
        %s547 = scalar_select %p546, %s543, 3
        %s548 = smul.addr %s545, 16
        %s549 = sadd.s32 %s547, %s548
        %s550 = smul.addr %s549, 4
        %s551 = scalar_lea.vmem %s2, %s550
        %p552 = pneg %p120
        %p553 = pneg %p117
        %p554 = scmp.lt.s32.totalorder %s33, 1
        %s555 = scalar_select %p554, %s33, 1
        %s556 = smul.addr %s555, 16
        %s557 = smul.addr %s556, 4
        %s558 = scalar_lea.vmem %s3, %s557
        %p559 = pneg %p146
        %p560 = pneg %p143
        %p561 = scmp.lt.s32.totalorder %s33, 1
        %s562 = scalar_select %p561, %s33, 1
        %s563 = smul.addr %s562, 16
        %s564 = smul.addr %s563, 4
        %s565 = scalar_lea.vmem %s4, %s564
        %p566 = pneg %p172
        %p567 = pneg %p169
        %p568 = pneg %p193
        %p569 = pneg %p190
        %p570 = pneg %p214
        %p571 = pneg %p211
        %p572 = pneg %p235
        %p573 = pneg %p232
        %p574 = pneg %p256
        %p575 = pneg %p253
        %p576 = pneg %p277
        %p577 = pneg %p274
        %p578 = pneg %p298
        %p579 = pneg %p295
        %p580 = pneg %p319
        %p581 = pneg %p316
        %p582 = pneg %p340
        %p583 = pneg %p337
        %p584 = pneg %p361
        %p585 = pneg %p358
        %p586 = pneg %p382
        %p587 = pneg %p379
        %p588 = pneg %p410
        %p589 = pneg %p407
        %s590 = sand.u32 %s397, 1
        %s591 = scalar_lea.sflag [#allocation3], %s590
        %s592 = sand.u32 %s397, 1
        %s593 = smul.addr %s592, 32
        %s594 = scalar_lea.vmem [#allocation2], %s593
        %s595 = smul.u32 4, %s34
        %p596 = scmp.lt.s32.totalorder %s33, 1
        %s597 = scalar_select %p596, %s33, 1
        %p598 = scmp.lt.s32.totalorder %s595, 3
        %s599 = scalar_select %p598, %s595, 3
        %s600 = smul.addr %s597, 4
        %s601 = sadd.s32 %s599, %s600
        %s602 = smul.addr %s601, 4
        %s603 = scalar_lea.vmem %s0, %s602
        %s604 = smul.u32 4, %s34
        %s605 = smul.u32 4, %s34
        %p606 = scmp.lt.s32.totalorder %s33, 1
        %s607 = scalar_select %p606, %s33, 1
        %p608 = scmp.lt.s32.totalorder %s605, 3
        %s609 = scalar_select %p608, %s605, 3
        %s610 = smul.addr %s607, 4
        %s611 = sadd.s32 %s609, %s610
        %s612 = smul.addr %s611, 4
        %s613 = scalar_lea.vmem %s1, %s612
        %s614 = smul.u32 4, %s34
        %s615 = smul.u32 4, %s34
        %p616 = scmp.lt.s32.totalorder %s33, 1
        %s617 = scalar_select %p616, %s33, 1
        %p618 = scmp.lt.s32.totalorder %s615, 3
        %s619 = scalar_select %p618, %s615, 3
        %s620 = smul.addr %s617, 16
        %s621 = sadd.s32 %s619, %s620
        %s622 = smul.addr %s621, 4
        %s623 = scalar_lea.vmem %s2, %s622
        %s624 = smul.u32 4, %s34
        %p625 = scmp.lt.s32.totalorder %s33, 1
        %s626 = scalar_select %p625, %s33, 1
        %s627 = smul.addr %s626, 16
        %s628 = smul.addr %s627, 4
        %s629 = scalar_lea.vmem %s3, %s628
        %p630 = scmp.lt.s32.totalorder %s33, 1
        %s631 = scalar_select %p630, %s33, 1
        %s632 = smul.addr %s631, 16
        %s633 = smul.addr %s632, 4
        %s634 = scalar_lea.vmem %s4, %s633
        %s635 = smul.u32 4, %s34
        %v637 = vld [vmem:[%s623] sm:$0xf]
        %v638 = vld [vmem:[%s623 + $0x4] sm:$0xf]
        %v639 = vld [vmem:[%s623 + $0x8] sm:$0xf]
        %v640 = vld [vmem:[%s623 + $0xc] sm:$0xf]
        %v641 = vld [vmem:[%s623 + $0x10] sm:$0xf]
        %v642 = vld [vmem:[%s623 + $0x14] sm:$0xf]
        %v643 = vld [vmem:[%s623 + $0x18] sm:$0xf]
        %v644 = vld [vmem:[%s623 + $0x1c] sm:$0xf]
        %v645 = vld [vmem:[%s623 + $0x20] sm:$0xf]
        %v646 = vld [vmem:[%s623 + $0x24] sm:$0xf]
        %v647 = vld [vmem:[%s623 + $0x28] sm:$0xf]
        %v648 = vld [vmem:[%s623 + $0x2c] sm:$0xf]
        %v649 = vld [vmem:[%s623 + $0x30] sm:$0xf]
        %v650 = vld [vmem:[%s623 + $0x34] sm:$0xf]
        %v651 = vld [vmem:[%s623 + $0x38] sm:$0xf]
        %v652 = vld [vmem:[%s623 + $0x3c] sm:$0xf]
        %v653 = vld [vmem:[%s629] sm:$0xf]
        %v654 = vld [vmem:[%s629 + $0x4] sm:$0xf]
        %v655 = vld [vmem:[%s629 + $0x8] sm:$0xf]
        %v656 = vld [vmem:[%s629 + $0xc] sm:$0xf]
        %v657 = vld [vmem:[%s629 + $0x10] sm:$0xf]
        %v658 = vld [vmem:[%s629 + $0x14] sm:$0xf]
        %v659 = vld [vmem:[%s629 + $0x18] sm:$0xf]
        %v660 = vld [vmem:[%s629 + $0x1c] sm:$0xf]
        %v661 = vld [vmem:[%s629 + $0x20] sm:$0xf]
        %v662 = vld [vmem:[%s629 + $0x24] sm:$0xf]
        %v663 = vld [vmem:[%s629 + $0x28] sm:$0xf]
        %v664 = vld [vmem:[%s629 + $0x2c] sm:$0xf]
        %v665 = vld [vmem:[%s629 + $0x30] sm:$0xf]
        %v666 = vld [vmem:[%s629 + $0x34] sm:$0xf]
        %v667 = vld [vmem:[%s629 + $0x38] sm:$0xf]
        %v668 = vld [vmem:[%s629 + $0x3c] sm:$0xf]
        %v669 = vld [vmem:[%s634] sm:$0xf]
        %v670 = vld [vmem:[%s634 + $0x4] sm:$0xf]
        %v671 = vld [vmem:[%s634 + $0x8] sm:$0xf]
        %v672 = vld [vmem:[%s634 + $0xc] sm:$0xf]
        %v673 = vld [vmem:[%s634 + $0x10] sm:$0xf]
        %v674 = vld [vmem:[%s634 + $0x14] sm:$0xf]
        %v675 = vld [vmem:[%s634 + $0x18] sm:$0xf]
        %v676 = vld [vmem:[%s634 + $0x1c] sm:$0xf]
        %v677 = vld [vmem:[%s634 + $0x20] sm:$0xf]
        %v678 = vld [vmem:[%s634 + $0x24] sm:$0xf]
        %v679 = vld [vmem:[%s634 + $0x28] sm:$0xf]
        %v680 = vld [vmem:[%s634 + $0x2c] sm:$0xf]
        %v681 = vld [vmem:[%s634 + $0x30] sm:$0xf]
        %v682 = vld [vmem:[%s634 + $0x34] sm:$0xf]
        %v683 = vld [vmem:[%s634 + $0x38] sm:$0xf]
        %v684 = vld [vmem:[%s634 + $0x3c] sm:$0xf]
        %v685 = vld [vmem:[%s613] sm:$0xf]
        %v686 = vld [vmem:[%s613 + $0x4] sm:$0xf]
        %v687 = vld [vmem:[%s613 + $0x8] sm:$0xf]
        %v688 = vld [vmem:[%s613 + $0xc] sm:$0xf]
        %v689 = vunpack.c.l.bf16 %v685
        %v690 = vunpack.c.l.bf16 %v686
        %v691 = vunpack.c.l.bf16 %v687
        %v692 = vunpack.c.l.bf16 %v688
        %v697 = vunpack.c.l.b16 %v637
        %v698 = vunpack.c.l.b16 %v638
        %v699 = vunpack.c.l.b16 %v639
        %v700 = vunpack.c.l.b16 %v640
        %v701 = vpack.c.b16 %v698, %v697
        %v702 = vpack.c.b16 %v700, %v699
        %v707 = vunpack.c.l.b16 %v653
        %v708 = vunpack.c.l.b16 %v654
        %v709 = vunpack.c.l.b16 %v655
        %v710 = vunpack.c.l.b16 %v656
        %v711 = vpack.c.b16 %v708, %v707
        %v712 = vpack.c.b16 %v710, %v709
        %vm713 = vcmask 261120
        %v715 = vsel %vm713, %v701, 0
        %v718 = vsel %vm713, %v702, 0
        %v721 = vsel %vm713, %v711, 0
        %v724 = vsel %vm713, %v712, 0
        %726 = vmatpush.bf16.xpose.msra.mxu0 0
        %727 = vmatpush.bf16.xpose.msra.mxu0 0
        %728 = vmatpush.bf16.xpose.msra.mxu0 0
        %729 = vmatpush.bf16.xpose.msra.mxu0 0
        %730 = vmatpush.bf16.xpose.msra.mxu0 0
        %731 = vmatpush.bf16.xpose.msra.mxu0 0
        %732 = vmatpush.bf16.xpose.msra.mxu0 %v724
        %733 = vmatpush.bf16.xpose.msra.mxu0 %v721
        %734 = vmatmul.bf16.gmra.mxu0 %v715
        %v735 = vpop.f32.mrf.mxu0
        %v736 = vadd.f32 %v689, %v735
        %v737 = vpop.f32.mrf.mxu0
        %v738 = vadd.f32 %v690, %v737
        %739 = vmatmul.bf16.gmra.mxu0 %v718
        %v740 = vpop.f32.mrf.mxu0
        %v741 = vadd.f32 %v691, %v740
        %v742 = vpop.f32.mrf.mxu0
        %v743 = vadd.f32 %v692, %v742
        %744 = vdwg.mxu0
        %v749 = vunpack.c.l.b16 %v641
        %v750 = vunpack.c.l.b16 %v642
        %v751 = vunpack.c.l.b16 %v643
        %v752 = vunpack.c.l.b16 %v644
        %v753 = vpack.c.b16 %v750, %v749
        %v754 = vpack.c.b16 %v752, %v751
        %v759 = vunpack.c.l.b16 %v657
        %v760 = vunpack.c.l.b16 %v658
        %v761 = vunpack.c.l.b16 %v659
        %v762 = vunpack.c.l.b16 %v660
        %v763 = vpack.c.b16 %v760, %v759
        %v764 = vpack.c.b16 %v762, %v761
        %v766 = vsel %vm713, %v753, 0
        %v769 = vsel %vm713, %v754, 0
        %v772 = vsel %vm713, %v763, 0
        %v775 = vsel %vm713, %v764, 0
        %777 = vmatpush.bf16.xpose.msra.mxu0 0
        %778 = vmatpush.bf16.xpose.msra.mxu0 0
        %779 = vmatpush.bf16.xpose.msra.mxu0 0
        %780 = vmatpush.bf16.xpose.msra.mxu0 0
        %781 = vmatpush.bf16.xpose.msra.mxu0 0
        %782 = vmatpush.bf16.xpose.msra.mxu0 0
        %783 = vmatpush.bf16.xpose.msra.mxu0 %v775
        %784 = vmatpush.bf16.xpose.msra.mxu0 %v772
        %785 = vmatmul.bf16.gmra.mxu0 %v766
        %v786 = vpop.f32.mrf.mxu0
        %v787 = vadd.f32 %v689, %v786
        %v788 = vpop.f32.mrf.mxu0
        %v789 = vadd.f32 %v690, %v788
        %790 = vmatmul.bf16.gmra.mxu0 %v769
        %v791 = vpop.f32.mrf.mxu0
        %v792 = vadd.f32 %v691, %v791
        %v793 = vpop.f32.mrf.mxu0
        %v794 = vadd.f32 %v692, %v793
        %795 = vdwg.mxu0
        %v800 = vunpack.c.l.b16 %v645
        %v801 = vunpack.c.l.b16 %v646
        %v802 = vunpack.c.l.b16 %v647
        %v803 = vunpack.c.l.b16 %v648
        %v804 = vpack.c.b16 %v801, %v800
        %v805 = vpack.c.b16 %v803, %v802
        %v810 = vunpack.c.l.b16 %v661
        %v811 = vunpack.c.l.b16 %v662
        %v812 = vunpack.c.l.b16 %v663
        %v813 = vunpack.c.l.b16 %v664
        %v814 = vpack.c.b16 %v811, %v810
        %v815 = vpack.c.b16 %v813, %v812
        %v817 = vsel %vm713, %v804, 0
        %v820 = vsel %vm713, %v805, 0
        %v823 = vsel %vm713, %v814, 0
        %v826 = vsel %vm713, %v815, 0
        %828 = vmatpush.bf16.xpose.msra.mxu0 0
        %829 = vmatpush.bf16.xpose.msra.mxu0 0
        %830 = vmatpush.bf16.xpose.msra.mxu0 0
        %831 = vmatpush.bf16.xpose.msra.mxu0 0
        %832 = vmatpush.bf16.xpose.msra.mxu0 0
        %833 = vmatpush.bf16.xpose.msra.mxu0 0
        %834 = vmatpush.bf16.xpose.msra.mxu0 %v826
        %835 = vmatpush.bf16.xpose.msra.mxu0 %v823
        %836 = vmatmul.bf16.gmra.mxu0 %v817
        %v837 = vpop.f32.mrf.mxu0
        %v838 = vadd.f32 %v689, %v837
        %v839 = vpop.f32.mrf.mxu0
        %v840 = vadd.f32 %v690, %v839
        %841 = vmatmul.bf16.gmra.mxu0 %v820
        %v842 = vpop.f32.mrf.mxu0
        %v843 = vadd.f32 %v691, %v842
        %v844 = vpop.f32.mrf.mxu0
        %v845 = vadd.f32 %v692, %v844
        %846 = vdwg.mxu0
        %v851 = vunpack.c.l.b16 %v649
        %v852 = vunpack.c.l.b16 %v650
        %v853 = vunpack.c.l.b16 %v651
        %v854 = vunpack.c.l.b16 %v652
        %v855 = vpack.c.b16 %v852, %v851
        %v856 = vpack.c.b16 %v854, %v853
        %v861 = vunpack.c.l.b16 %v665
        %v862 = vunpack.c.l.b16 %v666
        %v863 = vunpack.c.l.b16 %v667
        %v864 = vunpack.c.l.b16 %v668
        %v865 = vpack.c.b16 %v862, %v861
        %v866 = vpack.c.b16 %v864, %v863
        %v868 = vsel %vm713, %v855, 0
        %v871 = vsel %vm713, %v856, 0
        %v874 = vsel %vm713, %v865, 0
        %v877 = vsel %vm713, %v866, 0
        %879 = vmatpush.bf16.xpose.msra.mxu0 0
        %880 = vmatpush.bf16.xpose.msra.mxu0 0
        %881 = vmatpush.bf16.xpose.msra.mxu0 0
        %882 = vmatpush.bf16.xpose.msra.mxu0 0
        %883 = vmatpush.bf16.xpose.msra.mxu0 0
        %884 = vmatpush.bf16.xpose.msra.mxu0 0
        %885 = vmatpush.bf16.xpose.msra.mxu0 %v877
        %886 = vmatpush.bf16.xpose.msra.mxu0 %v874
        %887 = vmatmul.bf16.gmra.mxu0 %v868
        %v888 = vpop.f32.mrf.mxu0
        %v889 = vadd.f32 %v689, %v888
        %v890 = vpop.f32.mrf.mxu0
        %v891 = vadd.f32 %v690, %v890
        %892 = vmatmul.bf16.gmra.mxu0 %v871
        %v893 = vpop.f32.mrf.mxu0
        %v894 = vadd.f32 %v691, %v893
        %v895 = vpop.f32.mrf.mxu0
        %v896 = vadd.f32 %v692, %v895
        %897 = vdwg.mxu0
        %v898 = vsel %vm713, %v736, -inf
        %899 = vmax.xlane.f32.xlu0 %v898
        %v900 = vpop.xlane.xlu0 %899
        %v901 = vsel %vm713, %v738, -inf
        %902 = vmax.xlane.f32.xlu0 %v901
        %v903 = vpop.xlane.xlu0 %902
        %v904 = vsel %vm713, %v741, -inf
        %905 = vmax.xlane.f32.xlu0 %v904
        %v906 = vpop.xlane.xlu0 %905
        %v907 = vsel %vm713, %v743, -inf
        %908 = vmax.xlane.f32.xlu0 %v907
        %v909 = vpop.xlane.xlu0 %908
        %v910 = vsel %vm713, %v787, -inf
        %911 = vmax.xlane.f32.xlu0 %v910
        %v912 = vpop.xlane.xlu0 %911
        %v913 = vsel %vm713, %v789, -inf
        %914 = vmax.xlane.f32.xlu0 %v913
        %v915 = vpop.xlane.xlu0 %914
        %v916 = vsel %vm713, %v792, -inf
        %917 = vmax.xlane.f32.xlu0 %v916
        %v918 = vpop.xlane.xlu0 %917
        %v919 = vsel %vm713, %v794, -inf
        %920 = vmax.xlane.f32.xlu0 %v919
        %v921 = vpop.xlane.xlu0 %920
        %v922 = vsel %vm713, %v838, -inf
        %923 = vmax.xlane.f32.xlu0 %v922
        %v924 = vpop.xlane.xlu0 %923
        %v925 = vsel %vm713, %v840, -inf
        %926 = vmax.xlane.f32.xlu0 %v925
        %v927 = vpop.xlane.xlu0 %926
        %v928 = vsel %vm713, %v843, -inf
        %929 = vmax.xlane.f32.xlu0 %v928
        %v930 = vpop.xlane.xlu0 %929
        %v931 = vsel %vm713, %v845, -inf
        %932 = vmax.xlane.f32.xlu0 %v931
        %v933 = vpop.xlane.xlu0 %932
        %v934 = vsel %vm713, %v889, -inf
        %935 = vmax.xlane.f32.xlu0 %v934
        %v936 = vpop.xlane.xlu0 %935
        %v937 = vsel %vm713, %v891, -inf
        %938 = vmax.xlane.f32.xlu0 %v937
        %v939 = vpop.xlane.xlu0 %938
        %v940 = vsel %vm713, %v894, -inf
        %941 = vmax.xlane.f32.xlu0 %v940
        %v942 = vpop.xlane.xlu0 %941
        %v943 = vsel %vm713, %v896, -inf
        %944 = vmax.xlane.f32.xlu0 %v943
        %v945 = vpop.xlane.xlu0 %944
        %v946 = vsub.f32 %v736, %v900
        %v947 = vsub.f32 %v738, %v903
        %v948 = vsub.f32 %v741, %v906
        %v949 = vsub.f32 %v743, %v909
        %v950 = vsub.f32 %v787, %v912
        %v951 = vsub.f32 %v789, %v915
        %v952 = vsub.f32 %v792, %v918
        %v953 = vsub.f32 %v794, %v921
        %v954 = vsub.f32 %v838, %v924
        %v955 = vsub.f32 %v840, %v927
        %v956 = vsub.f32 %v843, %v930
        %v957 = vsub.f32 %v845, %v933
        %v958 = vsub.f32 %v889, %v936
        %v959 = vsub.f32 %v891, %v939
        %v960 = vsub.f32 %v894, %v942
        %v961 = vsub.f32 %v896, %v945
        %v962 = vmul.f32 %v946, 1.442695
        %v963 = vpow.pop %v962
        %v964 = vmul.f32 %v947, 1.442695
        %v965 = vpow.pop %v964
        %v966 = vmul.f32 %v948, 1.442695
        %v967 = vpow.pop %v966
        %v968 = vmul.f32 %v949, 1.442695
        %v969 = vpow.pop %v968
        %v970 = vmul.f32 %v950, 1.442695
        %v971 = vpow.pop %v970
        %v972 = vmul.f32 %v951, 1.442695
        %v973 = vpow.pop %v972
        %v974 = vmul.f32 %v952, 1.442695
        %v975 = vpow.pop %v974
        %v976 = vmul.f32 %v953, 1.442695
        %v977 = vpow.pop %v976
        %v978 = vmul.f32 %v954, 1.442695
        %v979 = vpow.pop %v978
        %v980 = vmul.f32 %v955, 1.442695
        %v981 = vpow.pop %v980
        %v982 = vmul.f32 %v956, 1.442695
        %v983 = vpow.pop %v982
        %v984 = vmul.f32 %v957, 1.442695
        %v985 = vpow.pop %v984
        %v986 = vmul.f32 %v958, 1.442695
        %v987 = vpow.pop %v986
        %v988 = vmul.f32 %v959, 1.442695
        %v989 = vpow.pop %v988
        %v990 = vmul.f32 %v960, 1.442695
        %v991 = vpow.pop %v990
        %v992 = vmul.f32 %v961, 1.442695
        %v993 = vpow.pop %v992
        %v994 = vsel %vm713, %v963, 0.0
        %995 = vadd.xlane.f32.xlu0 %v994
        %v996 = vpop.xlane.xlu0 %995
        %v997 = vsel %vm713, %v965, 0.0
        %998 = vadd.xlane.f32.xlu0 %v997
        %v999 = vpop.xlane.xlu0 %998
        %v1000 = vsel %vm713, %v967, 0.0
        %1001 = vadd.xlane.f32.xlu0 %v1000
        %v1002 = vpop.xlane.xlu0 %1001
        %v1003 = vsel %vm713, %v969, 0.0
        %1004 = vadd.xlane.f32.xlu0 %v1003
        %v1005 = vpop.xlane.xlu0 %1004
        %v1006 = vsel %vm713, %v971, 0.0
        %1007 = vadd.xlane.f32.xlu0 %v1006
        %v1008 = vpop.xlane.xlu0 %1007
        %v1009 = vsel %vm713, %v973, 0.0
        %1010 = vadd.xlane.f32.xlu0 %v1009
        %v1011 = vpop.xlane.xlu0 %1010
        %v1012 = vsel %vm713, %v975, 0.0
        %1013 = vadd.xlane.f32.xlu0 %v1012
        %v1014 = vpop.xlane.xlu0 %1013
        %v1015 = vsel %vm713, %v977, 0.0
        %1016 = vadd.xlane.f32.xlu0 %v1015
        %v1017 = vpop.xlane.xlu0 %1016
        %v1018 = vsel %vm713, %v979, 0.0
        %1019 = vadd.xlane.f32.xlu0 %v1018
        %v1020 = vpop.xlane.xlu0 %1019
        %v1021 = vsel %vm713, %v981, 0.0
        %1022 = vadd.xlane.f32.xlu0 %v1021
        %v1023 = vpop.xlane.xlu0 %1022
        %v1024 = vsel %vm713, %v983, 0.0
        %1025 = vadd.xlane.f32.xlu0 %v1024
        %v1026 = vpop.xlane.xlu0 %1025
        %v1027 = vsel %vm713, %v985, 0.0
        %1028 = vadd.xlane.f32.xlu0 %v1027
        %v1029 = vpop.xlane.xlu0 %1028
        %v1030 = vsel %vm713, %v987, 0.0
        %1031 = vadd.xlane.f32.xlu0 %v1030
        %v1032 = vpop.xlane.xlu0 %1031
        %v1033 = vsel %vm713, %v989, 0.0
        %1034 = vadd.xlane.f32.xlu0 %v1033
        %v1035 = vpop.xlane.xlu0 %1034
        %v1036 = vsel %vm713, %v991, 0.0
        %1037 = vadd.xlane.f32.xlu0 %v1036
        %v1038 = vpop.xlane.xlu0 %1037
        %v1039 = vsel %vm713, %v993, 0.0
        %1040 = vadd.xlane.f32.xlu0 %v1039
        %v1041 = vpop.xlane.xlu0 %1040
        %v1042 = vrcp.pop %v996
        %v1043 = vrcp.pop %v999
        %v1044 = vrcp.pop %v1002
        %v1045 = vrcp.pop %v1005
        %v1046 = vrcp.pop %v1008
        %v1047 = vrcp.pop %v1011
        %v1048 = vrcp.pop %v1014
        %v1049 = vrcp.pop %v1017
        %v1050 = vrcp.pop %v1020
        %v1051 = vrcp.pop %v1023
        %v1052 = vrcp.pop %v1026
        %v1053 = vrcp.pop %v1029
        %v1054 = vrcp.pop %v1032
        %v1055 = vrcp.pop %v1035
        %v1056 = vrcp.pop %v1038
        %v1057 = vrcp.pop %v1041
        %v1058 = vmul.f32 %v963, %v1042
        %v1059 = vmul.f32 %v965, %v1043
        %v1060 = vmul.f32 %v967, %v1044
        %v1061 = vmul.f32 %v969, %v1045
        %v1062 = vmul.f32 %v971, %v1046
        %v1063 = vmul.f32 %v973, %v1047
        %v1064 = vmul.f32 %v975, %v1048
        %v1065 = vmul.f32 %v977, %v1049
        %v1066 = vmul.f32 %v979, %v1050
        %v1067 = vmul.f32 %v981, %v1051
        %v1068 = vmul.f32 %v983, %v1052
        %v1069 = vmul.f32 %v985, %v1053
        %v1070 = vmul.f32 %v987, %v1054
        %v1071 = vmul.f32 %v989, %v1055
        %v1072 = vmul.f32 %v991, %v1056
        %v1073 = vmul.f32 %v993, %v1057
        %v1074 = vpack.c.bf16 %v1058, %v1058
        %v1075 = vpack.c.bf16 %v1059, %v1059
        %v1076 = vpack.c.bf16 %v1060, %v1060
        %v1077 = vpack.c.bf16 %v1061, %v1061
        %v1078 = vpack.c.bf16 %v1062, %v1062
        %v1079 = vpack.c.bf16 %v1063, %v1063
        %v1080 = vpack.c.bf16 %v1064, %v1064
        %v1081 = vpack.c.bf16 %v1065, %v1065
        %v1082 = vpack.c.bf16 %v1066, %v1066
        %v1083 = vpack.c.bf16 %v1067, %v1067
        %v1084 = vpack.c.bf16 %v1068, %v1068
        %v1085 = vpack.c.bf16 %v1069, %v1069
        %v1086 = vpack.c.bf16 %v1070, %v1070
        %v1087 = vpack.c.bf16 %v1071, %v1071
        %v1088 = vpack.c.bf16 %v1072, %v1072
        %v1089 = vpack.c.bf16 %v1073, %v1073
        %v1094 = vunpack.c.l.b16 %v1074
        %v1095 = vunpack.c.l.b16 %v1075
        %v1096 = vunpack.c.l.b16 %v1076
        %v1097 = vunpack.c.l.b16 %v1077
        %v1098 = vpack.c.b16 %v1095, %v1094
        %v1099 = vpack.c.b16 %v1097, %v1096
        %v1104 = vunpack.c.l.b16 %v669
        %v1105 = vunpack.c.l.b16 %v670
        %v1106 = vunpack.c.l.b16 %v671
        %v1107 = vunpack.c.l.b16 %v672
        %v1108 = vpack.c.b16 %v1105, %v1104
        %v1109 = vpack.c.b16 %v1107, %v1106
        %v1113 = vsel %vm713, %v1098, 0
        %v1116 = vsel %vm713, %v1099, 0
        %1118 = vmatpush.bf16.msra.mxu0 0
        %1119 = vmatpush.bf16.msra.mxu0 0
        %1120 = vmatpush.bf16.msra.mxu0 0
        %1121 = vmatpush.bf16.msra.mxu0 0
        %1122 = vmatpush.bf16.msra.mxu0 0
        %1123 = vmatpush.bf16.msra.mxu0 0
        %1124 = vmatpush.bf16.msra.mxu0 %v1109
        %1125 = vmatpush.bf16.msra.mxu0 %v1108
        %1126 = vmatmul.bf16.gmra.mxu0 %v1113
        %v1127 = vpop.f32.mrf.mxu0
        %v1128 = vadd.f32 0.0, %v1127
        %v1129 = vpop.f32.mrf.mxu0
        %v1130 = vadd.f32 0.0, %v1129
        %1131 = vmatmul.bf16.gmra.mxu0 %v1116
        %v1132 = vpop.f32.mrf.mxu0
        %v1133 = vadd.f32 0.0, %v1132
        %v1134 = vpop.f32.mrf.mxu0
        %v1135 = vadd.f32 0.0, %v1134
        %1136 = vdwg.mxu0
        %v1141 = vunpack.c.l.b16 %v1078
        %v1142 = vunpack.c.l.b16 %v1079
        %v1143 = vunpack.c.l.b16 %v1080
        %v1144 = vunpack.c.l.b16 %v1081
        %v1145 = vpack.c.b16 %v1142, %v1141
        %v1146 = vpack.c.b16 %v1144, %v1143
        %v1151 = vunpack.c.l.b16 %v673
        %v1152 = vunpack.c.l.b16 %v674
        %v1153 = vunpack.c.l.b16 %v675
        %v1154 = vunpack.c.l.b16 %v676
        %v1155 = vpack.c.b16 %v1152, %v1151
        %v1156 = vpack.c.b16 %v1154, %v1153
        %v1160 = vsel %vm713, %v1145, 0
        %v1163 = vsel %vm713, %v1146, 0
        %1165 = vmatpush.bf16.msra.mxu0 0
        %1166 = vmatpush.bf16.msra.mxu0 0
        %1167 = vmatpush.bf16.msra.mxu0 0
        %1168 = vmatpush.bf16.msra.mxu0 0
        %1169 = vmatpush.bf16.msra.mxu0 0
        %1170 = vmatpush.bf16.msra.mxu0 0
        %1171 = vmatpush.bf16.msra.mxu0 %v1156
        %1172 = vmatpush.bf16.msra.mxu0 %v1155
        %1173 = vmatmul.bf16.gmra.mxu0 %v1160
        %v1174 = vpop.f32.mrf.mxu0
        %v1175 = vadd.f32 0.0, %v1174
        %v1176 = vpop.f32.mrf.mxu0
        %v1177 = vadd.f32 0.0, %v1176
        %1178 = vmatmul.bf16.gmra.mxu0 %v1163
        %v1179 = vpop.f32.mrf.mxu0
        %v1180 = vadd.f32 0.0, %v1179
        %v1181 = vpop.f32.mrf.mxu0
        %v1182 = vadd.f32 0.0, %v1181
        %1183 = vdwg.mxu0
        %v1188 = vunpack.c.l.b16 %v1082
        %v1189 = vunpack.c.l.b16 %v1083
        %v1190 = vunpack.c.l.b16 %v1084
        %v1191 = vunpack.c.l.b16 %v1085
        %v1192 = vpack.c.b16 %v1189, %v1188
        %v1193 = vpack.c.b16 %v1191, %v1190
        %v1198 = vunpack.c.l.b16 %v677
        %v1199 = vunpack.c.l.b16 %v678
        %v1200 = vunpack.c.l.b16 %v679
        %v1201 = vunpack.c.l.b16 %v680
        %v1202 = vpack.c.b16 %v1199, %v1198
        %v1203 = vpack.c.b16 %v1201, %v1200
        %v1207 = vsel %vm713, %v1192, 0
        %v1210 = vsel %vm713, %v1193, 0
        %1212 = vmatpush.bf16.msra.mxu0 0
        %1213 = vmatpush.bf16.msra.mxu0 0
        %1214 = vmatpush.bf16.msra.mxu0 0
        %1215 = vmatpush.bf16.msra.mxu0 0
        %1216 = vmatpush.bf16.msra.mxu0 0
        %1217 = vmatpush.bf16.msra.mxu0 0
        %1218 = vmatpush.bf16.msra.mxu0 %v1203
        %1219 = vmatpush.bf16.msra.mxu0 %v1202
        %1220 = vmatmul.bf16.gmra.mxu0 %v1207
        %v1221 = vpop.f32.mrf.mxu0
        %v1222 = vadd.f32 0.0, %v1221
        %v1223 = vpop.f32.mrf.mxu0
        %v1224 = vadd.f32 0.0, %v1223
        %1225 = vmatmul.bf16.gmra.mxu0 %v1210
        %v1226 = vpop.f32.mrf.mxu0
        %v1227 = vadd.f32 0.0, %v1226
        %v1228 = vpop.f32.mrf.mxu0
        %v1229 = vadd.f32 0.0, %v1228
        %1230 = vdwg.mxu0
        %v1235 = vunpack.c.l.b16 %v1086
        %v1236 = vunpack.c.l.b16 %v1087
        %v1237 = vunpack.c.l.b16 %v1088
        %v1238 = vunpack.c.l.b16 %v1089
        %v1239 = vpack.c.b16 %v1236, %v1235
        %v1240 = vpack.c.b16 %v1238, %v1237
        %v1245 = vunpack.c.l.b16 %v681
        %v1246 = vunpack.c.l.b16 %v682
        %v1247 = vunpack.c.l.b16 %v683
        %v1248 = vunpack.c.l.b16 %v684
        %v1249 = vpack.c.b16 %v1246, %v1245
        %v1250 = vpack.c.b16 %v1248, %v1247
        %v1254 = vsel %vm713, %v1239, 0
        %v1257 = vsel %vm713, %v1240, 0
        %1259 = vmatpush.bf16.msra.mxu0 0
        %1260 = vmatpush.bf16.msra.mxu0 0
        %1261 = vmatpush.bf16.msra.mxu0 0
        %1262 = vmatpush.bf16.msra.mxu0 0
        %1263 = vmatpush.bf16.msra.mxu0 0
        %1264 = vmatpush.bf16.msra.mxu0 0
        %1265 = vmatpush.bf16.msra.mxu0 %v1250
        %1266 = vmatpush.bf16.msra.mxu0 %v1249
        %1267 = vmatmul.bf16.gmra.mxu0 %v1254
        %v1268 = vpop.f32.mrf.mxu0
        %v1269 = vadd.f32 0.0, %v1268
        %v1270 = vpop.f32.mrf.mxu0
        %v1271 = vadd.f32 0.0, %v1270
        %1272 = vmatmul.bf16.gmra.mxu0 %v1257
        %v1273 = vpop.f32.mrf.mxu0
        %v1274 = vadd.f32 0.0, %v1273
        %v1275 = vpop.f32.mrf.mxu0
        %v1276 = vadd.f32 0.0, %v1275
        %1277 = vdwg.mxu0
        %v1278 = vpack.c.bf16 %v1128, %v1128
        %v1279 = vpack.c.bf16 %v1130, %v1130
        %v1280 = vpack.c.bf16 %v1133, %v1133
        %v1281 = vpack.c.bf16 %v1135, %v1135
        %v1282 = vpack.c.bf16 %v1175, %v1175
        %v1283 = vpack.c.bf16 %v1177, %v1177
        %v1284 = vpack.c.bf16 %v1180, %v1180
        %v1285 = vpack.c.bf16 %v1182, %v1182
        %v1286 = vpack.c.bf16 %v1222, %v1222
        %v1287 = vpack.c.bf16 %v1224, %v1224
        %v1288 = vpack.c.bf16 %v1227, %v1227
        %v1289 = vpack.c.bf16 %v1229, %v1229
        %v1290 = vpack.c.bf16 %v1269, %v1269
        %v1291 = vpack.c.bf16 %v1271, %v1271
        %v1292 = vpack.c.bf16 %v1274, %v1274
        %v1293 = vpack.c.bf16 %v1276, %v1276
        %v1294 = vld [vmem:[%s5] sm:$0xf]
        %v1295 = vld [vmem:[%s5 + $0x4] sm:$0xf]
        %v1296 = vld [vmem:[%s5 + $0x8] sm:$0xf]
        %v1297 = vld [vmem:[%s5 + $0xc] sm:$0xf]
        %v1298 = vld [vmem:[%s5 + $0x10] sm:$0xf]
        %v1299 = vld [vmem:[%s5 + $0x14] sm:$0xf]
        %v1300 = vld [vmem:[%s5 + $0x18] sm:$0xf]
        %v1301 = vld [vmem:[%s5 + $0x1c] sm:$0xf]
        %v1302 = vld [vmem:[%s5 + $0x20] sm:$0xf]
        %v1303 = vld [vmem:[%s5 + $0x24] sm:$0xf]
        %v1304 = vld [vmem:[%s5 + $0x28] sm:$0xf]
        %v1305 = vld [vmem:[%s5 + $0x2c] sm:$0xf]
        %v1306 = vld [vmem:[%s5 + $0x30] sm:$0xf]
        %v1307 = vld [vmem:[%s5 + $0x34] sm:$0xf]
        %v1308 = vld [vmem:[%s5 + $0x38] sm:$0xf]
        %v1309 = vld [vmem:[%s5 + $0x3c] sm:$0xf]
        %v1314 = vunpack.c.l.b16 %v1278
        %v1315 = vunpack.c.l.b16 %v1279
        %v1316 = vunpack.c.l.b16 %v1280
        %v1317 = vunpack.c.l.b16 %v1281
        %v1318 = vpack.c.b16 %v1315, %v1314
        %v1319 = vpack.c.b16 %v1317, %v1316
        %v1324 = vunpack.c.l.b16 %v1294
        %v1325 = vunpack.c.l.b16 %v1295
        %v1326 = vunpack.c.l.b16 %v1296
        %v1327 = vunpack.c.l.b16 %v1297
        %v1328 = vpack.c.b16 %v1325, %v1324
        %v1329 = vpack.c.b16 %v1327, %v1326
        %v1333 = vsel %vm713, %v1318, 0
        %v1336 = vsel %vm713, %v1319, 0
        %1338 = vmatpush.bf16.msra.mxu0 0
        %1339 = vmatpush.bf16.msra.mxu0 0
        %1340 = vmatpush.bf16.msra.mxu0 0
        %1341 = vmatpush.bf16.msra.mxu0 0
        %1342 = vmatpush.bf16.msra.mxu0 0
        %1343 = vmatpush.bf16.msra.mxu0 0
        %1344 = vmatpush.bf16.msra.mxu0 %v1329
        %1345 = vmatpush.bf16.msra.mxu0 %v1328
        %1346 = vmatmul.bf16.gmra.mxu0 %v1333
        %v1347 = vpop.f32.mrf.mxu0
        %v1348 = vadd.f32 0.0, %v1347
        %v1349 = vpop.f32.mrf.mxu0
        %v1350 = vadd.f32 0.0, %v1349
        %1351 = vmatmul.bf16.gmra.mxu0 %v1336
        %v1352 = vpop.f32.mrf.mxu0
        %v1353 = vadd.f32 0.0, %v1352
        %v1354 = vpop.f32.mrf.mxu0
        %v1355 = vadd.f32 0.0, %v1354
        %1356 = vdwg.mxu0
        %v1361 = vunpack.c.l.b16 %v1282
        %v1362 = vunpack.c.l.b16 %v1283
        %v1363 = vunpack.c.l.b16 %v1284
        %v1364 = vunpack.c.l.b16 %v1285
        %v1365 = vpack.c.b16 %v1362, %v1361
        %v1366 = vpack.c.b16 %v1364, %v1363
        %v1371 = vunpack.c.l.b16 %v1298
        %v1372 = vunpack.c.l.b16 %v1299
        %v1373 = vunpack.c.l.b16 %v1300
        %v1374 = vunpack.c.l.b16 %v1301
        %v1375 = vpack.c.b16 %v1372, %v1371
        %v1376 = vpack.c.b16 %v1374, %v1373
        %v1380 = vsel %vm713, %v1365, 0
        %v1383 = vsel %vm713, %v1366, 0
        %1385 = vmatpush.bf16.msra.mxu0 0
        %1386 = vmatpush.bf16.msra.mxu0 0
        %1387 = vmatpush.bf16.msra.mxu0 0
        %1388 = vmatpush.bf16.msra.mxu0 0
        %1389 = vmatpush.bf16.msra.mxu0 0
        %1390 = vmatpush.bf16.msra.mxu0 0
        %1391 = vmatpush.bf16.msra.mxu0 %v1376
        %1392 = vmatpush.bf16.msra.mxu0 %v1375
        %1393 = vmatmul.bf16.gmra.mxu0 %v1380
        %v1394 = vpop.f32.mrf.mxu0
        %v1395 = vadd.f32 0.0, %v1394
        %v1396 = vpop.f32.mrf.mxu0
        %v1397 = vadd.f32 0.0, %v1396
        %1398 = vmatmul.bf16.gmra.mxu0 %v1383
        %v1399 = vpop.f32.mrf.mxu0
        %v1400 = vadd.f32 0.0, %v1399
        %v1401 = vpop.f32.mrf.mxu0
        %v1402 = vadd.f32 0.0, %v1401
        %1403 = vdwg.mxu0
        %v1408 = vunpack.c.l.b16 %v1286
        %v1409 = vunpack.c.l.b16 %v1287
        %v1410 = vunpack.c.l.b16 %v1288
        %v1411 = vunpack.c.l.b16 %v1289
        %v1412 = vpack.c.b16 %v1409, %v1408
        %v1413 = vpack.c.b16 %v1411, %v1410
        %v1418 = vunpack.c.l.b16 %v1302
        %v1419 = vunpack.c.l.b16 %v1303
        %v1420 = vunpack.c.l.b16 %v1304
        %v1421 = vunpack.c.l.b16 %v1305
        %v1422 = vpack.c.b16 %v1419, %v1418
        %v1423 = vpack.c.b16 %v1421, %v1420
        %v1427 = vsel %vm713, %v1412, 0
        %v1430 = vsel %vm713, %v1413, 0
        %1432 = vmatpush.bf16.msra.mxu0 0
        %1433 = vmatpush.bf16.msra.mxu0 0
        %1434 = vmatpush.bf16.msra.mxu0 0
        %1435 = vmatpush.bf16.msra.mxu0 0
        %1436 = vmatpush.bf16.msra.mxu0 0
        %1437 = vmatpush.bf16.msra.mxu0 0
        %1438 = vmatpush.bf16.msra.mxu0 %v1423
        %1439 = vmatpush.bf16.msra.mxu0 %v1422
        %1440 = vmatmul.bf16.gmra.mxu0 %v1427
        %v1441 = vpop.f32.mrf.mxu0
        %v1442 = vadd.f32 0.0, %v1441
        %v1443 = vpop.f32.mrf.mxu0
        %v1444 = vadd.f32 0.0, %v1443
        %1445 = vmatmul.bf16.gmra.mxu0 %v1430
        %v1446 = vpop.f32.mrf.mxu0
        %v1447 = vadd.f32 0.0, %v1446
        %v1448 = vpop.f32.mrf.mxu0
        %v1449 = vadd.f32 0.0, %v1448
        %1450 = vdwg.mxu0
        %v1455 = vunpack.c.l.b16 %v1290
        %v1456 = vunpack.c.l.b16 %v1291
        %v1457 = vunpack.c.l.b16 %v1292
        %v1458 = vunpack.c.l.b16 %v1293
        %v1459 = vpack.c.b16 %v1456, %v1455
        %v1460 = vpack.c.b16 %v1458, %v1457
        %v1465 = vunpack.c.l.b16 %v1306
        %v1466 = vunpack.c.l.b16 %v1307
        %v1467 = vunpack.c.l.b16 %v1308
        %v1468 = vunpack.c.l.b16 %v1309
        %v1469 = vpack.c.b16 %v1466, %v1465
        %v1470 = vpack.c.b16 %v1468, %v1467
        %v1474 = vsel %vm713, %v1459, 0
        %v1477 = vsel %vm713, %v1460, 0
        %1479 = vmatpush.bf16.msra.mxu0 0
        %1480 = vmatpush.bf16.msra.mxu0 0
        %1481 = vmatpush.bf16.msra.mxu0 0
        %1482 = vmatpush.bf16.msra.mxu0 0
        %1483 = vmatpush.bf16.msra.mxu0 0
        %1484 = vmatpush.bf16.msra.mxu0 0
        %1485 = vmatpush.bf16.msra.mxu0 %v1470
        %1486 = vmatpush.bf16.msra.mxu0 %v1469
        %1487 = vmatmul.bf16.gmra.mxu0 %v1474
        %v1488 = vpop.f32.mrf.mxu0
        %v1489 = vadd.f32 0.0, %v1488
        %v1490 = vpop.f32.mrf.mxu0
        %v1491 = vadd.f32 0.0, %v1490
        %1492 = vmatmul.bf16.gmra.mxu0 %v1477
        %v1493 = vpop.f32.mrf.mxu0
        %v1494 = vadd.f32 0.0, %v1493
        %v1495 = vpop.f32.mrf.mxu0
        %v1496 = vadd.f32 0.0, %v1495
        %1497 = vdwg.mxu0
        %v1498 = vadd.f32 %v1348, %v1395
        %v1499 = vadd.f32 %v1498, %v1442
        %v1500 = vadd.f32 %v1499, %v1489
        %v1501 = vadd.f32 %v1350, %v1397
        %v1502 = vadd.f32 %v1501, %v1444
        %v1503 = vadd.f32 %v1502, %v1491
        %v1504 = vadd.f32 %v1353, %v1400
        %v1505 = vadd.f32 %v1504, %v1447
        %v1506 = vadd.f32 %v1505, %v1494
        %v1507 = vadd.f32 %v1355, %v1402
        %v1508 = vadd.f32 %v1507, %v1449
        %v1509 = vadd.f32 %v1508, %v1496
        %v1510 = vld [vmem:[%s6] sm:$0x1]
        %v1512 = vperm.slane %v1510, 0
        %v1514 = vadd.f32 %v1500, %v1512
        %v1515 = vadd.f32 %v1503, %v1512
        %v1516 = vadd.f32 %v1506, %v1512
        %v1517 = vadd.f32 %v1509, %v1512
        %v1518 = vld [vmem:[%s603] sm:$0xf]
        %v1519 = vld [vmem:[%s603 + $0x4] sm:$0xf]
        %v1520 = vld [vmem:[%s603 + $0x8] sm:$0xf]
        %v1521 = vld [vmem:[%s603 + $0xc] sm:$0xf]
        %v1522 = vunpack.c.l.bf16 %v1518
        %v1523 = vunpack.c.l.bf16 %v1519
        %v1524 = vunpack.c.l.bf16 %v1520
        %v1525 = vunpack.c.l.bf16 %v1521
        %v1526 = vadd.f32 %v1522, %v1514
        %v1527 = vadd.f32 %v1523, %v1515
        %v1528 = vadd.f32 %v1524, %v1516
        %v1529 = vadd.f32 %v1525, %v1517
        %v1530 = vld [vmem:[%s7] sm:$0x1]
        %v1531 = vld [vmem:[%s8] sm:$0x1]
        %1532 = vadd.xlane.f32.xlu0 %v1526
        %v1533 = vpop.xlane.xlu0 %1532
        %1534 = vadd.xlane.f32.xlu0 %v1527
        %v1535 = vpop.xlane.xlu0 %1534
        %1536 = vadd.xlane.f32.xlu0 %v1528
        %v1537 = vpop.xlane.xlu0 %1536
        %1538 = vadd.xlane.f32.xlu0 %v1529
        %v1539 = vpop.xlane.xlu0 %1538
        %v1540 = vrcp.pop 128.0
        %v1541 = vmul.f32 128.0, %v1540
        %v1542 = vsub.f32 1.0, %v1541
        %v1543 = vmul.f32 %v1540, %v1542
        %v1544 = vadd.f32 %v1540, %v1543
        %vm1545 = vweird.f32 %v1540
        %v1546 = vsel %vm1545, %v1540, %v1544
        %v1547 = vmul.f32 %v1533, %v1546
        %v1548 = vmul.f32 %v1535, %v1546
        %v1549 = vmul.f32 %v1537, %v1546
        %v1550 = vmul.f32 %v1539, %v1546
        %v1551 = vsub.f32 %v1526, %v1547
        %v1552 = vsub.f32 %v1527, %v1548
        %v1553 = vsub.f32 %v1528, %v1549
        %v1554 = vsub.f32 %v1529, %v1550
        %v1555 = vmul.f32 %v1551, %v1551
        %v1556 = vmul.f32 %v1552, %v1552
        %v1557 = vmul.f32 %v1553, %v1553
        %v1558 = vmul.f32 %v1554, %v1554
        %1559 = vadd.xlane.f32.xlu0 %v1555
        %v1560 = vpop.xlane.xlu0 %1559
        %1561 = vadd.xlane.f32.xlu0 %v1556
        %v1562 = vpop.xlane.xlu0 %1561
        %1563 = vadd.xlane.f32.xlu0 %v1557
        %v1564 = vpop.xlane.xlu0 %1563
        %1565 = vadd.xlane.f32.xlu0 %v1558
        %v1566 = vpop.xlane.xlu0 %1565
        %v1567 = vmul.f32 %v1560, %v1546
        %v1568 = vmul.f32 %v1562, %v1546
        %v1569 = vmul.f32 %v1564, %v1546
        %v1570 = vmul.f32 %v1566, %v1546
        %v1571 = vadd.f32 %v1567, 1e-05
        %v1572 = vadd.f32 %v1568, 1e-05
        %v1573 = vadd.f32 %v1569, 1e-05
        %v1574 = vadd.f32 %v1570, 1e-05
        %v1575 = vrsqrt.pop %v1571
        %v1576 = vmul.f32 %v1575, %v1571
        %v1577 = vmul.f32 %v1576, %v1575
        %v1578 = vmul.f32 0.5, %v1577
        %v1579 = vsub.f32 1.5, %v1578
        %v1580 = vmul.f32 %v1575, %v1579
        %vm1581 = vweird.f32 %v1571
        %vm1582 = vweird.f32 %v1575
        %vm1583 = vmor %vm1581, %vm1582
        %v1584 = vsel %vm1583, %v1575, %v1580
        %v1585 = vrsqrt.pop %v1572
        %v1586 = vmul.f32 %v1585, %v1572
        %v1587 = vmul.f32 %v1586, %v1585
        %v1588 = vmul.f32 0.5, %v1587
        %v1589 = vsub.f32 1.5, %v1588
        %v1590 = vmul.f32 %v1585, %v1589
        %vm1591 = vweird.f32 %v1572
        %vm1592 = vweird.f32 %v1585
        %vm1593 = vmor %vm1591, %vm1592
        %v1594 = vsel %vm1593, %v1585, %v1590
        %v1595 = vrsqrt.pop %v1573
        %v1596 = vmul.f32 %v1595, %v1573
        %v1597 = vmul.f32 %v1596, %v1595
        %v1598 = vmul.f32 0.5, %v1597
        %v1599 = vsub.f32 1.5, %v1598
        %v1600 = vmul.f32 %v1595, %v1599
        %vm1601 = vweird.f32 %v1573
        %vm1602 = vweird.f32 %v1595
        %vm1603 = vmor %vm1601, %vm1602
        %v1604 = vsel %vm1603, %v1595, %v1600
        %v1605 = vrsqrt.pop %v1574
        %v1606 = vmul.f32 %v1605, %v1574
        %v1607 = vmul.f32 %v1606, %v1605
        %v1608 = vmul.f32 0.5, %v1607
        %v1609 = vsub.f32 1.5, %v1608
        %v1610 = vmul.f32 %v1605, %v1609
        %vm1611 = vweird.f32 %v1574
        %vm1612 = vweird.f32 %v1605
        %vm1613 = vmor %vm1611, %vm1612
        %v1614 = vsel %vm1613, %v1605, %v1610
        %v1615 = vmul.f32 %v1551, %v1584
        %v1616 = vmul.f32 %v1552, %v1594
        %v1617 = vmul.f32 %v1553, %v1604
        %v1618 = vmul.f32 %v1554, %v1614
        %v1620 = vperm.slane %v1530, 0
        %v1622 = vmul.f32 %v1615, %v1620
        %v1623 = vmul.f32 %v1616, %v1620
        %v1624 = vmul.f32 %v1617, %v1620
        %v1625 = vmul.f32 %v1618, %v1620
        %v1627 = vperm.slane %v1531, 0
        %v1629 = vadd.f32 %v1622, %v1627
        %v1630 = vadd.f32 %v1623, %v1627
        %v1631 = vadd.f32 %v1624, %v1627
        %v1632 = vadd.f32 %v1625, %v1627
        %v1633 = vpack.c.bf16 %v1630, %v1629
        %v1634 = vpack.c.bf16 %v1632, %v1631
        %v1635 = vld [vmem:[%s9] sm:$0xff]
        %v1636 = vld [vmem:[%s9 + $0x8] sm:$0xff]
        %v1637 = vld [vmem:[%s9 + $0x10] sm:$0xff]
        %v1638 = vld [vmem:[%s9 + $0x18] sm:$0xff]
        %v1639 = vld [vmem:[%s9 + $0x20] sm:$0xff]
        %v1640 = vld [vmem:[%s9 + $0x28] sm:$0xff]
        %v1641 = vld [vmem:[%s9 + $0x30] sm:$0xff]
        %v1642 = vld [vmem:[%s9 + $0x38] sm:$0xff]
        %v1643 = vld [vmem:[%s9 + $0x40] sm:$0xff]
        %v1644 = vld [vmem:[%s9 + $0x48] sm:$0xff]
        %v1645 = vld [vmem:[%s9 + $0x50] sm:$0xff]
        %v1646 = vld [vmem:[%s9 + $0x58] sm:$0xff]
        %v1647 = vld [vmem:[%s9 + $0x60] sm:$0xff]
        %v1648 = vld [vmem:[%s9 + $0x68] sm:$0xff]
        %v1649 = vld [vmem:[%s9 + $0x70] sm:$0xff]
        %v1650 = vld [vmem:[%s9 + $0x78] sm:$0xff]
        %v1651 = vld [vmem:[%s10] sm:$0x3]
        %v1653 = vperm.slane %v1651, 0
        %v1654 = vperm.slane %v1651, 1
        %v1673 = vunpack.c.l.b16 %v1635
        %v1674 = vunpack.c.h.b16 %v1635
        %v1675 = vunpack.c.l.b16 %v1636
        %v1676 = vunpack.c.h.b16 %v1636
        %v1677 = vunpack.c.l.b16 %v1637
        %v1678 = vunpack.c.h.b16 %v1637
        %v1679 = vunpack.c.l.b16 %v1638
        %v1680 = vunpack.c.h.b16 %v1638
        %v1681 = vunpack.c.l.b16 %v1639
        %v1682 = vunpack.c.h.b16 %v1639
        %v1683 = vunpack.c.l.b16 %v1640
        %v1684 = vunpack.c.h.b16 %v1640
        %v1685 = vunpack.c.l.b16 %v1641
        %v1686 = vunpack.c.h.b16 %v1641
        %v1687 = vunpack.c.l.b16 %v1642
        %v1688 = vunpack.c.h.b16 %v1642
        %v1689 = vunpack.c.l.b16 %v1643
        %v1690 = vunpack.c.h.b16 %v1643
        %v1691 = vunpack.c.l.b16 %v1644
        %v1692 = vunpack.c.h.b16 %v1644
        %v1693 = vunpack.c.l.b16 %v1645
        %v1694 = vunpack.c.h.b16 %v1645
        %v1695 = vunpack.c.l.b16 %v1646
        %v1696 = vunpack.c.h.b16 %v1646
        %v1697 = vunpack.c.l.b16 %v1647
        %v1698 = vunpack.c.h.b16 %v1647
        %v1699 = vunpack.c.l.b16 %v1648
        %v1700 = vunpack.c.h.b16 %v1648
        %v1701 = vunpack.c.l.b16 %v1649
        %v1702 = vunpack.c.h.b16 %v1649
        %v1703 = vunpack.c.l.b16 %v1650
        %v1704 = vunpack.c.h.b16 %v1650
        %v1705 = vpack.c.b16 %v1675, %v1673
        %v1706 = vpack.c.b16 %v1676, %v1674
        %v1707 = vpack.c.b16 %v1679, %v1677
        %v1708 = vpack.c.b16 %v1680, %v1678
        %v1709 = vpack.c.b16 %v1683, %v1681
        %v1710 = vpack.c.b16 %v1684, %v1682
        %v1711 = vpack.c.b16 %v1687, %v1685
        %v1712 = vpack.c.b16 %v1688, %v1686
        %v1713 = vpack.c.b16 %v1691, %v1689
        %v1714 = vpack.c.b16 %v1692, %v1690
        %v1715 = vpack.c.b16 %v1695, %v1693
        %v1716 = vpack.c.b16 %v1696, %v1694
        %v1717 = vpack.c.b16 %v1699, %v1697
        %v1718 = vpack.c.b16 %v1700, %v1698
        %v1719 = vpack.c.b16 %v1703, %v1701
        %v1720 = vpack.c.b16 %v1704, %v1702
        %1737 = vmatpush.bf16.msra.mxu0 %v1719
        %1738 = vmatpush.bf16.msra.mxu0 %v1717
        %1739 = vmatpush.bf16.msra.mxu0 %v1715
        %1740 = vmatpush.bf16.msra.mxu0 %v1713
        %1741 = vmatpush.bf16.msra.mxu0 %v1711
        %1742 = vmatpush.bf16.msra.mxu0 %v1709
        %1743 = vmatpush.bf16.msra.mxu0 %v1707
        %1744 = vmatpush.bf16.msra.mxu0 %v1705
        %1745 = vmatmul.bf16.gmra.mxu0 %v1633
        %v1746 = vpop.f32.mrf.mxu0
        %v1747 = vadd.f32 %v1653, %v1746
        %v1748 = vpop.f32.mrf.mxu0
        %v1749 = vadd.f32 %v1653, %v1748
        %1750 = vmatmul.bf16.gmra.mxu0 %v1634
        %v1751 = vpop.f32.mrf.mxu0
        %v1752 = vadd.f32 %v1653, %v1751
        %v1753 = vpop.f32.mrf.mxu0
        %v1754 = vadd.f32 %v1653, %v1753
        %1755 = vdwg.mxu0
        %1756 = vmatpush.bf16.msra.mxu0 %v1720
        %1757 = vmatpush.bf16.msra.mxu0 %v1718
        %1758 = vmatpush.bf16.msra.mxu0 %v1716
        %1759 = vmatpush.bf16.msra.mxu0 %v1714
        %1760 = vmatpush.bf16.msra.mxu0 %v1712
        %1761 = vmatpush.bf16.msra.mxu0 %v1710
        %1762 = vmatpush.bf16.msra.mxu0 %v1708
        %1763 = vmatpush.bf16.msra.mxu0 %v1706
        %1764 = vmatmul.bf16.gmra.mxu0 %v1633
        %v1765 = vpop.f32.mrf.mxu0
        %v1766 = vadd.f32 %v1654, %v1765
        %v1767 = vpop.f32.mrf.mxu0
        %v1768 = vadd.f32 %v1654, %v1767
        %1769 = vmatmul.bf16.gmra.mxu0 %v1634
        %v1770 = vpop.f32.mrf.mxu0
        %v1771 = vadd.f32 %v1654, %v1770
        %v1772 = vpop.f32.mrf.mxu0
        %v1773 = vadd.f32 %v1654, %v1772
        %1774 = vdwg.mxu0
        %v1775 = vmax.f32 %v1747, 0.0
        %v1776 = vmax.f32 %v1766, 0.0
        %v1777 = vmax.f32 %v1749, 0.0
        %v1778 = vmax.f32 %v1768, 0.0
        %v1779 = vmax.f32 %v1752, 0.0
        %v1780 = vmax.f32 %v1771, 0.0
        %v1781 = vmax.f32 %v1754, 0.0
        %v1782 = vmax.f32 %v1773, 0.0
        %v1783 = vpack.c.bf16 %v1777, %v1775
        %v1784 = vpack.c.bf16 %v1778, %v1776
        %v1785 = vpack.c.bf16 %v1781, %v1779
        %v1786 = vpack.c.bf16 %v1782, %v1780
        %v1787 = vld [vmem:[%s11] sm:$0xf]
        %v1788 = vld [vmem:[%s11 + $0x4] sm:$0xf]
        %v1789 = vld [vmem:[%s11 + $0x8] sm:$0xf]
        %v1790 = vld [vmem:[%s11 + $0xc] sm:$0xf]
        %v1791 = vld [vmem:[%s11 + $0x10] sm:$0xf]
        %v1792 = vld [vmem:[%s11 + $0x14] sm:$0xf]
        %v1793 = vld [vmem:[%s11 + $0x18] sm:$0xf]
        %v1794 = vld [vmem:[%s11 + $0x1c] sm:$0xf]
        %v1795 = vld [vmem:[%s11 + $0x20] sm:$0xf]
        %v1796 = vld [vmem:[%s11 + $0x24] sm:$0xf]
        %v1797 = vld [vmem:[%s11 + $0x28] sm:$0xf]
        %v1798 = vld [vmem:[%s11 + $0x2c] sm:$0xf]
        %v1799 = vld [vmem:[%s11 + $0x30] sm:$0xf]
        %v1800 = vld [vmem:[%s11 + $0x34] sm:$0xf]
        %v1801 = vld [vmem:[%s11 + $0x38] sm:$0xf]
        %v1802 = vld [vmem:[%s11 + $0x3c] sm:$0xf]
        %v1803 = vld [vmem:[%s11 + $0x40] sm:$0xf]
        %v1804 = vld [vmem:[%s11 + $0x44] sm:$0xf]
        %v1805 = vld [vmem:[%s11 + $0x48] sm:$0xf]
        %v1806 = vld [vmem:[%s11 + $0x4c] sm:$0xf]
        %v1807 = vld [vmem:[%s11 + $0x50] sm:$0xf]
        %v1808 = vld [vmem:[%s11 + $0x54] sm:$0xf]
        %v1809 = vld [vmem:[%s11 + $0x58] sm:$0xf]
        %v1810 = vld [vmem:[%s11 + $0x5c] sm:$0xf]
        %v1811 = vld [vmem:[%s11 + $0x60] sm:$0xf]
        %v1812 = vld [vmem:[%s11 + $0x64] sm:$0xf]
        %v1813 = vld [vmem:[%s11 + $0x68] sm:$0xf]
        %v1814 = vld [vmem:[%s11 + $0x6c] sm:$0xf]
        %v1815 = vld [vmem:[%s11 + $0x70] sm:$0xf]
        %v1816 = vld [vmem:[%s11 + $0x74] sm:$0xf]
        %v1817 = vld [vmem:[%s11 + $0x78] sm:$0xf]
        %v1818 = vld [vmem:[%s11 + $0x7c] sm:$0xf]
        %v1819 = vld [vmem:[%s12] sm:$0x1]
        %v1821 = vperm.slane %v1819, 0
        %v1855 = vunpack.c.l.b16 %v1787
        %v1856 = vunpack.c.l.b16 %v1788
        %v1857 = vunpack.c.l.b16 %v1789
        %v1858 = vunpack.c.l.b16 %v1790
        %v1859 = vunpack.c.l.b16 %v1791
        %v1860 = vunpack.c.l.b16 %v1792
        %v1861 = vunpack.c.l.b16 %v1793
        %v1862 = vunpack.c.l.b16 %v1794
        %v1863 = vunpack.c.l.b16 %v1795
        %v1864 = vunpack.c.l.b16 %v1796
        %v1865 = vunpack.c.l.b16 %v1797
        %v1866 = vunpack.c.l.b16 %v1798
        %v1867 = vunpack.c.l.b16 %v1799
        %v1868 = vunpack.c.l.b16 %v1800
        %v1869 = vunpack.c.l.b16 %v1801
        %v1870 = vunpack.c.l.b16 %v1802
        %v1871 = vunpack.c.l.b16 %v1803
        %v1872 = vunpack.c.l.b16 %v1804
        %v1873 = vunpack.c.l.b16 %v1805
        %v1874 = vunpack.c.l.b16 %v1806
        %v1875 = vunpack.c.l.b16 %v1807
        %v1876 = vunpack.c.l.b16 %v1808
        %v1877 = vunpack.c.l.b16 %v1809
        %v1878 = vunpack.c.l.b16 %v1810
        %v1879 = vunpack.c.l.b16 %v1811
        %v1880 = vunpack.c.l.b16 %v1812
        %v1881 = vunpack.c.l.b16 %v1813
        %v1882 = vunpack.c.l.b16 %v1814
        %v1883 = vunpack.c.l.b16 %v1815
        %v1884 = vunpack.c.l.b16 %v1816
        %v1885 = vunpack.c.l.b16 %v1817
        %v1886 = vunpack.c.l.b16 %v1818
        %v1887 = vpack.c.b16 %v1856, %v1855
        %v1888 = vpack.c.b16 %v1858, %v1857
        %v1889 = vpack.c.b16 %v1860, %v1859
        %v1890 = vpack.c.b16 %v1862, %v1861
        %v1891 = vpack.c.b16 %v1864, %v1863
        %v1892 = vpack.c.b16 %v1866, %v1865
        %v1893 = vpack.c.b16 %v1868, %v1867
        %v1894 = vpack.c.b16 %v1870, %v1869
        %v1895 = vpack.c.b16 %v1872, %v1871
        %v1896 = vpack.c.b16 %v1874, %v1873
        %v1897 = vpack.c.b16 %v1876, %v1875
        %v1898 = vpack.c.b16 %v1878, %v1877
        %v1899 = vpack.c.b16 %v1880, %v1879
        %v1900 = vpack.c.b16 %v1882, %v1881
        %v1901 = vpack.c.b16 %v1884, %v1883
        %v1902 = vpack.c.b16 %v1886, %v1885
        %1919 = vmatpush.bf16.msra.mxu0 %v1894
        %1920 = vmatpush.bf16.msra.mxu0 %v1893
        %1921 = vmatpush.bf16.msra.mxu0 %v1892
        %1922 = vmatpush.bf16.msra.mxu0 %v1891
        %1923 = vmatpush.bf16.msra.mxu0 %v1890
        %1924 = vmatpush.bf16.msra.mxu0 %v1889
        %1925 = vmatpush.bf16.msra.mxu0 %v1888
        %1926 = vmatpush.bf16.msra.mxu0 %v1887
        %1927 = vmatmul.bf16.gmra.mxu0 %v1783
        %v1928 = vpop.f32.mrf.mxu0
        %v1929 = vadd.f32 %v1821, %v1928
        %v1930 = vpop.f32.mrf.mxu0
        %v1931 = vadd.f32 %v1821, %v1930
        %1932 = vmatmul.bf16.gmra.mxu0 %v1785
        %v1933 = vpop.f32.mrf.mxu0
        %v1934 = vadd.f32 %v1821, %v1933
        %v1935 = vpop.f32.mrf.mxu0
        %v1936 = vadd.f32 %v1821, %v1935
        %1937 = vdwg.mxu0
        %1938 = vmatpush.bf16.msra.mxu0 %v1902
        %1939 = vmatpush.bf16.msra.mxu0 %v1901
        %1940 = vmatpush.bf16.msra.mxu0 %v1900
        %1941 = vmatpush.bf16.msra.mxu0 %v1899
        %1942 = vmatpush.bf16.msra.mxu0 %v1898
        %1943 = vmatpush.bf16.msra.mxu0 %v1897
        %1944 = vmatpush.bf16.msra.mxu0 %v1896
        %1945 = vmatpush.bf16.msra.mxu0 %v1895
        %1946 = vmatmul.bf16.gmra.mxu0 %v1784
        %v1947 = vpop.f32.mrf.mxu0
        %v1948 = vadd.f32 %v1929, %v1947
        %v1949 = vpop.f32.mrf.mxu0
        %v1950 = vadd.f32 %v1931, %v1949
        %1951 = vmatmul.bf16.gmra.mxu0 %v1786
        %v1952 = vpop.f32.mrf.mxu0
        %v1953 = vadd.f32 %v1934, %v1952
        %v1954 = vpop.f32.mrf.mxu0
        %v1955 = vadd.f32 %v1936, %v1954
        %1956 = vdwg.mxu0
        %v1957 = vadd.f32 %v1629, %v1948
        %v1958 = vadd.f32 %v1630, %v1950
        %v1959 = vadd.f32 %v1631, %v1953
        %v1960 = vadd.f32 %v1632, %v1955
        %v1961 = vld [vmem:[%s13] sm:$0x1]
        %v1962 = vld [vmem:[%s14] sm:$0x1]
        %1963 = vadd.xlane.f32.xlu0 %v1957
        %v1964 = vpop.xlane.xlu0 %1963
        %1965 = vadd.xlane.f32.xlu0 %v1958
        %v1966 = vpop.xlane.xlu0 %1965
        %1967 = vadd.xlane.f32.xlu0 %v1959
        %v1968 = vpop.xlane.xlu0 %1967
        %1969 = vadd.xlane.f32.xlu0 %v1960
        %v1970 = vpop.xlane.xlu0 %1969
        %v1971 = vmul.f32 %v1964, %v1546
        %v1972 = vmul.f32 %v1966, %v1546
        %v1973 = vmul.f32 %v1968, %v1546
        %v1974 = vmul.f32 %v1970, %v1546
        %v1975 = vsub.f32 %v1957, %v1971
        %v1976 = vsub.f32 %v1958, %v1972
        %v1977 = vsub.f32 %v1959, %v1973
        %v1978 = vsub.f32 %v1960, %v1974
        %v1979 = vmul.f32 %v1975, %v1975
        %v1980 = vmul.f32 %v1976, %v1976
        %v1981 = vmul.f32 %v1977, %v1977
        %v1982 = vmul.f32 %v1978, %v1978
        %1983 = vadd.xlane.f32.xlu0 %v1979
        %v1984 = vpop.xlane.xlu0 %1983
        %1985 = vadd.xlane.f32.xlu0 %v1980
        %v1986 = vpop.xlane.xlu0 %1985
        %1987 = vadd.xlane.f32.xlu0 %v1981
        %v1988 = vpop.xlane.xlu0 %1987
        %1989 = vadd.xlane.f32.xlu0 %v1982
        %v1990 = vpop.xlane.xlu0 %1989
        %v1991 = vmul.f32 %v1984, %v1546
        %v1992 = vmul.f32 %v1986, %v1546
        %v1993 = vmul.f32 %v1988, %v1546
        %v1994 = vmul.f32 %v1990, %v1546
        %v1995 = vadd.f32 %v1991, 1e-05
        %v1996 = vadd.f32 %v1992, 1e-05
        %v1997 = vadd.f32 %v1993, 1e-05
        %v1998 = vadd.f32 %v1994, 1e-05
        %v1999 = vrsqrt.pop %v1995
        %v2000 = vmul.f32 %v1999, %v1995
        %v2001 = vmul.f32 %v2000, %v1999
        %v2002 = vmul.f32 0.5, %v2001
        %v2003 = vsub.f32 1.5, %v2002
        %v2004 = vmul.f32 %v1999, %v2003
        %vm2005 = vweird.f32 %v1995
        %vm2006 = vweird.f32 %v1999
        %vm2007 = vmor %vm2005, %vm2006
        %v2008 = vsel %vm2007, %v1999, %v2004
        %v2009 = vrsqrt.pop %v1996
        %v2010 = vmul.f32 %v2009, %v1996
        %v2011 = vmul.f32 %v2010, %v2009
        %v2012 = vmul.f32 0.5, %v2011
        %v2013 = vsub.f32 1.5, %v2012
        %v2014 = vmul.f32 %v2009, %v2013
        %vm2015 = vweird.f32 %v1996
        %vm2016 = vweird.f32 %v2009
        %vm2017 = vmor %vm2015, %vm2016
        %v2018 = vsel %vm2017, %v2009, %v2014
        %v2019 = vrsqrt.pop %v1997
        %v2020 = vmul.f32 %v2019, %v1997
        %v2021 = vmul.f32 %v2020, %v2019
        %v2022 = vmul.f32 0.5, %v2021
        %v2023 = vsub.f32 1.5, %v2022
        %v2024 = vmul.f32 %v2019, %v2023
        %vm2025 = vweird.f32 %v1997
        %vm2026 = vweird.f32 %v2019
        %vm2027 = vmor %vm2025, %vm2026
        %v2028 = vsel %vm2027, %v2019, %v2024
        %v2029 = vrsqrt.pop %v1998
        %v2030 = vmul.f32 %v2029, %v1998
        %v2031 = vmul.f32 %v2030, %v2029
        %v2032 = vmul.f32 0.5, %v2031
        %v2033 = vsub.f32 1.5, %v2032
        %v2034 = vmul.f32 %v2029, %v2033
        %vm2035 = vweird.f32 %v1998
        %vm2036 = vweird.f32 %v2029
        %vm2037 = vmor %vm2035, %vm2036
        %v2038 = vsel %vm2037, %v2029, %v2034
        %v2039 = vmul.f32 %v1975, %v2008
        %v2040 = vmul.f32 %v1976, %v2018
        %v2041 = vmul.f32 %v1977, %v2028
        %v2042 = vmul.f32 %v1978, %v2038
        %v2044 = vperm.slane %v1961, 0
        %v2046 = vmul.f32 %v2039, %v2044
        %v2047 = vmul.f32 %v2040, %v2044
        %v2048 = vmul.f32 %v2041, %v2044
        %v2049 = vmul.f32 %v2042, %v2044
        %v2051 = vperm.slane %v1962, 0
        %v2053 = vadd.f32 %v2046, %v2051
        %v2054 = vadd.f32 %v2047, %v2051
        %v2055 = vadd.f32 %v2048, %v2051
        %v2056 = vadd.f32 %v2049, %v2051
        %2057 = vst [vmem:[%s594] sm:$0xff] %v2053
        %2058 = vst [vmem:[%s594 + $0x8] sm:$0xff] %v2054
        %2059 = vst [vmem:[%s594 + $0x10] sm:$0xff] %v2055
        %2060 = vst [vmem:[%s594 + $0x18] sm:$0xff] %v2056
        %s2061 = sand.u32 %s397, 1
        %s2062 = scalar_lea.sflag [#allocation3], %s2061
        %s2063 = sand.u32 %s397, 1
        %s2064 = smul.addr %s2063, 32
        %s2065 = scalar_lea.vmem [#allocation2], %s2064
        // Predicated region
        $region81: #{encoder_forward.3} parent=79 // pred_check
          %p2066 = pneg %p407
        $region82: #{encoder_forward.3} parent=79 // pred_check_branch
          %2068 = sbr.rel (%p2066) target = $region84
        $region83: #{encoder_forward.3} parent=79 // pred_region
          %s2069 = smul.u32 4, %s34
          %2071 = vsyncadd %s2062, 0
          %s2072 = smul.addr %s33, 4
          %s2073 = sadd.s32 %s2069, %s2072
          %s2074 = smul.addr %s2073, 8
          %s2075 = scalar_lea.hbm %s15, %s2074
          %s2076 = sshll.u32 %s2065, 4
          %s2077 = int_to_ptr.vmem [resolvable:$true] %s2076
          %s2078 = sshll.u32 %s2075, 4
          %s2079 = int_to_ptr.hbm [resolvable:$true] %s2078
          %2084 = dma.vmem_to_hbm [thread:$0]  %s2077, 512, %s2079, %s2062, 128, 128, 8
        $region84: #{encoder_forward.3} parent=79 // pred_fallthru
          _
      $region80: #{encoder_forward.3} parent=5 // pred_fallthru
        _
      %p2085 = scmp.le.s32.totalorder 2, %s24
      // Predicated region
      $region85: #{encoder_forward.3} parent=5 // pred_check
        %p2086 = pneg %p2085
      $region86: #{encoder_forward.3} parent=5 // pred_check_branch
        %2088 = sbr.rel (%p2086) target = $region88
      $region87: #{encoder_forward.3} parent=5 // pred_region
        %s2089 = ssub.s32 %s24, 2
        // Predicated region
        $region89: #{encoder_forward.3} parent=87 // pred_check
          %p2090 = pneg %p413
        $region90: #{encoder_forward.3} parent=87 // pred_check_branch
          %2092 = sbr.rel (%p2090) target = $region92
        $region91: #{encoder_forward.3} parent=87 // pred_region
          %s2093 = sand.u32 %s398, 1
          %s2094 = scalar_lea.sflag [#allocation3], %s2093
          %s2095 = sand.u32 %s398, 1
          %s2096 = smul.addr %s2095, 32
          %s2097 = scalar_lea.vmem [#allocation2], %s2096
          %2099 = dma.done %s2094, 512
        $region92: #{encoder_forward.3} parent=87 // pred_fallthru
          _
      $region88: #{encoder_forward.3} parent=5 // pred_fallthru
        _
    $region6: #{encoder_forward.3} parent=1 // loop_footer
      %s28 = sadd.s32 1, %s24
    $region7: #{encoder_forward.3} parent=1 // loop_footer_branch
      %23 = sbr.rel target = $region3
    $region8: #{encoder_forward.3} parent=1 // loop_exit
      _
    %2100 = vsyncpa [#allocation3], 1
    %s2101 = scalar_lea.sflag [#allocation3], 1
    %2102 = vsyncpa %s2101, 1

</llo_original>
